<compile_context>
chip_gen: v7x
topology: tpu7x:2x2x1
jax: 0.10.0
libtpu: 0.0.40
codegen_flags: <defaults>
</compile_context>

<pallas_src>
import math
import functools

import jax
import jax.numpy as jnp
from jax.experimental import pallas as pl
from jax.experimental.pallas import tpu as pltpu


# ----------------------------- in-kernel helpers -----------------------------

def _layer_norm(x, g, b, eps=1e-5):
    # x: (R, W) fp32, g/b: (1, W) fp32   (matches nn.LayerNorm defaults)
    mu = jnp.mean(x, axis=-1, keepdims=True)
    xc = x - mu
    var = jnp.mean(xc * xc, axis=-1, keepdims=True)
    return xc * jax.lax.rsqrt(var + eps) * g + b


def _gelu_tanh(x):
    # tanh-approx GELU; tanh runs on the EUP slot instead of a VALU erf poly.
    c = math.sqrt(2.0 / math.pi)
    return 0.5 * x * (1.0 + jnp.tanh(c * (x + 0.044715 * x * x * x)))


def _split_heads(t, seq, heads, hc):
    # (S, heads*hc) -> (heads, S, hc): one reshape + one XLU relayout.
    t = t.reshape(seq, heads, hc)
    if hasattr(pltpu, "einshape"):
        return pltpu.einshape("shc->hsc", t)
    return jnp.swapaxes(t, 0, 1)


def _merge_heads(t, seq, heads, hc):
    # (heads, S, hc) -> (S, heads*hc)
    if hasattr(pltpu, "einshape"):
        t = pltpu.einshape("hsc->shc", t)
    else:
        t = jnp.swapaxes(t, 0, 1)
    return t.reshape(seq, heads * hc)


# --------------------------------- kernel ------------------------------------

def _resblock_kernel(*refs, heads, bt, seq, width, use_mask, gelu_dtype):
    if use_mask:
        bias_ref = refs[0]
        refs = refs[1:]
    else:
        bias_ref = None
    (x_ref, ln1g_ref, ln1b_ref, wqkv_ref, bqkv_ref, wpo_ref, bpo_ref,
     ln2g_ref, ln2b_ref, wfc_ref, bfc_ref, wp2_ref, bp2_ref,
     out_ref, x1_ref, h2_ref, acc_ref) = refs

    S, W = seq, width
    hc = W // heads
    R = bt * S
    k = pl.program_id(1)
    nk = pl.num_programs(1)

    # ---------------- k == 0: attention branch + ln_2, parked in scratch -----
    @pl.when(k == 0)
    def _attention_and_ln2():
        # Fold bt sequences into one (R, W) slab so dense matmuls see M = R.
        x = x_ref[...].astype(jnp.float32).reshape(R, W)
        h = _layer_norm(x, ln1g_ref[...], ln1b_ref[...])

        # Packed layout: columns are [Q_all | K_all | V_all]; softmax scale is
        # already folded into the Q/K weight + bias columns on the host.
        qkv = jnp.dot(h.astype(jnp.bfloat16), wqkv_ref[...],
                      preferred_element_type=jnp.float32) + bqkv_ref[...]   # (R, 3W)

        if use_mask:
            bias_all = bias_ref[...]          # (bt, 1, S), loaded once

        parts = []
        for b in range(bt):
            r0 = b * S
            # Batched-over-heads attention: one relayout in, one out, 3D dots.
            qb = _split_heads(qkv[r0:r0 + S, 0:W], S, heads, hc)
            kb = _split_heads(qkv[r0:r0 + S, W:2 * W], S, heads, hc)
            vb = _split_heads(qkv[r0:r0 + S, 2 * W:3 * W], S, heads, hc)
            s = jnp.einsum('hqc,hkc->hqk',
                           qb.astype(jnp.bfloat16), kb.astype(jnp.bfloat16),
                           preferred_element_type=jnp.float32)      # (H, S, S)
            if use_mask:
                s = s + bias_all[b].reshape(1, 1, S)                # hoisted bias
            s = s - jnp.max(s, axis=-1, keepdims=True)
            e = jnp.exp(s)
            p = e * pl.reciprocal(jnp.sum(e, axis=-1, keepdims=True),
                                  approx=True)
            o = jnp.einsum('hqk,hkc->hqc',
                           p.astype(jnp.bfloat16), vb.astype(jnp.bfloat16),
                           preferred_element_type=jnp.float32)      # (H, S, hc)
            parts.append(_merge_heads(o, S, heads, hc).astype(jnp.bfloat16))
        attn_b16 = parts[0] if bt == 1 else jnp.concatenate(parts, axis=0)

        # Single full-width out-projection: (R, W) @ (W, W).
        attn = jnp.dot(attn_b16, wpo_ref[...],
                       preferred_element_type=jnp.float32) + bpo_ref[...]
        x1 = x + attn
        x1_ref[...] = x1
        h2_ref[...] = _layer_norm(x1, ln2g_ref[...], ln2b_ref[...]).astype(
            jnp.bfloat16)
        acc_ref[...] = jnp.zeros_like(acc_ref)

    # ---------------- every k: one hidden-dim tile of the MLP ----------------
    fc = jnp.dot(h2_ref[...], wfc_ref[...],
                 preferred_element_type=jnp.float32) + bfc_ref[...]   # (R, tk)
    g = _gelu_tanh(fc.astype(gelu_dtype))                             # bf16 on v6e/v7x
    acc_ref[...] += jnp.dot(g.astype(jnp.bfloat16), wp2_ref[...],
                            preferred_element_type=jnp.float32)       # (R, W)

    # ---------------- k == last: second residual + writeback -----------------
    @pl.when(k == nk - 1)
    def _finalize():
        out = x1_ref[...] + acc_ref[...] + bp2_ref[...]
        out_ref[...] = out.reshape(bt, S, W).astype(out_ref.dtype)


# ------------------------------- wrappers -------------------------------------

def _pick_bt(B, S, target_rows=256):
    """Largest divisor of B with bt*S <= target rows, keeping >= 2 grid steps
    (when B >= 2) so both v7x TensorCores get work."""
    best = 1
    for bt in range(1, B + 1):
        if B % bt != 0:
            continue
        if bt * S > max(target_rows, S):
            continue
        if B >= 2 and B // bt < 2:
            continue
        best = bt
    return best


def _pick_k_tile(hidden, target=512):
    """Largest multiple-of-128 divisor of the MLP hidden dim <= target; falls
    back to the full hidden dim when none exists (small toy widths)."""
    best = None
    for t in range(128, min(target, hidden) + 1, 128):
        if hidden % t == 0:
            best = t
    return best if best is not None else hidden


def _gelu_compute_dtype():
    """bf16 GELU on chips with a bf16 VPU/EUP (v6e, v7x); f32 on v5e/older."""
    try:
        kind = jax.devices()[0].device_kind.lower()
    except Exception:
        return jnp.float32
    if any(v in kind for v in ("v2", "v3", "v4", "v5")):
        return jnp.float32
    return jnp.bfloat16


def _pick_vmem_limit(bt, S, W, k_tile):
    """Size the scoped VMEM limit to the actual working set + ~25% headroom."""
    R = bt * S
    f32, b16 = 4, 2
    const_w = (W * 3 * W + W * W) * b16 + (3 * W + 6 * W) * f32     # single-buffered
    tiled_w = 2 * ((W * k_tile + k_tile * W) * b16 + k_tile * f32)  # double-buffered
    io = 2 * 2 * (R * W * f32)                                      # x + out blocks
    scratch = R * W * (2 * f32 + b16)
    act = R * (3 * W + 6 * W + 2 * k_tile) * f32                    # live temporaries
    est = int(1.25 * (const_w + tiled_w + io + scratch + act)) + (4 << 20)
    return max(16 << 20, min(est, 64 << 20))


def _const_spec(shape, index_map):
    """BlockSpec for a block whose index never changes: single-buffer it."""
    if hasattr(pl, "Buffered"):
        try:
            return pl.BlockSpec(shape, index_map, pipeline_mode=pl.Buffered(1))
        except TypeError:
            pass
    return pl.BlockSpec(shape, index_map)


def _prepare_layer(p, heads):
    """Host-side weight prep (done ONCE): repack qkv columns to
    [Q_all|K_all|V_all], fold the softmax scale into Q/K, cast to bf16."""
    W = p["ln1_g"].shape[-1]
    hc = W // heads
    scale = 1.0 / math.sqrt(math.sqrt(hc))

    # per-head interleaved [q|k|v] -> [Q_all | K_all | V_all] (head-major).
    w = p["w_qkv"].reshape(W, heads, 3, hc)
    w = jnp.transpose(w, (0, 2, 1, 3)).reshape(W, 3 * W)
    b = p["b_qkv"].reshape(1, heads, 3, hc)
    b = jnp.transpose(b, (0, 2, 1, 3)).reshape(1, 3 * W)

    col_scale = jnp.concatenate(
        [jnp.full((2 * W,), scale, jnp.float32), jnp.ones((W,), jnp.float32)])
    w = w * col_scale[None, :]
    b = b * col_scale[None, :]

    return dict(
        ln1_g=p["ln1_g"], ln1_b=p["ln1_b"],
        ln2_g=p["ln2_g"], ln2_b=p["ln2_b"],
        w_qkv=w.astype(jnp.bfloat16), b_qkv=b,
        w_po=p["w_po"].astype(jnp.bfloat16), b_po=p["b_po"],
        w_fc=p["w_fc"].astype(jnp.bfloat16), b_fc=p["b_fc"],
        w_p2=p["w_p2"].astype(jnp.bfloat16), b_p2=p["b_p2"],
    )


def prepare_transformer_params(params, heads):
    """One-time preprocessing of all layers (call outside the hot path)."""
    return [_prepare_layer(p, heads) for p in params]


def residual_block(x, mask_bias, p, heads, bt, k_tile, gelu_dtype):
    B, S, W = x.shape
    use_mask = mask_bias is not None
    hidden = 4 * W
    nk = hidden // k_tile
    grid = (B // bt, nk)
    R = bt * S

    xmap = lambda i, k: (i, 0, 0)
    cmap = lambda i, k: (0, 0)

    in_specs = []
    args = []
    if use_mask:
        in_specs.append(pl.BlockSpec((bt, 1, S), xmap))   # additive key bias
        args.append(mask_bias)
    in_specs += [
        pl.BlockSpec((bt, S, W), xmap),                   # x
        _const_spec((1, W), cmap),                        # ln1 gamma
        _const_spec((1, W), cmap),                        # ln1 beta
        _const_spec((W, 3 * W), cmap),                    # W_qkv (packed, bf16)
        _const_spec((1, 3 * W), cmap),                    # b_qkv (packed, f32)
        _const_spec((W, W), cmap),                        # W_proj (bf16)
        _const_spec((1, W), cmap),                        # b_proj
        _const_spec((1, W), cmap),                        # ln2 gamma
        _const_spec((1, W), cmap),                        # ln2 beta
        pl.BlockSpec((W, k_tile), lambda i, k: (0, k)),   # W_fc column block
        pl.BlockSpec((1, k_tile), lambda i, k: (0, k)),   # b_fc block
        pl.BlockSpec((k_tile, W), lambda i, k: (k, 0)),   # W_proj2 row block
        _const_spec((1, W), cmap),                        # b_proj2
    ]
    args += [x,
             p["ln1_g"], p["ln1_b"], p["w_qkv"], p["b_qkv"], p["w_po"], p["b_po"],
             p["ln2_g"], p["ln2_b"], p["w_fc"], p["b_fc"], p["w_p2"], p["b_p2"]]

    kern = functools.partial(_resblock_kernel, heads=heads, bt=bt, seq=S,
                             width=W, use_mask=use_mask, gelu_dtype=gelu_dtype)
    return pl.pallas_call(
        kern,
        grid=grid,
        in_specs=in_specs,
        out_specs=pl.BlockSpec((bt, S, W), xmap),
        out_shape=jax.ShapeDtypeStruct((B, S, W), x.dtype),
        scratch_shapes=[
            pltpu.VMEM((R, W), jnp.float32),    # x1 = x + attn (residual)
            pltpu.VMEM((R, W), jnp.bfloat16),   # ln_2(x1), bf16 matmul operand
            pltpu.VMEM((R, W), jnp.float32),    # MLP accumulator
        ],
        compiler_params=pltpu.CompilerParams(
            dimension_semantics=("parallel", "arbitrary"),
            vmem_limit_bytes=_pick_vmem_limit(bt, S, W, k_tile)),
    )(*args)


def transformer_forward(x, params, key_padding_mask=None, *, heads,
                        target_rows=256, mlp_tile_target=512):
    """params: output of prepare_transformer_params().
    key_padding_mask: bool (B, S), True = padded key position."""
    B, S, W = x.shape
    bt = _pick_bt(B, S, target_rows)
    k_tile = _pick_k_tile(4 * W, mlp_tile_target)
    gelu_dtype = _gelu_compute_dtype()
    mask_bias = None
    if key_padding_mask is not None:
        # Precomputed additive bias: large finite negative at padded keys
        # (avoids the -inf NaN path and per-element compare+select in-kernel).
        mask_bias = jnp.where(key_padding_mask, -1e30, 0.0).astype(
            jnp.float32).reshape(B, 1, S)
    for p in params:
        x = residual_block(x, mask_bias, p, heads, bt, k_tile, gelu_dtype)
    return x


# ---------------------- pure-JAX reference (for sanity) -----------------------

def _gelu_exact(x):
    return 0.5 * x * (1.0 + jax.lax.erf(x / math.sqrt(2.0)))


def _reference_forward(x, params, heads, key_padding_mask=None):
    x = x.astype(jnp.float32)
    B, S, W = x.shape
    hc = W // heads
    scale = 1.0 / math.sqrt(math.sqrt(hc))
    for p in params:
        h = _layer_norm(x.reshape(B * S, W), p["ln1_g"], p["ln1_b"]).reshape(B, S, W)
        qkv = h @ p["w_qkv"] + p["b_qkv"]                       # (B,S,3W)
        qkv = qkv.reshape(B, S, heads, 3 * hc)
        q, k, v = qkv[..., :hc], qkv[..., hc:2 * hc], qkv[..., 2 * hc:]
        w = jnp.einsum("bthc,bshc->bhts", q * scale, k * scale)
        if key_padding_mask is not None:
            w = jnp.where(key_padding_mask[:, None, None, :], -jnp.inf, w)
        w = jax.nn.softmax(w, axis=-1)
        o = jnp.einsum("bhts,bshc->bthc", w, v).reshape(B, S, W)
        x = x + (o @ p["w_po"] + p["b_po"])
        h2 = _layer_norm(x.reshape(B * S, W), p["ln2_g"], p["ln2_b"]).reshape(B, S, W)
        x = x + (_gelu_exact(h2 @ p["w_fc"] + p["b_fc"]) @ p["w_p2"] + p["b_p2"])
    return x


# ------------------------------ param init ------------------------------------

def init_params(key, width, layers):
    def linear(k, fan_in, fan_out):
        bound = 1.0 / math.sqrt(fan_in)
        kw, kb = jax.random.split(k)
        w = jax.random.uniform(kw, (fan_in, fan_out), jnp.float32, -bound, bound)
        b = jax.random.uniform(kb, (1, fan_out), jnp.float32, -bound, bound)
        return w, b

    params = []
    for l in range(layers):
        ks = jax.random.split(jax.random.fold_in(key, l), 4)
        w_qkv, b_qkv = linear(ks[0], width, 3 * width)
        w_po, b_po = linear(ks[1], width, width)
        w_fc, b_fc = linear(ks[2], width, 4 * width)
        w_p2, b_p2 = linear(ks[3], 4 * width, width)
        params.append(dict(
            ln1_g=jnp.ones((1, width), jnp.float32),
            ln1_b=jnp.zeros((1, width), jnp.float32),
            ln2_g=jnp.ones((1, width), jnp.float32),
            ln2_b=jnp.zeros((1, width), jnp.float32),
            w_qkv=w_qkv, b_qkv=b_qkv, w_po=w_po, b_po=b_po,
            w_fc=w_fc, b_fc=b_fc, w_p2=w_p2, b_p2=b_p2,
        ))
    return params


# --------------------------------- main ---------------------------------------

if __name__ == "__main__":
    B, S, W, H, L = 2, 8, 64, 4, 2        # batch, n_ctx, width, heads, layers

    key = jax.random.PRNGKey(0)
    k_x, k_p = jax.random.split(key)
    x = jax.random.normal(k_x, (B, S, W), jnp.float32)
    # key_padding_mask: True = padded key position (last 2 keys of batch elem 1)
    key_padding_mask = jnp.zeros((B, S), dtype=bool).at[1, S - 2:].set(True)

    params = init_params(k_p, W, L)

    # One-time weight preprocessing + jitted forward (heads / tile knobs static).
    prepped = prepare_transformer_params(params, H)
    # mlp_tile_target=128 exercises the hidden-dim-tiled MLP accumulation path
    # (4W = 256 -> 2 k-steps) even at this toy width; production default is 512.
    fwd = jax.jit(functools.partial(transformer_forward, heads=H,
                                    mlp_tile_target=128))

    out = jax.block_until_ready(fwd(x, prepped, key_padding_mask))

    assert out.shape == (B, S, W), out.shape
    assert bool(jnp.all(jnp.isfinite(out)))

    ref = _reference_forward(x, params, H, key_padding_mask)
    assert bool(jnp.allclose(out, ref, rtol=5e-2, atol=5e-2)), \
        float(jnp.max(jnp.abs(out - ref)))

    print("KERNEL_OK")
</pallas_src>

<mosaic_0001>
module attributes {stable_mosaic.version = 11 : i64} {
  func.func @_resblock_kernel(%arg0: i32, %arg1: i32, %arg2: memref<1x1x8xf32, #tpu.memory_space<vmem>>, %arg3: memref<1x8x64xf32, #tpu.memory_space<vmem>>, %arg4: memref<1x64xf32, #tpu.memory_space<vmem>>, %arg5: memref<1x64xf32, #tpu.memory_space<vmem>>, %arg6: memref<64x192xbf16, #tpu.memory_space<vmem>>, %arg7: memref<1x192xf32, #tpu.memory_space<vmem>>, %arg8: memref<64x64xbf16, #tpu.memory_space<vmem>>, %arg9: memref<1x64xf32, #tpu.memory_space<vmem>>, %arg10: memref<1x64xf32, #tpu.memory_space<vmem>>, %arg11: memref<1x64xf32, #tpu.memory_space<vmem>>, %arg12: memref<64x128xbf16, #tpu.memory_space<vmem>>, %arg13: memref<1x128xf32, #tpu.memory_space<vmem>>, %arg14: memref<128x64xbf16, #tpu.memory_space<vmem>>, %arg15: memref<1x64xf32, #tpu.memory_space<vmem>>, %arg16: memref<1x8x64xf32, #tpu.memory_space<vmem>>, %arg17: memref<8x64xf32, #tpu.memory_space<vmem>>, %arg18: memref<8x64xbf16, #tpu.memory_space<vmem>>, %arg19: memref<8x64xf32, #tpu.memory_space<vmem>>) attributes {dimension_semantics = [#tpu.dimension_semantics<parallel>, #tpu.dimension_semantics<arbitrary>], iteration_bounds = array<i64: 2, 2>, scalar_prefetch = 0 : i64, scratch_operands = 3 : i64, tpu.core_type = #tpu.core_type<tc>, window_params = [{transform_indices = @transform_0, window_bounds = array<i64: 1, 1, 8>}, {transform_indices = @transform_1, window_bounds = array<i64: 1, 8, 64>}, {pipeline_mode = #tpu.pipeline_mode<synchronous>, transform_indices = @transform_2, window_bounds = array<i64: 1, 64>}, {pipeline_mode = #tpu.pipeline_mode<synchronous>, transform_indices = @transform_3, window_bounds = array<i64: 1, 64>}, {pipeline_mode = #tpu.pipeline_mode<synchronous>, transform_indices = @transform_4, window_bounds = array<i64: 64, 192>}, {pipeline_mode = #tpu.pipeline_mode<synchronous>, transform_indices = @transform_5, window_bounds = array<i64: 1, 192>}, {pipeline_mode = #tpu.pipeline_mode<synchronous>, transform_indices = @transform_6, window_bounds = array<i64: 64, 64>}, {pipeline_mode = #tpu.pipeline_mode<synchronous>, transform_indices = @transform_7, window_bounds = array<i64: 1, 64>}, {pipeline_mode = #tpu.pipeline_mode<synchronous>, transform_indices = @transform_8, window_bounds = array<i64: 1, 64>}, {pipeline_mode = #tpu.pipeline_mode<synchronous>, transform_indices = @transform_9, window_bounds = array<i64: 1, 64>}, {transform_indices = @transform_10, window_bounds = array<i64: 64, 128>}, {transform_indices = @transform_11, window_bounds = array<i64: 1, 128>}, {transform_indices = @transform_12, window_bounds = array<i64: 128, 64>}, {pipeline_mode = #tpu.pipeline_mode<synchronous>, transform_indices = @transform_13, window_bounds = array<i64: 1, 64>}, {transform_indices = @transform_14, window_bounds = array<i64: 1, 8, 64>}]} {
    %c0_i32 = arith.constant 0 : i32
    %0 = arith.cmpi eq, %arg1, %c0_i32 : i32
    %1 = arith.extui %0 : i1 to i32
    %c0_i32_0 = arith.constant 0 : i32
    %2 = arith.cmpi ne, %1, %c0_i32_0 : i32
    scf.if %2 {
      %c0_18 = arith.constant 0 : index
      %c0_19 = arith.constant 0 : index
      %c0_20 = arith.constant 0 : index
      %31 = vector.load %arg3[%c0_18, %c0_19, %c0_20] : memref<1x8x64xf32, #tpu.memory_space<vmem>>, vector<1x8x64xf32>
      %32 = vector.shape_cast %31 : vector<1x8x64xf32> to vector<8x64xf32>
      %c0_21 = arith.constant 0 : index
      %c0_22 = arith.constant 0 : index
      %33 = vector.load %arg4[%c0_21, %c0_22] : memref<1x64xf32, #tpu.memory_space<vmem>>, vector<1x64xf32>
      %c0_23 = arith.constant 0 : index
      %c0_24 = arith.constant 0 : index
      %34 = vector.load %arg5[%c0_23, %c0_24] : memref<1x64xf32, #tpu.memory_space<vmem>>, vector<1x64xf32>
      %cst_25 = arith.constant dense<0.000000e+00> : vector<8xf32>
      %35 = vector.multi_reduction <add>, %32, %cst_25 [1] : vector<8x64xf32> to vector<8xf32>
      %36 = vector.shape_cast %35 : vector<8xf32> to vector<8x1xf32>
      %cst_26 = arith.constant 6.400000e+01 : f32
      %37 = vector.broadcast %cst_26 : f32 to vector<8x1xf32>
      %38 = arith.divf %36, %37 : vector<8x1xf32>
      %39 = vector.broadcast %38 : vector<8x1xf32> to vector<8x64xf32>
      %40 = arith.subf %32, %39 : vector<8x64xf32>
      %41 = arith.mulf %40, %40 : vector<8x64xf32>
      %cst_27 = arith.constant dense<0.000000e+00> : vector<8xf32>
      %42 = vector.multi_reduction <add>, %41, %cst_27 [1] : vector<8x64xf32> to vector<8xf32>
      %43 = vector.shape_cast %42 : vector<8xf32> to vector<8x1xf32>
      %cst_28 = arith.constant 6.400000e+01 : f32
      %44 = vector.broadcast %cst_28 : f32 to vector<8x1xf32>
      %45 = arith.divf %43, %44 : vector<8x1xf32>
      %cst_29 = arith.constant 9.99999974E-6 : f32
      %46 = vector.broadcast %cst_29 : f32 to vector<8x1xf32>
      %47 = arith.addf %45, %46 : vector<8x1xf32>
      %48 = math.rsqrt %47 : vector<8x1xf32>
      %49 = vector.broadcast %48 : vector<8x1xf32> to vector<8x64xf32>
      %50 = arith.mulf %40, %49 : vector<8x64xf32>
      %51 = vector.broadcast %33 : vector<1x64xf32> to vector<8x64xf32>
      %52 = arith.mulf %50, %51 : vector<8x64xf32>
      %53 = vector.broadcast %34 : vector<1x64xf32> to vector<8x64xf32>
      %54 = arith.addf %52, %53 : vector<8x64xf32>
      %55 = arith.truncf %54 : vector<8x64xf32> to vector<8x64xbf16>
      %c0_30 = arith.constant 0 : index
      %c0_31 = arith.constant 0 : index
      %56 = vector.load %arg6[%c0_30, %c0_31] : memref<64x192xbf16, #tpu.memory_space<vmem>>, vector<64x192xbf16>
      %cst_32 = arith.constant dense<0.000000e+00> : vector<8x192xf32>
      %57 = tpu.matmul %55, %56, %cst_32 {dimension_numbers = #tpu.dot_dimension_numbers<[1], [0], [0], [1], [0, 0, 1, 1], [], []>} : vector<8x64xbf16>, vector<64x192xbf16>, vector<8x192xf32> -> vector<8x192xf32>
      %c0_33 = arith.constant 0 : index
      %c0_34 = arith.constant 0 : index
      %58 = vector.load %arg7[%c0_33, %c0_34] : memref<1x192xf32, #tpu.memory_space<vmem>>, vector<1x192xf32>
      %59 = vector.broadcast %58 : vector<1x192xf32> to vector<8x192xf32>
      %60 = arith.addf %57, %59 : vector<8x192xf32>
      %c0_35 = arith.constant 0 : index
      %c0_36 = arith.constant 0 : index
      %c0_37 = arith.constant 0 : index
      %61 = vector.load %arg2[%c0_35, %c0_36, %c0_37] : memref<1x1x8xf32, #tpu.memory_space<vmem>>, vector<1x1x8xf32>
      %62 = vector.extract_strided_slice %60 {offsets = [0, 0], sizes = [8, 64], strides = [1, 1]} : vector<8x192xf32> to vector<8x64xf32>
      %63 = vector.shape_cast %62 : vector<8x64xf32> to vector<8x4x16xf32>
      %64 = tpu.transpose %63, [1, 0, 2] : vector<8x4x16xf32> -> vector<4x8x16xf32>
      %65 = vector.extract_strided_slice %60 {offsets = [0, 64], sizes = [8, 64], strides = [1, 1]} : vector<8x192xf32> to vector<8x64xf32>
      %66 = vector.shape_cast %65 : vector<8x64xf32> to vector<8x4x16xf32>
      %67 = tpu.transpose %66, [1, 0, 2] : vector<8x4x16xf32> -> vector<4x8x16xf32>
      %68 = vector.extract_strided_slice %60 {offsets = [0, 128], sizes = [8, 64], strides = [1, 1]} : vector<8x192xf32> to vector<8x64xf32>
      %69 = vector.shape_cast %68 : vector<8x64xf32> to vector<8x4x16xf32>
      %70 = tpu.transpose %69, [1, 0, 2] : vector<8x4x16xf32> -> vector<4x8x16xf32>
      %71 = arith.truncf %64 : vector<4x8x16xf32> to vector<4x8x16xbf16>
      %72 = arith.truncf %67 : vector<4x8x16xf32> to vector<4x8x16xbf16>
      "tpu.trace_start"() <{level = 10 : i32, message = "hqc,hkc->hqk"}> : () -> ()
      %cst_38 = arith.constant dense<0.000000e+00> : vector<4x8x8xf32>
      %73 = tpu.matmul %71, %72, %cst_38 {dimension_numbers = #tpu.dot_dimension_numbers<[2], [2], [1], [1], [0, 0, 0, 1, 1, 1], [0], [0]>} : vector<4x8x16xbf16>, vector<4x8x16xbf16>, vector<4x8x8xf32> -> vector<4x8x8xf32>
      "tpu.trace_stop"() : () -> ()
      %74 = vector.shape_cast %61 : vector<1x1x8xf32> to vector<1x8xf32>
      %75 = vector.shape_cast %74 : vector<1x8xf32> to vector<1x1x8xf32>
      %76 = vector.broadcast %75 : vector<1x1x8xf32> to vector<4x8x8xf32>
      %77 = arith.addf %73, %76 : vector<4x8x8xf32>
      %cst_39 = arith.constant dense<0xFF800000> : vector<4x8xf32>
      %78 = vector.multi_reduction <maximumf>, %77, %cst_39 [2] : vector<4x8x8xf32> to vector<4x8xf32>
      %79 = vector.shape_cast %78 : vector<4x8xf32> to vector<4x8x1xf32>
      %80 = vector.broadcast %79 : vector<4x8x1xf32> to vector<4x8x8xf32>
      %81 = arith.subf %77, %80 : vector<4x8x8xf32>
      %82 = math.exp %81 : vector<4x8x8xf32>
      %cst_40 = arith.constant dense<0.000000e+00> : vector<4x8xf32>
      %83 = vector.multi_reduction <add>, %82, %cst_40 [2] : vector<4x8x8xf32> to vector<4x8xf32>
      %84 = vector.shape_cast %83 : vector<4x8xf32> to vector<4x8x1xf32>
      %85 = tpu.reciprocal %84 {approx = true} : vector<4x8x1xf32> -> vector<4x8x1xf32>
      %86 = vector.broadcast %85 : vector<4x8x1xf32> to vector<4x8x8xf32>
      %87 = arith.mulf %82, %86 : vector<4x8x8xf32>
      %88 = arith.truncf %87 : vector<4x8x8xf32> to vector<4x8x8xbf16>
      %89 = arith.truncf %70 : vector<4x8x16xf32> to vector<4x8x16xbf16>
      "tpu.trace_start"() <{level = 10 : i32, message = "hqk,hkc->hqc"}> : () -> ()
      %cst_41 = arith.constant dense<0.000000e+00> : vector<4x8x16xf32>
      %90 = tpu.matmul %88, %89, %cst_41 {dimension_numbers = #tpu.dot_dimension_numbers<[2], [1], [1], [2], [0, 0, 0, 1, 1, 2], [0], [0]>} : vector<4x8x8xbf16>, vector<4x8x16xbf16>, vector<4x8x16xf32> -> vector<4x8x16xf32>
      "tpu.trace_stop"() : () -> ()
      %91 = tpu.transpose %90, [1, 0, 2] : vector<4x8x16xf32> -> vector<8x4x16xf32>
      %92 = vector.shape_cast %91 : vector<8x4x16xf32> to vector<8x64xf32>
      %93 = arith.truncf %92 : vector<8x64xf32> to vector<8x64xbf16>
      %c0_42 = arith.constant 0 : index
      %c0_43 = arith.constant 0 : index
      %94 = vector.load %arg8[%c0_42, %c0_43] : memref<64x64xbf16, #tpu.memory_space<vmem>>, vector<64x64xbf16>
      %cst_44 = arith.constant dense<0.000000e+00> : vector<8x64xf32>
      %95 = tpu.matmul %93, %94, %cst_44 {dimension_numbers = #tpu.dot_dimension_numbers<[1], [0], [0], [1], [0, 0, 1, 1], [], []>} : vector<8x64xbf16>, vector<64x64xbf16>, vector<8x64xf32> -> vector<8x64xf32>
      %c0_45 = arith.constant 0 : index
      %c0_46 = arith.constant 0 : index
      %96 = vector.load %arg9[%c0_45, %c0_46] : memref<1x64xf32, #tpu.memory_space<vmem>>, vector<1x64xf32>
      %97 = vector.broadcast %96 : vector<1x64xf32> to vector<8x64xf32>
      %98 = arith.addf %95, %97 : vector<8x64xf32>
      %99 = arith.addf %32, %98 : vector<8x64xf32>
      %c0_47 = arith.constant 0 : index
      %c0_48 = arith.constant 0 : index
      %100 = vector.load %arg17[%c0_47, %c0_48] : memref<8x64xf32, #tpu.memory_space<vmem>>, vector<8x64xf32>
      tpu.vector_store %arg17[%c0_47, %c0_48], %99 {strides = array<i32>} : memref<8x64xf32, #tpu.memory_space<vmem>>, vector<8x64xf32>,
      %c0_49 = arith.constant 0 : index
      %c0_50 = arith.constant 0 : index
      %101 = vector.load %arg10[%c0_49, %c0_50] : memref<1x64xf32, #tpu.memory_space<vmem>>, vector<1x64xf32>
      %c0_51 = arith.constant 0 : index
      %c0_52 = arith.constant 0 : index
      %102 = vector.load %arg11[%c0_51, %c0_52] : memref<1x64xf32, #tpu.memory_space<vmem>>, vector<1x64xf32>
      %cst_53 = arith.constant dense<0.000000e+00> : vector<8xf32>
      %103 = vector.multi_reduction <add>, %99, %cst_53 [1] : vector<8x64xf32> to vector<8xf32>
      %104 = vector.shape_cast %103 : vector<8xf32> to vector<8x1xf32>
      %cst_54 = arith.constant 6.400000e+01 : f32
      %105 = vector.broadcast %cst_54 : f32 to vector<8x1xf32>
      %106 = arith.divf %104, %105 : vector<8x1xf32>
      %107 = vector.broadcast %106 : vector<8x1xf32> to vector<8x64xf32>
      %108 = arith.subf %99, %107 : vector<8x64xf32>
      %109 = arith.mulf %108, %108 : vector<8x64xf32>
      %cst_55 = arith.constant dense<0.000000e+00> : vector<8xf32>
      %110 = vector.multi_reduction <add>, %109, %cst_55 [1] : vector<8x64xf32> to vector<8xf32>
      %111 = vector.shape_cast %110 : vector<8xf32> to vector<8x1xf32>
      %cst_56 = arith.constant 6.400000e+01 : f32
      %112 = vector.broadcast %cst_56 : f32 to vector<8x1xf32>
      %113 = arith.divf %111, %112 : vector<8x1xf32>
      %cst_57 = arith.constant 9.99999974E-6 : f32
      %114 = vector.broadcast %cst_57 : f32 to vector<8x1xf32>
      %115 = arith.addf %113, %114 : vector<8x1xf32>
      %116 = math.rsqrt %115 : vector<8x1xf32>
      %117 = vector.broadcast %116 : vector<8x1xf32> to vector<8x64xf32>
      %118 = arith.mulf %108, %117 : vector<8x64xf32>
      %119 = vector.broadcast %101 : vector<1x64xf32> to vector<8x64xf32>
      %120 = arith.mulf %118, %119 : vector<8x64xf32>
      %121 = vector.broadcast %102 : vector<1x64xf32> to vector<8x64xf32>
      %122 = arith.addf %120, %121 : vector<8x64xf32>
      %123 = arith.truncf %122 : vector<8x64xf32> to vector<8x64xbf16>
      %c0_58 = arith.constant 0 : index
      %c0_59 = arith.constant 0 : index
      %124 = vector.load %arg18[%c0_58, %c0_59] : memref<8x64xbf16, #tpu.memory_space<vmem>>, vector<8x64xbf16>
      tpu.vector_store %arg18[%c0_58, %c0_59], %123 {strides = array<i32>} : memref<8x64xbf16, #tpu.memory_space<vmem>>, vector<8x64xbf16>,
      %cst_60 = arith.constant 0.000000e+00 : f32
      %125 = vector.broadcast %cst_60 : f32 to vector<8x64xf32>
      %c0_61 = arith.constant 0 : index
      %c0_62 = arith.constant 0 : index
      %126 = vector.load %arg19[%c0_61, %c0_62] : memref<8x64xf32, #tpu.memory_space<vmem>>, vector<8x64xf32>
      tpu.vector_store %arg19[%c0_61, %c0_62], %125 {strides = array<i32>} : memref<8x64xf32, #tpu.memory_space<vmem>>, vector<8x64xf32>,
    } else {
    }
    %c0 = arith.constant 0 : index
    %c0_1 = arith.constant 0 : index
    %3 = vector.load %arg18[%c0, %c0_1] : memref<8x64xbf16, #tpu.memory_space<vmem>>, vector<8x64xbf16>
    %c0_2 = arith.constant 0 : index
    %c0_3 = arith.constant 0 : index
    %4 = vector.load %arg12[%c0_2, %c0_3] : memref<64x128xbf16, #tpu.memory_space<vmem>>, vector<64x128xbf16>
    %cst = arith.constant dense<0.000000e+00> : vector<8x128xf32>
    %5 = tpu.matmul %3, %4, %cst {dimension_numbers = #tpu.dot_dimension_numbers<[1], [0], [0], [1], [0, 0, 1, 1], [], []>} : vector<8x64xbf16>, vector<64x128xbf16>, vector<8x128xf32> -> vector<8x128xf32>
    %c0_4 = arith.constant 0 : index
    %c0_5 = arith.constant 0 : index
    %6 = vector.load %arg13[%c0_4, %c0_5] : memref<1x128xf32, #tpu.memory_space<vmem>>, vector<1x128xf32>
    %7 = vector.broadcast %6 : vector<1x128xf32> to vector<8x128xf32>
    %8 = arith.addf %5, %7 : vector<8x128xf32>
    %9 = arith.truncf %8 : vector<8x128xf32> to vector<8x128xbf16>
    %cst_6 = arith.constant 5.000000e-01 : bf16
    %10 = vector.broadcast %cst_6 : bf16 to vector<8x128xbf16>
    %11 = arith.mulf %10, %9 : vector<8x128xbf16>
    %cst_7 = arith.constant 4.467770e-02 : bf16
    %12 = vector.broadcast %cst_7 : bf16 to vector<8x128xbf16>
    %13 = arith.mulf %12, %9 : vector<8x128xbf16>
    %14 = arith.mulf %13, %9 : vector<8x128xbf16>
    %15 = arith.mulf %14, %9 : vector<8x128xbf16>
    %16 = arith.addf %9, %15 : vector<8x128xbf16>
    %cst_8 = arith.constant 7.968750e-01 : bf16
    %17 = vector.broadcast %cst_8 : bf16 to vector<8x128xbf16>
    %18 = arith.mulf %17, %16 : vector<8x128xbf16>
    %19 = math.tanh %18 : vector<8x128xbf16>
    %cst_9 = arith.constant 1.000000e+00 : bf16
    %20 = vector.broadcast %cst_9 : bf16 to vector<8x128xbf16>
    %21 = arith.addf %20, %19 : vector<8x128xbf16>
    %22 = arith.mulf %11, %21 : vector<8x128xbf16>
    %c0_10 = arith.constant 0 : index
    %c0_11 = arith.constant 0 : index
    %23 = vector.load %arg19[%c0_10, %c0_11] : memref<8x64xf32, #tpu.memory_space<vmem>>, vector<8x64xf32>
    %c0_12 = arith.constant 0 : index
    %c0_13 = arith.constant 0 : index
    %24 = vector.load %arg14[%c0_12, %c0_13] : memref<128x64xbf16, #tpu.memory_space<vmem>>, vector<128x64xbf16>
    %cst_14 = arith.constant dense<0.000000e+00> : vector<8x64xf32>
    %25 = tpu.matmul %22, %24, %cst_14 {dimension_numbers = #tpu.dot_dimension_numbers<[1], [0], [0], [1], [0, 0, 1, 1], [], []>} : vector<8x128xbf16>, vector<128x64xbf16>, vector<8x64xf32> -> vector<8x64xf32>
    %26 = arith.addf %23, %25 : vector<8x64xf32>
    %c0_15 = arith.constant 0 : index
    %c0_16 = arith.constant 0 : index
    %27 = vector.load %arg19[%c0_15, %c0_16] : memref<8x64xf32, #tpu.memory_space<vmem>>, vector<8x64xf32>
    tpu.vector_store %arg19[%c0_15, %c0_16], %26 {strides = array<i32>} : memref<8x64xf32, #tpu.memory_space<vmem>>, vector<8x64xf32>,
    %c1_i32 = arith.constant 1 : i32
    %28 = arith.cmpi eq, %arg1, %c1_i32 : i32
    %29 = arith.extui %28 : i1 to i32
    %c0_i32_17 = arith.constant 0 : i32
    %30 = arith.cmpi ne, %29, %c0_i32_17 : i32
    scf.if %30 {
      %c0_18 = arith.constant 0 : index
      %c0_19 = arith.constant 0 : index
      %31 = vector.load %arg17[%c0_18, %c0_19] : memref<8x64xf32, #tpu.memory_space<vmem>>, vector<8x64xf32>
      %c0_20 = arith.constant 0 : index
      %c0_21 = arith.constant 0 : index
      %32 = vector.load %arg19[%c0_20, %c0_21] : memref<8x64xf32, #tpu.memory_space<vmem>>, vector<8x64xf32>
      %33 = arith.addf %31, %32 : vector<8x64xf32>
      %c0_22 = arith.constant 0 : index
      %c0_23 = arith.constant 0 : index
      %34 = vector.load %arg15[%c0_22, %c0_23] : memref<1x64xf32, #tpu.memory_space<vmem>>, vector<1x64xf32>
      %35 = vector.broadcast %34 : vector<1x64xf32> to vector<8x64xf32>
      %36 = arith.addf %33, %35 : vector<8x64xf32>
      %37 = vector.shape_cast %36 : vector<8x64xf32> to vector<1x8x64xf32>
      %c0_24 = arith.constant 0 : index
      %c0_25 = arith.constant 0 : index
      %c0_26 = arith.constant 0 : index
      %38 = vector.load %arg16[%c0_24, %c0_25, %c0_26] : memref<1x8x64xf32, #tpu.memory_space<vmem>>, vector<1x8x64xf32>
      tpu.vector_store %arg16[%c0_24, %c0_25, %c0_26], %37 {strides = array<i32>} : memref<1x8x64xf32, #tpu.memory_space<vmem>>, vector<1x8x64xf32>,
    } else {
    }
    return
  }
  func.func @transform_0(%arg0: i32, %arg1: i32) -> (i32, i32, i32) {
    %c0_i32 = arith.constant 0 : i32
    %c0_i32_0 = arith.constant 0 : i32
    %c0_i32_1 = arith.constant 0 : i32
    return %arg0, %c0_i32, %c0_i32_0 : i32, i32, i32
  }
  func.func @transform_1(%arg0: i32, %arg1: i32) -> (i32, i32, i32) {
    %c0_i32 = arith.constant 0 : i32
    %c0_i32_0 = arith.constant 0 : i32
    %c0_i32_1 = arith.constant 0 : i32
    return %arg0, %c0_i32, %c0_i32_0 : i32, i32, i32
  }
  func.func @transform_2(%arg0: i32, %arg1: i32) -> (i32, i32) {
    %c0_i32 = arith.constant 0 : i32
    %c0_i32_0 = arith.constant 0 : i32
    %c0_i32_1 = arith.constant 0 : i32
    return %c0_i32, %c0_i32_0 : i32, i32
  }
  func.func @transform_3(%arg0: i32, %arg1: i32) -> (i32, i32) {
    %c0_i32 = arith.constant 0 : i32
    %c0_i32_0 = arith.constant 0 : i32
    %c0_i32_1 = arith.constant 0 : i32
    return %c0_i32, %c0_i32_0 : i32, i32
  }
  func.func @transform_4(%arg0: i32, %arg1: i32) -> (i32, i32) {
    %c0_i32 = arith.constant 0 : i32
    %c0_i32_0 = arith.constant 0 : i32
    %c0_i32_1 = arith.constant 0 : i32
    return %c0_i32, %c0_i32_0 : i32, i32
  }
  func.func @transform_5(%arg0: i32, %arg1: i32) -> (i32, i32) {
    %c0_i32 = arith.constant 0 : i32
    %c0_i32_0 = arith.constant 0 : i32
    %c0_i32_1 = arith.constant 0 : i32
    return %c0_i32, %c0_i32_0 : i32, i32
  }
  func.func @transform_6(%arg0: i32, %arg1: i32) -> (i32, i32) {
    %c0_i32 = arith.constant 0 : i32
    %c0_i32_0 = arith.constant 0 : i32
    %c0_i32_1 = arith.constant 0 : i32
    return %c0_i32, %c0_i32_0 : i32, i32
  }
  func.func @transform_7(%arg0: i32, %arg1: i32) -> (i32, i32) {
    %c0_i32 = arith.constant 0 : i32
    %c0_i32_0 = arith.constant 0 : i32
    %c0_i32_1 = arith.constant 0 : i32
    return %c0_i32, %c0_i32_0 : i32, i32
  }
  func.func @transform_8(%arg0: i32, %arg1: i32) -> (i32, i32) {
    %c0_i32 = arith.constant 0 : i32
    %c0_i32_0 = arith.constant 0 : i32
    %c0_i32_1 = arith.constant 0 : i32
    return %c0_i32, %c0_i32_0 : i32, i32
  }
  func.func @transform_9(%arg0: i32, %arg1: i32) -> (i32, i32) {
    %c0_i32 = arith.constant 0 : i32
    %c0_i32_0 = arith.constant 0 : i32
    %c0_i32_1 = arith.constant 0 : i32
    return %c0_i32, %c0_i32_0 : i32, i32
  }
  func.func @transform_10(%arg0: i32, %arg1: i32) -> (i32, i32) {
    %c0_i32 = arith.constant 0 : i32
    %c0_i32_0 = arith.constant 0 : i32
    return %c0_i32, %arg1 : i32, i32
  }
  func.func @transform_11(%arg0: i32, %arg1: i32) -> (i32, i32) {
    %c0_i32 = arith.constant 0 : i32
    %c0_i32_0 = arith.constant 0 : i32
    return %c0_i32, %arg1 : i32, i32
  }
  func.func @transform_12(%arg0: i32, %arg1: i32) -> (i32, i32) {
    %c0_i32 = arith.constant 0 : i32
    %c0_i32_0 = arith.constant 0 : i32
    return %arg1, %c0_i32 : i32, i32
  }
  func.func @transform_13(%arg0: i32, %arg1: i32) -> (i32, i32) {
    %c0_i32 = arith.constant 0 : i32
    %c0_i32_0 = arith.constant 0 : i32
    %c0_i32_1 = arith.constant 0 : i32
    return %c0_i32, %c0_i32_0 : i32, i32
  }
  func.func @transform_14(%arg0: i32, %arg1: i32) -> (i32, i32, i32) {
    %c0_i32 = arith.constant 0 : i32
    %c0_i32_0 = arith.constant 0 : i32
    %c0_i32_1 = arith.constant 0 : i32
    return %arg0, %c0_i32, %c0_i32_0 : i32, i32, i32
  }
}

module attributes {stable_mosaic.version = 11 : i64} {
  func.func @_resblock_kernel(%arg0: i32, %arg1: i32, %arg2: memref<1x1x8xf32, #tpu.memory_space<vmem>>, %arg3: memref<1x8x64xf32, #tpu.memory_space<vmem>>, %arg4: memref<1x64xf32, #tpu.memory_space<vmem>>, %arg5: memref<1x64xf32, #tpu.memory_space<vmem>>, %arg6: memref<64x192xbf16, #tpu.memory_space<vmem>>, %arg7: memref<1x192xf32, #tpu.memory_space<vmem>>, %arg8: memref<64x64xbf16, #tpu.memory_space<vmem>>, %arg9: memref<1x64xf32, #tpu.memory_space<vmem>>, %arg10: memref<1x64xf32, #tpu.memory_space<vmem>>, %arg11: memref<1x64xf32, #tpu.memory_space<vmem>>, %arg12: memref<64x128xbf16, #tpu.memory_space<vmem>>, %arg13: memref<1x128xf32, #tpu.memory_space<vmem>>, %arg14: memref<128x64xbf16, #tpu.memory_space<vmem>>, %arg15: memref<1x64xf32, #tpu.memory_space<vmem>>, %arg16: memref<1x8x64xf32, #tpu.memory_space<vmem>>, %arg17: memref<8x64xf32, #tpu.memory_space<vmem>>, %arg18: memref<8x64xbf16, #tpu.memory_space<vmem>>, %arg19: memref<8x64xf32, #tpu.memory_space<vmem>>) attributes {dimension_semantics = [#tpu.dimension_semantics<parallel>, #tpu.dimension_semantics<arbitrary>], iteration_bounds = array<i64: 2, 2>, scalar_prefetch = 0 : i64, scratch_operands = 3 : i64, tpu.core_type = #tpu.core_type<tc>, window_params = [{transform_indices = @transform_0, window_bounds = array<i64: 1, 1, 8>}, {transform_indices = @transform_1, window_bounds = array<i64: 1, 8, 64>}, {pipeline_mode = #tpu.pipeline_mode<synchronous>, transform_indices = @transform_2, window_bounds = array<i64: 1, 64>}, {pipeline_mode = #tpu.pipeline_mode<synchronous>, transform_indices = @transform_3, window_bounds = array<i64: 1, 64>}, {pipeline_mode = #tpu.pipeline_mode<synchronous>, transform_indices = @transform_4, window_bounds = array<i64: 64, 192>}, {pipeline_mode = #tpu.pipeline_mode<synchronous>, transform_indices = @transform_5, window_bounds = array<i64: 1, 192>}, {pipeline_mode = #tpu.pipeline_mode<synchronous>, transform_indices = @transform_6, window_bounds = array<i64: 64, 64>}, {pipeline_mode = #tpu.pipeline_mode<synchronous>, transform_indices = @transform_7, window_bounds = array<i64: 1, 64>}, {pipeline_mode = #tpu.pipeline_mode<synchronous>, transform_indices = @transform_8, window_bounds = array<i64: 1, 64>}, {pipeline_mode = #tpu.pipeline_mode<synchronous>, transform_indices = @transform_9, window_bounds = array<i64: 1, 64>}, {transform_indices = @transform_10, window_bounds = array<i64: 64, 128>}, {transform_indices = @transform_11, window_bounds = array<i64: 1, 128>}, {transform_indices = @transform_12, window_bounds = array<i64: 128, 64>}, {pipeline_mode = #tpu.pipeline_mode<synchronous>, transform_indices = @transform_13, window_bounds = array<i64: 1, 64>}, {transform_indices = @transform_14, window_bounds = array<i64: 1, 8, 64>}]} {
    %c0_i32 = arith.constant 0 : i32
    %0 = arith.cmpi eq, %arg1, %c0_i32 : i32
    %1 = arith.extui %0 : i1 to i32
    %c0_i32_0 = arith.constant 0 : i32
    %2 = arith.cmpi ne, %1, %c0_i32_0 : i32
    scf.if %2 {
      %c0_18 = arith.constant 0 : index
      %c0_19 = arith.constant 0 : index
      %c0_20 = arith.constant 0 : index
      %31 = vector.load %arg3[%c0_18, %c0_19, %c0_20] : memref<1x8x64xf32, #tpu.memory_space<vmem>>, vector<1x8x64xf32>
      %32 = vector.shape_cast %31 : vector<1x8x64xf32> to vector<8x64xf32>
      %c0_21 = arith.constant 0 : index
      %c0_22 = arith.constant 0 : index
      %33 = vector.load %arg4[%c0_21, %c0_22] : memref<1x64xf32, #tpu.memory_space<vmem>>, vector<1x64xf32>
      %c0_23 = arith.constant 0 : index
      %c0_24 = arith.constant 0 : index
      %34 = vector.load %arg5[%c0_23, %c0_24] : memref<1x64xf32, #tpu.memory_space<vmem>>, vector<1x64xf32>
      %cst_25 = arith.constant dense<0.000000e+00> : vector<8xf32>
      %35 = vector.multi_reduction <add>, %32, %cst_25 [1] : vector<8x64xf32> to vector<8xf32>
      %36 = vector.shape_cast %35 : vector<8xf32> to vector<8x1xf32>
      %cst_26 = arith.constant 6.400000e+01 : f32
      %37 = vector.broadcast %cst_26 : f32 to vector<8x1xf32>
      %38 = arith.divf %36, %37 : vector<8x1xf32>
      %39 = vector.broadcast %38 : vector<8x1xf32> to vector<8x64xf32>
      %40 = arith.subf %32, %39 : vector<8x64xf32>
      %41 = arith.mulf %40, %40 : vector<8x64xf32>
      %cst_27 = arith.constant dense<0.000000e+00> : vector<8xf32>
      %42 = vector.multi_reduction <add>, %41, %cst_27 [1] : vector<8x64xf32> to vector<8xf32>
      %43 = vector.shape_cast %42 : vector<8xf32> to vector<8x1xf32>
      %cst_28 = arith.constant 6.400000e+01 : f32
      %44 = vector.broadcast %cst_28 : f32 to vector<8x1xf32>
      %45 = arith.divf %43, %44 : vector<8x1xf32>
      %cst_29 = arith.constant 9.99999974E-6 : f32
      %46 = vector.broadcast %cst_29 : f32 to vector<8x1xf32>
      %47 = arith.addf %45, %46 : vector<8x1xf32>
      %48 = math.rsqrt %47 : vector<8x1xf32>
      %49 = vector.broadcast %48 : vector<8x1xf32> to vector<8x64xf32>
      %50 = arith.mulf %40, %49 : vector<8x64xf32>
      %51 = vector.broadcast %33 : vector<1x64xf32> to vector<8x64xf32>
      %52 = arith.mulf %50, %51 : vector<8x64xf32>
      %53 = vector.broadcast %34 : vector<1x64xf32> to vector<8x64xf32>
      %54 = arith.addf %52, %53 : vector<8x64xf32>
      %55 = arith.truncf %54 : vector<8x64xf32> to vector<8x64xbf16>
      %c0_30 = arith.constant 0 : index
      %c0_31 = arith.constant 0 : index
      %56 = vector.load %arg6[%c0_30, %c0_31] : memref<64x192xbf16, #tpu.memory_space<vmem>>, vector<64x192xbf16>
      %cst_32 = arith.constant dense<0.000000e+00> : vector<8x192xf32>
      %57 = tpu.matmul %55, %56, %cst_32 {dimension_numbers = #tpu.dot_dimension_numbers<[1], [0], [0], [1], [0, 0, 1, 1], [], []>} : vector<8x64xbf16>, vector<64x192xbf16>, vector<8x192xf32> -> vector<8x192xf32>
      %c0_33 = arith.constant 0 : index
      %c0_34 = arith.constant 0 : index
      %58 = vector.load %arg7[%c0_33, %c0_34] : memref<1x192xf32, #tpu.memory_space<vmem>>, vector<1x192xf32>
      %59 = vector.broadcast %58 : vector<1x192xf32> to vector<8x192xf32>
      %60 = arith.addf %57, %59 : vector<8x192xf32>
      %c0_35 = arith.constant 0 : index
      %c0_36 = arith.constant 0 : index
      %c0_37 = arith.constant 0 : index
      %61 = vector.load %arg2[%c0_35, %c0_36, %c0_37] : memref<1x1x8xf32, #tpu.memory_space<vmem>>, vector<1x1x8xf32>
      %62 = vector.extract_strided_slice %60 {offsets = [0, 0], sizes = [8, 64], strides = [1, 1]} : vector<8x192xf32> to vector<8x64xf32>
      %63 = vector.shape_cast %62 : vector<8x64xf32> to vector<8x4x16xf32>
      %64 = tpu.transpose %63, [1, 0, 2] : vector<8x4x16xf32> -> vector<4x8x16xf32>
      %65 = vector.extract_strided_slice %60 {offsets = [0, 64], sizes = [8, 64], strides = [1, 1]} : vector<8x192xf32> to vector<8x64xf32>
      %66 = vector.shape_cast %65 : vector<8x64xf32> to vector<8x4x16xf32>
      %67 = tpu.transpose %66, [1, 0, 2] : vector<8x4x16xf32> -> vector<4x8x16xf32>
      %68 = vector.extract_strided_slice %60 {offsets = [0, 128], sizes = [8, 64], strides = [1, 1]} : vector<8x192xf32> to vector<8x64xf32>
      %69 = vector.shape_cast %68 : vector<8x64xf32> to vector<8x4x16xf32>
      %70 = tpu.transpose %69, [1, 0, 2] : vector<8x4x16xf32> -> vector<4x8x16xf32>
      %71 = arith.truncf %64 : vector<4x8x16xf32> to vector<4x8x16xbf16>
      %72 = arith.truncf %67 : vector<4x8x16xf32> to vector<4x8x16xbf16>
      "tpu.trace_start"() <{level = 10 : i32, message = "hqc,hkc->hqk"}> : () -> ()
      %cst_38 = arith.constant dense<0.000000e+00> : vector<4x8x8xf32>
      %73 = tpu.matmul %71, %72, %cst_38 {dimension_numbers = #tpu.dot_dimension_numbers<[2], [2], [1], [1], [0, 0, 0, 1, 1, 1], [0], [0]>} : vector<4x8x16xbf16>, vector<4x8x16xbf16>, vector<4x8x8xf32> -> vector<4x8x8xf32>
      "tpu.trace_stop"() : () -> ()
      %74 = vector.shape_cast %61 : vector<1x1x8xf32> to vector<1x8xf32>
      %75 = vector.shape_cast %74 : vector<1x8xf32> to vector<1x1x8xf32>
      %76 = vector.broadcast %75 : vector<1x1x8xf32> to vector<4x8x8xf32>
      %77 = arith.addf %73, %76 : vector<4x8x8xf32>
      %cst_39 = arith.constant dense<0xFF800000> : vector<4x8xf32>
      %78 = vector.multi_reduction <maximumf>, %77, %cst_39 [2] : vector<4x8x8xf32> to vector<4x8xf32>
      %79 = vector.shape_cast %78 : vector<4x8xf32> to vector<4x8x1xf32>
      %80 = vector.broadcast %79 : vector<4x8x1xf32> to vector<4x8x8xf32>
      %81 = arith.subf %77, %80 : vector<4x8x8xf32>
      %82 = math.exp %81 : vector<4x8x8xf32>
      %cst_40 = arith.constant dense<0.000000e+00> : vector<4x8xf32>
      %83 = vector.multi_reduction <add>, %82, %cst_40 [2] : vector<4x8x8xf32> to vector<4x8xf32>
      %84 = vector.shape_cast %83 : vector<4x8xf32> to vector<4x8x1xf32>
      %85 = tpu.reciprocal %84 {approx = true} : vector<4x8x1xf32> -> vector<4x8x1xf32>
      %86 = vector.broadcast %85 : vector<4x8x1xf32> to vector<4x8x8xf32>
      %87 = arith.mulf %82, %86 : vector<4x8x8xf32>
      %88 = arith.truncf %87 : vector<4x8x8xf32> to vector<4x8x8xbf16>
      %89 = arith.truncf %70 : vector<4x8x16xf32> to vector<4x8x16xbf16>
      "tpu.trace_start"() <{level = 10 : i32, message = "hqk,hkc->hqc"}> : () -> ()
      %cst_41 = arith.constant dense<0.000000e+00> : vector<4x8x16xf32>
      %90 = tpu.matmul %88, %89, %cst_41 {dimension_numbers = #tpu.dot_dimension_numbers<[2], [1], [1], [2], [0, 0, 0, 1, 1, 2], [0], [0]>} : vector<4x8x8xbf16>, vector<4x8x16xbf16>, vector<4x8x16xf32> -> vector<4x8x16xf32>
      "tpu.trace_stop"() : () -> ()
      %91 = tpu.transpose %90, [1, 0, 2] : vector<4x8x16xf32> -> vector<8x4x16xf32>
      %92 = vector.shape_cast %91 : vector<8x4x16xf32> to vector<8x64xf32>
      %93 = arith.truncf %92 : vector<8x64xf32> to vector<8x64xbf16>
      %c0_42 = arith.constant 0 : index
      %c0_43 = arith.constant 0 : index
      %94 = vector.load %arg8[%c0_42, %c0_43] : memref<64x64xbf16, #tpu.memory_space<vmem>>, vector<64x64xbf16>
      %cst_44 = arith.constant dense<0.000000e+00> : vector<8x64xf32>
      %95 = tpu.matmul %93, %94, %cst_44 {dimension_numbers = #tpu.dot_dimension_numbers<[1], [0], [0], [1], [0, 0, 1, 1], [], []>} : vector<8x64xbf16>, vector<64x64xbf16>, vector<8x64xf32> -> vector<8x64xf32>
      %c0_45 = arith.constant 0 : index
      %c0_46 = arith.constant 0 : index
      %96 = vector.load %arg9[%c0_45, %c0_46] : memref<1x64xf32, #tpu.memory_space<vmem>>, vector<1x64xf32>
      %97 = vector.broadcast %96 : vector<1x64xf32> to vector<8x64xf32>
      %98 = arith.addf %95, %97 : vector<8x64xf32>
      %99 = arith.addf %32, %98 : vector<8x64xf32>
      %c0_47 = arith.constant 0 : index
      %c0_48 = arith.constant 0 : index
      %100 = vector.load %arg17[%c0_47, %c0_48] : memref<8x64xf32, #tpu.memory_space<vmem>>, vector<8x64xf32>
      tpu.vector_store %arg17[%c0_47, %c0_48], %99 {strides = array<i32>} : memref<8x64xf32, #tpu.memory_space<vmem>>, vector<8x64xf32>,
      %c0_49 = arith.constant 0 : index
      %c0_50 = arith.constant 0 : index
      %101 = vector.load %arg10[%c0_49, %c0_50] : memref<1x64xf32, #tpu.memory_space<vmem>>, vector<1x64xf32>
      %c0_51 = arith.constant 0 : index
      %c0_52 = arith.constant 0 : index
      %102 = vector.load %arg11[%c0_51, %c0_52] : memref<1x64xf32, #tpu.memory_space<vmem>>, vector<1x64xf32>
      %cst_53 = arith.constant dense<0.000000e+00> : vector<8xf32>
      %103 = vector.multi_reduction <add>, %99, %cst_53 [1] : vector<8x64xf32> to vector<8xf32>
      %104 = vector.shape_cast %103 : vector<8xf32> to vector<8x1xf32>
      %cst_54 = arith.constant 6.400000e+01 : f32
      %105 = vector.broadcast %cst_54 : f32 to vector<8x1xf32>
      %106 = arith.divf %104, %105 : vector<8x1xf32>
      %107 = vector.broadcast %106 : vector<8x1xf32> to vector<8x64xf32>
      %108 = arith.subf %99, %107 : vector<8x64xf32>
      %109 = arith.mulf %108, %108 : vector<8x64xf32>
      %cst_55 = arith.constant dense<0.000000e+00> : vector<8xf32>
      %110 = vector.multi_reduction <add>, %109, %cst_55 [1] : vector<8x64xf32> to vector<8xf32>
      %111 = vector.shape_cast %110 : vector<8xf32> to vector<8x1xf32>
      %cst_56 = arith.constant 6.400000e+01 : f32
      %112 = vector.broadcast %cst_56 : f32 to vector<8x1xf32>
      %113 = arith.divf %111, %112 : vector<8x1xf32>
      %cst_57 = arith.constant 9.99999974E-6 : f32
      %114 = vector.broadcast %cst_57 : f32 to vector<8x1xf32>
      %115 = arith.addf %113, %114 : vector<8x1xf32>
      %116 = math.rsqrt %115 : vector<8x1xf32>
      %117 = vector.broadcast %116 : vector<8x1xf32> to vector<8x64xf32>
      %118 = arith.mulf %108, %117 : vector<8x64xf32>
      %119 = vector.broadcast %101 : vector<1x64xf32> to vector<8x64xf32>
      %120 = arith.mulf %118, %119 : vector<8x64xf32>
      %121 = vector.broadcast %102 : vector<1x64xf32> to vector<8x64xf32>
      %122 = arith.addf %120, %121 : vector<8x64xf32>
      %123 = arith.truncf %122 : vector<8x64xf32> to vector<8x64xbf16>
      %c0_58 = arith.constant 0 : index
      %c0_59 = arith.constant 0 : index
      %124 = vector.load %arg18[%c0_58, %c0_59] : memref<8x64xbf16, #tpu.memory_space<vmem>>, vector<8x64xbf16>
      tpu.vector_store %arg18[%c0_58, %c0_59], %123 {strides = array<i32>} : memref<8x64xbf16, #tpu.memory_space<vmem>>, vector<8x64xbf16>,
      %cst_60 = arith.constant 0.000000e+00 : f32
      %125 = vector.broadcast %cst_60 : f32 to vector<8x64xf32>
      %c0_61 = arith.constant 0 : index
      %c0_62 = arith.constant 0 : index
      %126 = vector.load %arg19[%c0_61, %c0_62] : memref<8x64xf32, #tpu.memory_space<vmem>>, vector<8x64xf32>
      tpu.vector_store %arg19[%c0_61, %c0_62], %125 {strides = array<i32>} : memref<8x64xf32, #tpu.memory_space<vmem>>, vector<8x64xf32>,
    } else {
    }
    %c0 = arith.constant 0 : index
    %c0_1 = arith.constant 0 : index
    %3 = vector.load %arg18[%c0, %c0_1] : memref<8x64xbf16, #tpu.memory_space<vmem>>, vector<8x64xbf16>
    %c0_2 = arith.constant 0 : index
    %c0_3 = arith.constant 0 : index
    %4 = vector.load %arg12[%c0_2, %c0_3] : memref<64x128xbf16, #tpu.memory_space<vmem>>, vector<64x128xbf16>
    %cst = arith.constant dense<0.000000e+00> : vector<8x128xf32>
    %5 = tpu.matmul %3, %4, %cst {dimension_numbers = #tpu.dot_dimension_numbers<[1], [0], [0], [1], [0, 0, 1, 1], [], []>} : vector<8x64xbf16>, vector<64x128xbf16>, vector<8x128xf32> -> vector<8x128xf32>
    %c0_4 = arith.constant 0 : index
    %c0_5 = arith.constant 0 : index
    %6 = vector.load %arg13[%c0_4, %c0_5] : memref<1x128xf32, #tpu.memory_space<vmem>>, vector<1x128xf32>
    %7 = vector.broadcast %6 : vector<1x128xf32> to vector<8x128xf32>
    %8 = arith.addf %5, %7 : vector<8x128xf32>
    %9 = arith.truncf %8 : vector<8x128xf32> to vector<8x128xbf16>
    %cst_6 = arith.constant 5.000000e-01 : bf16
    %10 = vector.broadcast %cst_6 : bf16 to vector<8x128xbf16>
    %11 = arith.mulf %10, %9 : vector<8x128xbf16>
    %cst_7 = arith.constant 4.467770e-02 : bf16
    %12 = vector.broadcast %cst_7 : bf16 to vector<8x128xbf16>
    %13 = arith.mulf %12, %9 : vector<8x128xbf16>
    %14 = arith.mulf %13, %9 : vector<8x128xbf16>
    %15 = arith.mulf %14, %9 : vector<8x128xbf16>
    %16 = arith.addf %9, %15 : vector<8x128xbf16>
    %cst_8 = arith.constant 7.968750e-01 : bf16
    %17 = vector.broadcast %cst_8 : bf16 to vector<8x128xbf16>
    %18 = arith.mulf %17, %16 : vector<8x128xbf16>
    %19 = math.tanh %18 : vector<8x128xbf16>
    %cst_9 = arith.constant 1.000000e+00 : bf16
    %20 = vector.broadcast %cst_9 : bf16 to vector<8x128xbf16>
    %21 = arith.addf %20, %19 : vector<8x128xbf16>
    %22 = arith.mulf %11, %21 : vector<8x128xbf16>
    %c0_10 = arith.constant 0 : index
    %c0_11 = arith.constant 0 : index
    %23 = vector.load %arg19[%c0_10, %c0_11] : memref<8x64xf32, #tpu.memory_space<vmem>>, vector<8x64xf32>
    %c0_12 = arith.constant 0 : index
    %c0_13 = arith.constant 0 : index
    %24 = vector.load %arg14[%c0_12, %c0_13] : memref<128x64xbf16, #tpu.memory_space<vmem>>, vector<128x64xbf16>
    %cst_14 = arith.constant dense<0.000000e+00> : vector<8x64xf32>
    %25 = tpu.matmul %22, %24, %cst_14 {dimension_numbers = #tpu.dot_dimension_numbers<[1], [0], [0], [1], [0, 0, 1, 1], [], []>} : vector<8x128xbf16>, vector<128x64xbf16>, vector<8x64xf32> -> vector<8x64xf32>
    %26 = arith.addf %23, %25 : vector<8x64xf32>
    %c0_15 = arith.constant 0 : index
    %c0_16 = arith.constant 0 : index
    %27 = vector.load %arg19[%c0_15, %c0_16] : memref<8x64xf32, #tpu.memory_space<vmem>>, vector<8x64xf32>
    tpu.vector_store %arg19[%c0_15, %c0_16], %26 {strides = array<i32>} : memref<8x64xf32, #tpu.memory_space<vmem>>, vector<8x64xf32>,
    %c1_i32 = arith.constant 1 : i32
    %28 = arith.cmpi eq, %arg1, %c1_i32 : i32
    %29 = arith.extui %28 : i1 to i32
    %c0_i32_17 = arith.constant 0 : i32
    %30 = arith.cmpi ne, %29, %c0_i32_17 : i32
    scf.if %30 {
      %c0_18 = arith.constant 0 : index
      %c0_19 = arith.constant 0 : index
      %31 = vector.load %arg17[%c0_18, %c0_19] : memref<8x64xf32, #tpu.memory_space<vmem>>, vector<8x64xf32>
      %c0_20 = arith.constant 0 : index
      %c0_21 = arith.constant 0 : index
      %32 = vector.load %arg19[%c0_20, %c0_21] : memref<8x64xf32, #tpu.memory_space<vmem>>, vector<8x64xf32>
      %33 = arith.addf %31, %32 : vector<8x64xf32>
      %c0_22 = arith.constant 0 : index
      %c0_23 = arith.constant 0 : index
      %34 = vector.load %arg15[%c0_22, %c0_23] : memref<1x64xf32, #tpu.memory_space<vmem>>, vector<1x64xf32>
      %35 = vector.broadcast %34 : vector<1x64xf32> to vector<8x64xf32>
      %36 = arith.addf %33, %35 : vector<8x64xf32>
      %37 = vector.shape_cast %36 : vector<8x64xf32> to vector<1x8x64xf32>
      %c0_24 = arith.constant 0 : index
      %c0_25 = arith.constant 0 : index
      %c0_26 = arith.constant 0 : index
      %38 = vector.load %arg16[%c0_24, %c0_25, %c0_26] : memref<1x8x64xf32, #tpu.memory_space<vmem>>, vector<1x8x64xf32>
      tpu.vector_store %arg16[%c0_24, %c0_25, %c0_26], %37 {strides = array<i32>} : memref<1x8x64xf32, #tpu.memory_space<vmem>>, vector<1x8x64xf32>,
    } else {
    }
    return
  }
  func.func @transform_0(%arg0: i32, %arg1: i32) -> (i32, i32, i32) {
    %c0_i32 = arith.constant 0 : i32
    %c0_i32_0 = arith.constant 0 : i32
    %c0_i32_1 = arith.constant 0 : i32
    return %arg0, %c0_i32, %c0_i32_0 : i32, i32, i32
  }
  func.func @transform_1(%arg0: i32, %arg1: i32) -> (i32, i32, i32) {
    %c0_i32 = arith.constant 0 : i32
    %c0_i32_0 = arith.constant 0 : i32
    %c0_i32_1 = arith.constant 0 : i32
    return %arg0, %c0_i32, %c0_i32_0 : i32, i32, i32
  }
  func.func @transform_2(%arg0: i32, %arg1: i32) -> (i32, i32) {
    %c0_i32 = arith.constant 0 : i32
    %c0_i32_0 = arith.constant 0 : i32
    %c0_i32_1 = arith.constant 0 : i32
    return %c0_i32, %c0_i32_0 : i32, i32
  }
  func.func @transform_3(%arg0: i32, %arg1: i32) -> (i32, i32) {
    %c0_i32 = arith.constant 0 : i32
    %c0_i32_0 = arith.constant 0 : i32
    %c0_i32_1 = arith.constant 0 : i32
    return %c0_i32, %c0_i32_0 : i32, i32
  }
  func.func @transform_4(%arg0: i32, %arg1: i32) -> (i32, i32) {
    %c0_i32 = arith.constant 0 : i32
    %c0_i32_0 = arith.constant 0 : i32
    %c0_i32_1 = arith.constant 0 : i32
    return %c0_i32, %c0_i32_0 : i32, i32
  }
  func.func @transform_5(%arg0: i32, %arg1: i32) -> (i32, i32) {
    %c0_i32 = arith.constant 0 : i32
    %c0_i32_0 = arith.constant 0 : i32
    %c0_i32_1 = arith.constant 0 : i32
    return %c0_i32, %c0_i32_0 : i32, i32
  }
  func.func @transform_6(%arg0: i32, %arg1: i32) -> (i32, i32) {
    %c0_i32 = arith.constant 0 : i32
    %c0_i32_0 = arith.constant 0 : i32
    %c0_i32_1 = arith.constant 0 : i32
    return %c0_i32, %c0_i32_0 : i32, i32
  }
  func.func @transform_7(%arg0: i32, %arg1: i32) -> (i32, i32) {
    %c0_i32 = arith.constant 0 : i32
    %c0_i32_0 = arith.constant 0 : i32
    %c0_i32_1 = arith.constant 0 : i32
    return %c0_i32, %c0_i32_0 : i32, i32
  }
  func.func @transform_8(%arg0: i32, %arg1: i32) -> (i32, i32) {
    %c0_i32 = arith.constant 0 : i32
    %c0_i32_0 = arith.constant 0 : i32
    %c0_i32_1 = arith.constant 0 : i32
    return %c0_i32, %c0_i32_0 : i32, i32
  }
  func.func @transform_9(%arg0: i32, %arg1: i32) -> (i32, i32) {
    %c0_i32 = arith.constant 0 : i32
    %c0_i32_0 = arith.constant 0 : i32
    %c0_i32_1 = arith.constant 0 : i32
    return %c0_i32, %c0_i32_0 : i32, i32
  }
  func.func @transform_10(%arg0: i32, %arg1: i32) -> (i32, i32) {
    %c0_i32 = arith.constant 0 : i32
    %c0_i32_0 = arith.constant 0 : i32
    return %c0_i32, %arg1 : i32, i32
  }
  func.func @transform_11(%arg0: i32, %arg1: i32) -> (i32, i32) {
    %c0_i32 = arith.constant 0 : i32
    %c0_i32_0 = arith.constant 0 : i32
    return %c0_i32, %arg1 : i32, i32
  }
  func.func @transform_12(%arg0: i32, %arg1: i32) -> (i32, i32) {
    %c0_i32 = arith.constant 0 : i32
    %c0_i32_0 = arith.constant 0 : i32
    return %arg1, %c0_i32 : i32, i32
  }
  func.func @transform_13(%arg0: i32, %arg1: i32) -> (i32, i32) {
    %c0_i32 = arith.constant 0 : i32
    %c0_i32_0 = arith.constant 0 : i32
    %c0_i32_1 = arith.constant 0 : i32
    return %c0_i32, %c0_i32_0 : i32, i32
  }
  func.func @transform_14(%arg0: i32, %arg1: i32) -> (i32, i32, i32) {
    %c0_i32 = arith.constant 0 : i32
    %c0_i32_0 = arith.constant 0 : i32
    %c0_i32_1 = arith.constant 0 : i32
    return %arg0, %c0_i32, %c0_i32_0 : i32, i32, i32
  }
}

</mosaic_0001>

<llo_original>
// kernel: transformer_forward.3
$region0: #{transformer_forward.3}
  #allocation0 [shape = 'u32[]', space=smem, size = 0x4, offset = 0x4, fixed_abs, tag = 'smem constant byte address 0x4 - core index']
  #allocation1 [shape = 'u32[144,128]{1,0:T(1,128)}', space=vmem, size = 0x12000, scoped, tag = 'internal scratch']
  #allocation2 [shape = 'f32[8,64]{1,0:T(8,128)}', space=vmem, size = 0x1000, scoped, tag = 'scratch operand']
  #allocation3 [shape = 'bf16[8,64]{1,0:T(8,128)(2,1)}', space=vmem, size = 0x800, scoped, tag = 'scratch operand']
  #allocation4 [shape = 'f32[8,64]{1,0:T(8,128)}', space=vmem, size = 0x1000, scoped, tag = 'scratch operand']
  %s0 = inlined_call_operand.vmem [shape: f32[2,1,8], index: 0, kind: input, shape index: {}]
  %s1 = inlined_call_operand.vmem [shape: f32[2,8,64], index: 1, kind: input, shape index: {}]
  %s2 = inlined_call_operand.vmem [shape: f32[1,64], index: 2, kind: input, shape index: {}]
  %s3 = inlined_call_operand.vmem [shape: f32[1,64], index: 3, kind: input, shape index: {}]
  %s4 = inlined_call_operand.vmem [shape: bf16[64,192], index: 4, kind: input, shape index: {}]
  %s5 = inlined_call_operand.vmem [shape: f32[1,192], index: 5, kind: input, shape index: {}]
  %s6 = inlined_call_operand.vmem [shape: bf16[64,64], index: 6, kind: input, shape index: {}]
  %s7 = inlined_call_operand.vmem [shape: f32[1,64], index: 7, kind: input, shape index: {}]
  %s8 = inlined_call_operand.vmem [shape: f32[1,64], index: 8, kind: input, shape index: {}]
  %s9 = inlined_call_operand.vmem [shape: f32[1,64], index: 9, kind: input, shape index: {}]
  %s10 = inlined_call_operand.vmem [shape: bf16[64,256], index: 10, kind: input, shape index: {}]
  %s11 = inlined_call_operand.vmem [shape: f32[1,256], index: 11, kind: input, shape index: {}]
  %s12 = inlined_call_operand.vmem [shape: bf16[256,64], index: 12, kind: input, shape index: {}]
  %s13 = inlined_call_operand.vmem [shape: f32[1,64], index: 13, kind: input, shape index: {}]
  %s14 = inlined_call_operand.hbm [shape: f32[2,8,64], index: 14, kind: output, shape index: {}]
  %s15 = sld [smem:[#allocation0]]
  $region138: #{transformer_forward.3} parent=0
    _
  %s17 = ssub.s32 1, %s15
  %s18 = scalar_select 0, %s17, %s15
  $region1: #{transformer_forward.3} parent=0
    #allocation5 [shape = 'u8[32768]{0}', space=vmem, size = 0x8000, scoped, tag = 'input window, operand 10']
    #allocation6 [shape = 'u8[8192]{0}', space=vmem, size = 0x2000, scoped, tag = 'output window, operand 0']
    #allocation7 [shape = 's32[2]{0}', space=sflag, size = 0x8, scoped, tag = 'scoped memory for transformer_forward.3']
    %19 = vsyncpa [#allocation7], 0
    %s20 = scalar_lea.sflag [#allocation7], 1
    %21 = vsyncpa %s20, 0
    loop: start=0, step=1, limit=6
    $region2: #{transformer_forward.3} parent=1 // loop_pre_header
      _
    $region3: #{transformer_forward.3} parent=1 // loop_header
      %s23 = sphi 0, %s27
      %p24 = scmp.ge.s32.totalorder %s23, 6
      %s30 = sphi 0, %s42
      %s31 = sphi 0, %s38
      %s32 = sphi 0, %s30
      %s33 = sphi 0, %s31
      %s34 = sphi 0, %s32
      %s35 = sphi 0, %s33
      %s45 = sphi 0, %s47
      %s48 = sphi 0, %s45
      %s49 = sphi 0, %s48
      %s65 = sphi 0, %s49
      %s71 = sphi 0, %s73
      %s74 = sphi 0, %s71
      %s75 = sphi 0, %s74
      %s91 = sphi 0, %s75
      %s95 = sphi 0, %s95
      %s97 = sphi 0, %s95
      %s98 = sphi 0, %s97
      %s112 = sphi 0, %s98
      %s116 = sphi 0, %s116
      %s118 = sphi 0, %s116
      %s119 = sphi 0, %s118
      %s133 = sphi 0, %s119
      %s137 = sphi 0, %s137
      %s139 = sphi 0, %s137
      %s140 = sphi 0, %s139
      %s154 = sphi 0, %s140
      %s158 = sphi 0, %s158
      %s160 = sphi 0, %s158
      %s161 = sphi 0, %s160
      %s175 = sphi 0, %s161
      %s179 = sphi 0, %s179
      %s181 = sphi 0, %s179
      %s182 = sphi 0, %s181
      %s196 = sphi 0, %s182
      %s200 = sphi 0, %s200
      %s202 = sphi 0, %s200
      %s203 = sphi 0, %s202
      %s217 = sphi 0, %s203
      %s221 = sphi 0, %s221
      %s223 = sphi 0, %s221
      %s224 = sphi 0, %s223
      %s238 = sphi 0, %s224
      %s242 = sphi 0, %s242
      %s244 = sphi 0, %s242
      %s245 = sphi 0, %s244
      %s259 = sphi 0, %s245
      %s265 = sphi 0, %s267
      %s268 = sphi 0, %s265
      %s269 = sphi 0, %s268
      %s285 = sphi 0, %s269
      %s291 = sphi 0, %s293
      %s294 = sphi 0, %s291
      %s295 = sphi 0, %s294
      %s311 = sphi 0, %s295
      %s317 = sphi 0, %s319
      %s320 = sphi 0, %s317
      %s321 = sphi 0, %s320
      %s337 = sphi 0, %s321
      %s341 = sphi 0, %s341
      %s343 = sphi 0, %s341
      %s344 = sphi 0, %s343
      %s358 = sphi 0, %s344
      %s364 = sphi 0, %s366
      %s367 = sphi 0, %s364
      %s368 = sphi 0, %s367
      %s384 = sphi 0, %s368
    $region4: #{transformer_forward.3} parent=1 // loop_header_branch
      %26 = sbr.rel (%p24) target = $region8
    $region5: #{transformer_forward.3} parent=1 // loop_body
      %s28 = ssub.s32 %s23, 1
      %s29 = ssub.s32 %s23, 2
      %s36 = sadd.s32 1, %s31
      %p37 = scmp.ge.s32.totalorder %s36, 2
      %s38 = scalar_select %p37, 0, %s36
      %s39 = sadd.s32 1, %s30
      %s40 = scalar_select %p37, %s39, %s30
      %p41 = scmp.ge.s32.totalorder %s40, 2
      %s42 = scalar_select %p41, 0, %s40
      %s43 = ssub.s32 %s30, %s42
      %p44 = scmp.eq.s32.totalorder %s43, 0
      %s46 = sadd.s32 %s45, 1
      %s47 = scalar_select %p44, %s45, %s46
      %p50 = pneg %p44
      %p51 = scmp.eq.s32.totalorder %s23, 3
      %p52 = por %p50, %p51
      %p53 = scmp.ne.s32.totalorder %s45, %s48
      %p54 = scmp.eq.s32.totalorder %s23, 0
      %p55 = por %p53, %p54
      %p56 = scmp.ne.s32.totalorder %s45, %s48
      %p57 = scmp.eq.s32.totalorder %s28, 3
      %p58 = por %p56, %p57
      %p59 = scmp.ne.s32.totalorder %s48, %s49
      %p60 = scmp.eq.s32.totalorder %s28, 0
      %p61 = por %p59, %p60
      %p62 = scmp.ne.s32.totalorder %s48, %s49
      %p63 = scmp.eq.s32.totalorder %s29, 3
      %p64 = por %p62, %p63
      %p66 = scmp.ne.s32.totalorder %s49, %s65
      %p67 = scmp.eq.s32.totalorder %s29, 0
      %p68 = por %p66, %p67
      %s69 = ssub.s32 %s30, %s42
      %p70 = scmp.eq.s32.totalorder %s69, 0
      %s72 = sadd.s32 %s71, 1
      %s73 = scalar_select %p70, %s71, %s72
      %p76 = pneg %p70
      %p77 = scmp.eq.s32.totalorder %s23, 3
      %p78 = por %p76, %p77
      %p79 = scmp.ne.s32.totalorder %s71, %s74
      %p80 = scmp.eq.s32.totalorder %s23, 0
      %p81 = por %p79, %p80
      %p82 = scmp.ne.s32.totalorder %s71, %s74
      %p83 = scmp.eq.s32.totalorder %s28, 3
      %p84 = por %p82, %p83
      %p85 = scmp.ne.s32.totalorder %s74, %s75
      %p86 = scmp.eq.s32.totalorder %s28, 0
      %p87 = por %p85, %p86
      %p88 = scmp.ne.s32.totalorder %s74, %s75
      %p89 = scmp.eq.s32.totalorder %s29, 3
      %p90 = por %p88, %p89
      %p92 = scmp.ne.s32.totalorder %s75, %s91
      %p93 = scmp.eq.s32.totalorder %s29, 0
      %p94 = por %p92, %p93
      %s96 = sadd.s32 %s95, 1
      %p99 = scmp.eq.s32.totalorder %s23, 3
      %p100 = scmp.ne.s32.totalorder %s95, %s97
      %p101 = scmp.eq.s32.totalorder %s23, 0
      %p102 = por %p100, %p101
      %p103 = scmp.ne.s32.totalorder %s95, %s97
      %p104 = scmp.eq.s32.totalorder %s28, 3
      %p105 = por %p103, %p104
      %p106 = scmp.ne.s32.totalorder %s97, %s98
      %p107 = scmp.eq.s32.totalorder %s28, 0
      %p108 = por %p106, %p107
      %p109 = scmp.ne.s32.totalorder %s97, %s98
      %p110 = scmp.eq.s32.totalorder %s29, 3
      %p111 = por %p109, %p110
      %p113 = scmp.ne.s32.totalorder %s98, %s112
      %p114 = scmp.eq.s32.totalorder %s29, 0
      %p115 = por %p113, %p114
      %s117 = sadd.s32 %s116, 1
      %p120 = scmp.eq.s32.totalorder %s23, 3
      %p121 = scmp.ne.s32.totalorder %s116, %s118
      %p122 = scmp.eq.s32.totalorder %s23, 0
      %p123 = por %p121, %p122
      %p124 = scmp.ne.s32.totalorder %s116, %s118
      %p125 = scmp.eq.s32.totalorder %s28, 3
      %p126 = por %p124, %p125
      %p127 = scmp.ne.s32.totalorder %s118, %s119
      %p128 = scmp.eq.s32.totalorder %s28, 0
      %p129 = por %p127, %p128
      %p130 = scmp.ne.s32.totalorder %s118, %s119
      %p131 = scmp.eq.s32.totalorder %s29, 3
      %p132 = por %p130, %p131
      %p134 = scmp.ne.s32.totalorder %s119, %s133
      %p135 = scmp.eq.s32.totalorder %s29, 0
      %p136 = por %p134, %p135
      %s138 = sadd.s32 %s137, 1
      %p141 = scmp.eq.s32.totalorder %s23, 3
      %p142 = scmp.ne.s32.totalorder %s137, %s139
      %p143 = scmp.eq.s32.totalorder %s23, 0
      %p144 = por %p142, %p143
      %p145 = scmp.ne.s32.totalorder %s137, %s139
      %p146 = scmp.eq.s32.totalorder %s28, 3
      %p147 = por %p145, %p146
      %p148 = scmp.ne.s32.totalorder %s139, %s140
      %p149 = scmp.eq.s32.totalorder %s28, 0
      %p150 = por %p148, %p149
      %p151 = scmp.ne.s32.totalorder %s139, %s140
      %p152 = scmp.eq.s32.totalorder %s29, 3
      %p153 = por %p151, %p152
      %p155 = scmp.ne.s32.totalorder %s140, %s154
      %p156 = scmp.eq.s32.totalorder %s29, 0
      %p157 = por %p155, %p156
      %s159 = sadd.s32 %s158, 1
      %p162 = scmp.eq.s32.totalorder %s23, 3
      %p163 = scmp.ne.s32.totalorder %s158, %s160
      %p164 = scmp.eq.s32.totalorder %s23, 0
      %p165 = por %p163, %p164
      %p166 = scmp.ne.s32.totalorder %s158, %s160
      %p167 = scmp.eq.s32.totalorder %s28, 3
      %p168 = por %p166, %p167
      %p169 = scmp.ne.s32.totalorder %s160, %s161
      %p170 = scmp.eq.s32.totalorder %s28, 0
      %p171 = por %p169, %p170
      %p172 = scmp.ne.s32.totalorder %s160, %s161
      %p173 = scmp.eq.s32.totalorder %s29, 3
      %p174 = por %p172, %p173
      %p176 = scmp.ne.s32.totalorder %s161, %s175
      %p177 = scmp.eq.s32.totalorder %s29, 0
      %p178 = por %p176, %p177
      %s180 = sadd.s32 %s179, 1
      %p183 = scmp.eq.s32.totalorder %s23, 3
      %p184 = scmp.ne.s32.totalorder %s179, %s181
      %p185 = scmp.eq.s32.totalorder %s23, 0
      %p186 = por %p184, %p185
      %p187 = scmp.ne.s32.totalorder %s179, %s181
      %p188 = scmp.eq.s32.totalorder %s28, 3
      %p189 = por %p187, %p188
      %p190 = scmp.ne.s32.totalorder %s181, %s182
      %p191 = scmp.eq.s32.totalorder %s28, 0
      %p192 = por %p190, %p191
      %p193 = scmp.ne.s32.totalorder %s181, %s182
      %p194 = scmp.eq.s32.totalorder %s29, 3
      %p195 = por %p193, %p194
      %p197 = scmp.ne.s32.totalorder %s182, %s196
      %p198 = scmp.eq.s32.totalorder %s29, 0
      %p199 = por %p197, %p198
      %s201 = sadd.s32 %s200, 1
      %p204 = scmp.eq.s32.totalorder %s23, 3
      %p205 = scmp.ne.s32.totalorder %s200, %s202
      %p206 = scmp.eq.s32.totalorder %s23, 0
      %p207 = por %p205, %p206
      %p208 = scmp.ne.s32.totalorder %s200, %s202
      %p209 = scmp.eq.s32.totalorder %s28, 3
      %p210 = por %p208, %p209
      %p211 = scmp.ne.s32.totalorder %s202, %s203
      %p212 = scmp.eq.s32.totalorder %s28, 0
      %p213 = por %p211, %p212
      %p214 = scmp.ne.s32.totalorder %s202, %s203
      %p215 = scmp.eq.s32.totalorder %s29, 3
      %p216 = por %p214, %p215
      %p218 = scmp.ne.s32.totalorder %s203, %s217
      %p219 = scmp.eq.s32.totalorder %s29, 0
      %p220 = por %p218, %p219
      %s222 = sadd.s32 %s221, 1
      %p225 = scmp.eq.s32.totalorder %s23, 3
      %p226 = scmp.ne.s32.totalorder %s221, %s223
      %p227 = scmp.eq.s32.totalorder %s23, 0
      %p228 = por %p226, %p227
      %p229 = scmp.ne.s32.totalorder %s221, %s223
      %p230 = scmp.eq.s32.totalorder %s28, 3
      %p231 = por %p229, %p230
      %p232 = scmp.ne.s32.totalorder %s223, %s224
      %p233 = scmp.eq.s32.totalorder %s28, 0
      %p234 = por %p232, %p233
      %p235 = scmp.ne.s32.totalorder %s223, %s224
      %p236 = scmp.eq.s32.totalorder %s29, 3
      %p237 = por %p235, %p236
      %p239 = scmp.ne.s32.totalorder %s224, %s238
      %p240 = scmp.eq.s32.totalorder %s29, 0
      %p241 = por %p239, %p240
      %s243 = sadd.s32 %s242, 1
      %p246 = scmp.eq.s32.totalorder %s23, 3
      %p247 = scmp.ne.s32.totalorder %s242, %s244
      %p248 = scmp.eq.s32.totalorder %s23, 0
      %p249 = por %p247, %p248
      %p250 = scmp.ne.s32.totalorder %s242, %s244
      %p251 = scmp.eq.s32.totalorder %s28, 3
      %p252 = por %p250, %p251
      %p253 = scmp.ne.s32.totalorder %s244, %s245
      %p254 = scmp.eq.s32.totalorder %s28, 0
      %p255 = por %p253, %p254
      %p256 = scmp.ne.s32.totalorder %s244, %s245
      %p257 = scmp.eq.s32.totalorder %s29, 3
      %p258 = por %p256, %p257
      %p260 = scmp.ne.s32.totalorder %s245, %s259
      %p261 = scmp.eq.s32.totalorder %s29, 0
      %p262 = por %p260, %p261
      %s263 = ssub.s32 %s31, %s38
      %p264 = scmp.eq.s32.totalorder %s263, 0
      %s266 = sadd.s32 %s265, 1
      %s267 = scalar_select %p264, %s265, %s266
      %p270 = pneg %p264
      %p271 = scmp.eq.s32.totalorder %s23, 3
      %p272 = por %p270, %p271
      %p273 = scmp.ne.s32.totalorder %s265, %s268
      %p274 = scmp.eq.s32.totalorder %s23, 0
      %p275 = por %p273, %p274
      %p276 = scmp.ne.s32.totalorder %s265, %s268
      %p277 = scmp.eq.s32.totalorder %s28, 3
      %p278 = por %p276, %p277
      %p279 = scmp.ne.s32.totalorder %s268, %s269
      %p280 = scmp.eq.s32.totalorder %s28, 0
      %p281 = por %p279, %p280
      %p282 = scmp.ne.s32.totalorder %s268, %s269
      %p283 = scmp.eq.s32.totalorder %s29, 3
      %p284 = por %p282, %p283
      %p286 = scmp.ne.s32.totalorder %s269, %s285
      %p287 = scmp.eq.s32.totalorder %s29, 0
      %p288 = por %p286, %p287
      %s289 = ssub.s32 %s31, %s38
      %p290 = scmp.eq.s32.totalorder %s289, 0
      %s292 = sadd.s32 %s291, 1
      %s293 = scalar_select %p290, %s291, %s292
      %p296 = pneg %p290
      %p297 = scmp.eq.s32.totalorder %s23, 3
      %p298 = por %p296, %p297
      %p299 = scmp.ne.s32.totalorder %s291, %s294
      %p300 = scmp.eq.s32.totalorder %s23, 0
      %p301 = por %p299, %p300
      %p302 = scmp.ne.s32.totalorder %s291, %s294
      %p303 = scmp.eq.s32.totalorder %s28, 3
      %p304 = por %p302, %p303
      %p305 = scmp.ne.s32.totalorder %s294, %s295
      %p306 = scmp.eq.s32.totalorder %s28, 0
      %p307 = por %p305, %p306
      %p308 = scmp.ne.s32.totalorder %s294, %s295
      %p309 = scmp.eq.s32.totalorder %s29, 3
      %p310 = por %p308, %p309
      %p312 = scmp.ne.s32.totalorder %s295, %s311
      %p313 = scmp.eq.s32.totalorder %s29, 0
      %p314 = por %p312, %p313
      %s315 = ssub.s32 %s31, %s38
      %p316 = scmp.eq.s32.totalorder %s315, 0
      %s318 = sadd.s32 %s317, 1
      %s319 = scalar_select %p316, %s317, %s318
      %p322 = pneg %p316
      %p323 = scmp.eq.s32.totalorder %s23, 3
      %p324 = por %p322, %p323
      %p325 = scmp.ne.s32.totalorder %s317, %s320
      %p326 = scmp.eq.s32.totalorder %s23, 0
      %p327 = por %p325, %p326
      %p328 = scmp.ne.s32.totalorder %s317, %s320
      %p329 = scmp.eq.s32.totalorder %s28, 3
      %p330 = por %p328, %p329
      %p331 = scmp.ne.s32.totalorder %s320, %s321
      %p332 = scmp.eq.s32.totalorder %s28, 0
      %p333 = por %p331, %p332
      %p334 = scmp.ne.s32.totalorder %s320, %s321
      %p335 = scmp.eq.s32.totalorder %s29, 3
      %p336 = por %p334, %p335
      %p338 = scmp.ne.s32.totalorder %s321, %s337
      %p339 = scmp.eq.s32.totalorder %s29, 0
      %p340 = por %p338, %p339
      %s342 = sadd.s32 %s341, 1
      %p345 = scmp.eq.s32.totalorder %s23, 3
      %p346 = scmp.ne.s32.totalorder %s341, %s343
      %p347 = scmp.eq.s32.totalorder %s23, 0
      %p348 = por %p346, %p347
      %p349 = scmp.ne.s32.totalorder %s341, %s343
      %p350 = scmp.eq.s32.totalorder %s28, 3
      %p351 = por %p349, %p350
      %p352 = scmp.ne.s32.totalorder %s343, %s344
      %p353 = scmp.eq.s32.totalorder %s28, 0
      %p354 = por %p352, %p353
      %p355 = scmp.ne.s32.totalorder %s343, %s344
      %p356 = scmp.eq.s32.totalorder %s29, 3
      %p357 = por %p355, %p356
      %p359 = scmp.ne.s32.totalorder %s344, %s358
      %p360 = scmp.eq.s32.totalorder %s29, 0
      %p361 = por %p359, %p360
      %s362 = ssub.s32 %s30, %s42
      %p363 = scmp.eq.s32.totalorder %s362, 0
      %s365 = sadd.s32 %s364, 1
      %s366 = scalar_select %p363, %s364, %s365
      %p369 = pneg %p363
      %p370 = scmp.eq.s32.totalorder %s23, 3
      %p371 = por %p369, %p370
      %p372 = scmp.ne.s32.totalorder %s364, %s367
      %p373 = scmp.eq.s32.totalorder %s23, 0
      %p374 = por %p372, %p373
      %p375 = scmp.ne.s32.totalorder %s364, %s367
      %p376 = scmp.eq.s32.totalorder %s28, 3
      %p377 = por %p375, %p376
      %p378 = scmp.ne.s32.totalorder %s367, %s368
      %p379 = scmp.eq.s32.totalorder %s28, 0
      %p380 = por %p378, %p379
      %p381 = scmp.ne.s32.totalorder %s367, %s368
      %p382 = scmp.eq.s32.totalorder %s29, 3
      %p383 = por %p381, %p382
      %p385 = scmp.ne.s32.totalorder %s368, %s384
      %p386 = scmp.eq.s32.totalorder %s29, 0
      %p387 = por %p385, %p386
      %p388 = scmp.le.s32.totalorder 1, %s23
      %p389 = scmp.lt.s32.totalorder %s23, 5
      %p390 = pnand %p388, %p389
      %p391 = pneg %p390
      // Predicated region
      $region9: #{transformer_forward.3} parent=5 // pred_check
        _
      $region10: #{transformer_forward.3} parent=5 // pred_check_branch
        %393 = sbr.rel (%p390) target = $region12
      $region11: #{transformer_forward.3} parent=5 // pred_region
        %s394 = ssub.s32 %s23, 1
        // Predicated region
        $region13: #{transformer_forward.3} parent=11 // pred_check
          %p395 = pneg %p108
        $region14: #{transformer_forward.3} parent=11 // pred_check_branch
          %397 = sbr.rel (%p395) target = $region16
        $region15: #{transformer_forward.3} parent=11 // pred_region
          _
        $region16: #{transformer_forward.3} parent=11 // pred_fallthru
          _
        // Predicated region
        $region17: #{transformer_forward.3} parent=11 // pred_check
          %p398 = pneg %p129
        $region18: #{transformer_forward.3} parent=11 // pred_check_branch
          %400 = sbr.rel (%p398) target = $region20
        $region19: #{transformer_forward.3} parent=11 // pred_region
          _
        $region20: #{transformer_forward.3} parent=11 // pred_fallthru
          _
        // Predicated region
        $region21: #{transformer_forward.3} parent=11 // pred_check
          %p401 = pneg %p150
        $region22: #{transformer_forward.3} parent=11 // pred_check_branch
          %403 = sbr.rel (%p401) target = $region24
        $region23: #{transformer_forward.3} parent=11 // pred_region
          _
        $region24: #{transformer_forward.3} parent=11 // pred_fallthru
          _
        // Predicated region
        $region25: #{transformer_forward.3} parent=11 // pred_check
          %p404 = pneg %p171
        $region26: #{transformer_forward.3} parent=11 // pred_check_branch
          %406 = sbr.rel (%p404) target = $region28
        $region27: #{transformer_forward.3} parent=11 // pred_region
          _
        $region28: #{transformer_forward.3} parent=11 // pred_fallthru
          _
        // Predicated region
        $region29: #{transformer_forward.3} parent=11 // pred_check
          %p407 = pneg %p192
        $region30: #{transformer_forward.3} parent=11 // pred_check_branch
          %409 = sbr.rel (%p407) target = $region32
        $region31: #{transformer_forward.3} parent=11 // pred_region
          _
        $region32: #{transformer_forward.3} parent=11 // pred_fallthru
          _
        // Predicated region
        $region33: #{transformer_forward.3} parent=11 // pred_check
          %p410 = pneg %p213
        $region34: #{transformer_forward.3} parent=11 // pred_check_branch
          %412 = sbr.rel (%p410) target = $region36
        $region35: #{transformer_forward.3} parent=11 // pred_region
          _
        $region36: #{transformer_forward.3} parent=11 // pred_fallthru
          _
        // Predicated region
        $region37: #{transformer_forward.3} parent=11 // pred_check
          %p413 = pneg %p234
        $region38: #{transformer_forward.3} parent=11 // pred_check_branch
          %415 = sbr.rel (%p413) target = $region40
        $region39: #{transformer_forward.3} parent=11 // pred_region
          _
        $region40: #{transformer_forward.3} parent=11 // pred_fallthru
          _
        // Predicated region
        $region41: #{transformer_forward.3} parent=11 // pred_check
          %p416 = pneg %p255
        $region42: #{transformer_forward.3} parent=11 // pred_check_branch
          %418 = sbr.rel (%p416) target = $region44
        $region43: #{transformer_forward.3} parent=11 // pred_region
          _
        $region44: #{transformer_forward.3} parent=11 // pred_fallthru
          _
        // Predicated region
        $region45: #{transformer_forward.3} parent=11 // pred_check
          %p419 = pneg %p354
        $region46: #{transformer_forward.3} parent=11 // pred_check_branch
          %421 = sbr.rel (%p419) target = $region48
        $region47: #{transformer_forward.3} parent=11 // pred_region
          _
        $region48: #{transformer_forward.3} parent=11 // pred_fallthru
          _
      $region12: #{transformer_forward.3} parent=5 // pred_fallthru
        _
      %p422 = scmp.lt.s32.totalorder %s23, 4
      // Predicated region
      $region49: #{transformer_forward.3} parent=5 // pred_check
        %p423 = pneg %p422
      $region50: #{transformer_forward.3} parent=5 // pred_check_branch
        %425 = sbr.rel (%p423) target = $region52
      $region51: #{transformer_forward.3} parent=5 // pred_region
        // Predicated region
        $region53: #{transformer_forward.3} parent=51 // pred_check
          %p426 = pneg %p55
        $region54: #{transformer_forward.3} parent=51 // pred_check_branch
          %428 = sbr.rel (%p426) target = $region56
        $region55: #{transformer_forward.3} parent=51 // pred_region
          %p429 = scmp.lt.s32.totalorder %s30, 1
          %s430 = scalar_select %p429, %s30, 1
          %s431 = scalar_lea.vmem %s0, %s430
        $region56: #{transformer_forward.3} parent=51 // pred_fallthru
          _
        // Predicated region
        $region57: #{transformer_forward.3} parent=51 // pred_check
          %p432 = pneg %p81
        $region58: #{transformer_forward.3} parent=51 // pred_check_branch
          %434 = sbr.rel (%p432) target = $region60
        $region59: #{transformer_forward.3} parent=51 // pred_region
          %p435 = scmp.lt.s32.totalorder %s30, 1
          %s436 = scalar_select %p435, %s30, 1
          %s437 = smul.addr %s436, 8
          %s438 = scalar_lea.vmem %s1, %s437
        $region60: #{transformer_forward.3} parent=51 // pred_fallthru
          _
        // Predicated region
        $region61: #{transformer_forward.3} parent=51 // pred_check
          %p439 = pneg %p275
        $region62: #{transformer_forward.3} parent=51 // pred_check_branch
          %441 = sbr.rel (%p439) target = $region64
        $region63: #{transformer_forward.3} parent=51 // pred_region
          %s442 = sand.u32 %s265, 1
          %s443 = sand.u32 %s265, 1
          %s444 = smul.addr %s443, 32
          %s445 = scalar_lea.vmem [#allocation5], %s444
          %s446 = smul.addr %s31, 4
          %s447 = scalar_lea.vmem %s10, %s446
          // Predicated region
          $region65: #{transformer_forward.3} parent=63 // pred_check
            _
          $region66: #{transformer_forward.3} parent=63 // pred_check_branch
            %449 = sbr.rel (0) target = $region68
          $region67: #{transformer_forward.3} parent=63 // pred_region
            // Predicated region
            $region69: #{transformer_forward.3} parent=67 // pred_check
              _
            $region70: #{transformer_forward.3} parent=67 // pred_check_branch
              %451 = sbr.rel target = $region72
            $region71: #{transformer_forward.3} parent=67 // pred_region
              // Predicated region
              $region84: #{transformer_forward.3} parent=71 // pred_check
                _
              $region85: #{transformer_forward.3} parent=71 // pred_check_branch
                %480 = sbr.rel (0) target = $region87
              $region86: #{transformer_forward.3} parent=71 // pred_region
                loop: start=0, step=1, limit=1
                $region88: #{transformer_forward.3} parent=86 // loop_pre_header
                  _
                $region89: #{transformer_forward.3} parent=86 // loop_header
                  %s482 = sphi 0, %s486
                  %p483 = scmp.ge.s32.totalorder %s482, 1
                  %s487 = sphi %s447, %s447
                  %s488 = sphi %s445, %s445
                $region90: #{transformer_forward.3} parent=86 // loop_header_branch
                  %485 = sbr.rel (%p483) target = $region94
                $region91: #{transformer_forward.3} parent=86 // loop_body
                  _
                $region92: #{transformer_forward.3} parent=86 // loop_footer
                  %s486 = sadd.s32 1, %s482
                $region93: #{transformer_forward.3} parent=86 // loop_footer_branch
                  %481 = sbr.rel target = $region89
                $region94: #{transformer_forward.3} parent=86 // loop_exit
                  _
                loop: start=0, step=1, limit=1
                $region95: #{transformer_forward.3} parent=86 // loop_pre_header
                  _
                $region96: #{transformer_forward.3} parent=86 // loop_header
                  %s491 = sphi 0, %s495
                  %p492 = scmp.ge.s32.totalorder %s491, 1
                  %s496 = sphi %s447, %s447
                  %s497 = sphi %s445, %s445
                $region97: #{transformer_forward.3} parent=86 // loop_header_branch
                  %494 = sbr.rel (%p492) target = $region101
                $region98: #{transformer_forward.3} parent=86 // loop_body
                  %v498 = vld [vmem:[%s496] sm:$0xf]
                  %499 = vst [vmem:[%s497] sm:$0xf] %v498
                  %v500 = vld [vmem:[%s496 + $0x8] sm:$0xf]
                  %501 = vst [vmem:[%s497 + $0x4] sm:$0xf] %v500
                  %v502 = vld [vmem:[%s496 + $0x10] sm:$0xf]
                  %503 = vst [vmem:[%s497 + $0x8] sm:$0xf] %v502
                  %v504 = vld [vmem:[%s496 + $0x18] sm:$0xf]
                  %505 = vst [vmem:[%s497 + $0xc] sm:$0xf] %v504
                  %v506 = vld [vmem:[%s496 + $0x20] sm:$0xf]
                  %507 = vst [vmem:[%s497 + $0x10] sm:$0xf] %v506
                  %v508 = vld [vmem:[%s496 + $0x28] sm:$0xf]
                  %509 = vst [vmem:[%s497 + $0x14] sm:$0xf] %v508
                  %v510 = vld [vmem:[%s496 + $0x30] sm:$0xf]
                  %511 = vst [vmem:[%s497 + $0x18] sm:$0xf] %v510
                  %v512 = vld [vmem:[%s496 + $0x38] sm:$0xf]
                  %513 = vst [vmem:[%s497 + $0x1c] sm:$0xf] %v512
                $region99: #{transformer_forward.3} parent=86 // loop_footer
                  %s495 = sadd.s32 1, %s491
                $region100: #{transformer_forward.3} parent=86 // loop_footer_branch
                  %490 = sbr.rel target = $region96
                $region101: #{transformer_forward.3} parent=86 // loop_exit
                  _
              $region87: #{transformer_forward.3} parent=71 // pred_fallthru
                _
            $region72: #{transformer_forward.3} parent=67 // pred_fallthru
              _
            // Predicated region
            $region73: #{transformer_forward.3} parent=67 // pred_check
              _
            $region74: #{transformer_forward.3} parent=67 // pred_check_branch
              %453 = sbr.rel (0) target = $region76
            $region75: #{transformer_forward.3} parent=67 // pred_region
              loop: start=0, step=1, limit=1
              $region77: #{transformer_forward.3} parent=75 // loop_pre_header
                _
              $region78: #{transformer_forward.3} parent=75 // loop_header
                %s456 = sphi 0, %s460
                %p457 = scmp.ge.s32.totalorder %s456, 1
                %s461 = sphi %s447, %s447
                %s462 = sphi %s445, %s445
              $region79: #{transformer_forward.3} parent=75 // loop_header_branch
                %459 = sbr.rel (%p457) target = $region83
              $region80: #{transformer_forward.3} parent=75 // loop_body
                %v463 = vld [vmem:[%s461] sm:$0xf]
                %464 = vst [vmem:[%s462] sm:$0xf] %v463
                %v465 = vld [vmem:[%s461 + $0x8] sm:$0xf]
                %466 = vst [vmem:[%s462 + $0x4] sm:$0xf] %v465
                %v467 = vld [vmem:[%s461 + $0x10] sm:$0xf]
                %468 = vst [vmem:[%s462 + $0x8] sm:$0xf] %v467
                %v469 = vld [vmem:[%s461 + $0x18] sm:$0xf]
                %470 = vst [vmem:[%s462 + $0xc] sm:$0xf] %v469
                %v471 = vld [vmem:[%s461 + $0x20] sm:$0xf]
                %472 = vst [vmem:[%s462 + $0x10] sm:$0xf] %v471
                %v473 = vld [vmem:[%s461 + $0x28] sm:$0xf]
                %474 = vst [vmem:[%s462 + $0x14] sm:$0xf] %v473
                %v475 = vld [vmem:[%s461 + $0x30] sm:$0xf]
                %476 = vst [vmem:[%s462 + $0x18] sm:$0xf] %v475
                %v477 = vld [vmem:[%s461 + $0x38] sm:$0xf]
                %478 = vst [vmem:[%s462 + $0x1c] sm:$0xf] %v477
              $region81: #{transformer_forward.3} parent=75 // loop_footer
                %s460 = sadd.s32 1, %s456
              $region82: #{transformer_forward.3} parent=75 // loop_footer_branch
                %455 = sbr.rel target = $region78
              $region83: #{transformer_forward.3} parent=75 // loop_exit
                _
            $region76: #{transformer_forward.3} parent=67 // pred_fallthru
              _
          $region68: #{transformer_forward.3} parent=63 // pred_fallthru
            _
          %514 = vnop
        $region64: #{transformer_forward.3} parent=51 // pred_fallthru
          _
        // Predicated region
        $region102: #{transformer_forward.3} parent=51 // pred_check
          %p515 = pneg %p301
        $region103: #{transformer_forward.3} parent=51 // pred_check_branch
          %517 = sbr.rel (%p515) target = $region105
        $region104: #{transformer_forward.3} parent=51 // pred_region
          %p518 = scmp.lt.s32.totalorder %s31, 1
          %s519 = scalar_select %p518, %s31, 1
          %s520 = scalar_lea.vmem %s11, %s519
        $region105: #{transformer_forward.3} parent=51 // pred_fallthru
          _
        // Predicated region
        $region106: #{transformer_forward.3} parent=51 // pred_check
          %p521 = pneg %p327
        $region107: #{transformer_forward.3} parent=51 // pred_check_branch
          %523 = sbr.rel (%p521) target = $region109
        $region108: #{transformer_forward.3} parent=51 // pred_region
          %s524 = smul.u32 16, %s31
          %p525 = scmp.lt.s32.totalorder %s524, 31
          %s526 = scalar_select %p525, %s524, 31
          %s527 = smul.addr %s526, 4
          %s528 = scalar_lea.vmem %s12, %s527
          %s529 = smul.u32 16, %s31
        $region109: #{transformer_forward.3} parent=51 // pred_fallthru
          _
      $region52: #{transformer_forward.3} parent=5 // pred_fallthru
        _
      %p530 = scmp.le.s32.totalorder 1, %s23
      %p531 = scmp.lt.s32.totalorder %s23, 5
      %p532 = pnand %p530, %p531
      %p533 = pneg %p532
      // Predicated region
      $region110: #{transformer_forward.3} parent=5 // pred_check
        _
      $region111: #{transformer_forward.3} parent=5 // pred_check_branch
        %535 = sbr.rel (%p532) target = $region113
      $region112: #{transformer_forward.3} parent=5 // pred_region
        %s536 = ssub.s32 %s23, 1
        %s537 = sand.u32 %s268, 1
        %s538 = sand.u32 %s268, 1
        %s539 = smul.addr %s538, 32
        %s540 = scalar_lea.vmem [#allocation5], %s539
        // Predicated region
        $region114: #{transformer_forward.3} parent=112 // pred_check
          %p541 = pneg %p281
        $region115: #{transformer_forward.3} parent=112 // pred_check_branch
          %543 = sbr.rel (%p541) target = $region117
        $region116: #{transformer_forward.3} parent=112 // pred_region
          _
        $region117: #{transformer_forward.3} parent=112 // pred_fallthru
          _
        %p544 = scmp.lt.s32.totalorder %s32, 1
        %s545 = scalar_select %p544, %s32, 1
        %s546 = scalar_lea.vmem %s0, %s545
        %p547 = pneg %p61
        %p548 = pneg %p58
        %p549 = scmp.lt.s32.totalorder %s32, 1
        %s550 = scalar_select %p549, %s32, 1
        %s551 = smul.addr %s550, 8
        %s552 = scalar_lea.vmem %s1, %s551
        %p553 = pneg %p87
        %p554 = pneg %p84
        %p555 = pneg %p108
        %p556 = pneg %p105
        %p557 = pneg %p129
        %p558 = pneg %p126
        %p559 = pneg %p150
        %p560 = pneg %p147
        %p561 = pneg %p171
        %p562 = pneg %p168
        %p563 = pneg %p192
        %p564 = pneg %p189
        %p565 = pneg %p213
        %p566 = pneg %p210
        %p567 = pneg %p234
        %p568 = pneg %p231
        %p569 = pneg %p255
        %p570 = pneg %p252
        %s571 = sand.u32 %s268, 1
        %s572 = sand.u32 %s268, 1
        %s573 = smul.addr %s572, 32
        %s574 = scalar_lea.vmem [#allocation5], %s573
        %p575 = pneg %p281
        %p576 = pneg %p278
        %p577 = scmp.lt.s32.totalorder %s33, 1
        %s578 = scalar_select %p577, %s33, 1
        %s579 = scalar_lea.vmem %s11, %s578
        %p580 = pneg %p307
        %p581 = pneg %p304
        %s582 = smul.u32 16, %s33
        %p583 = scmp.lt.s32.totalorder %s582, 31
        %s584 = scalar_select %p583, %s582, 31
        %s585 = smul.addr %s584, 4
        %s586 = scalar_lea.vmem %s12, %s585
        %p587 = pneg %p333
        %p588 = pneg %p330
        %p589 = pneg %p354
        %p590 = pneg %p351
        %p591 = pneg %p380
        %p592 = pneg %p377
        %s593 = sand.u32 %s367, 1
        %s594 = scalar_lea.sflag [#allocation7], %s593
        %s595 = sand.u32 %s367, 1
        %s596 = smul.addr %s595, 8
        %s597 = scalar_lea.vmem [#allocation6], %s596
        %p598 = scmp.lt.s32.totalorder %s32, 1
        %s599 = scalar_select %p598, %s32, 1
        %s600 = scalar_lea.vmem %s0, %s599
        %p601 = scmp.lt.s32.totalorder %s32, 1
        %s602 = scalar_select %p601, %s32, 1
        %s603 = smul.addr %s602, 8
        %s604 = scalar_lea.vmem %s1, %s603
        %p605 = scmp.lt.s32.totalorder %s33, 1
        %s606 = scalar_select %p605, %s33, 1
        %s607 = scalar_lea.vmem %s11, %s606
        %s608 = smul.u32 16, %s33
        %p609 = scmp.lt.s32.totalorder %s608, 31
        %s610 = scalar_select %p609, %s608, 31
        %s611 = smul.addr %s610, 4
        %s612 = scalar_lea.vmem %s12, %s611
        %s613 = smul.u32 16, %s33
        %p619 = scmp.eq.s32.totalorder %s33, 0
        // Predicated region
        $region118: #{transformer_forward.3} parent=112 // pred_check
          %p620 = pneg %p619
        $region119: #{transformer_forward.3} parent=112 // pred_check_branch
          %622 = sbr.rel (%p620) target = $region121
        $region120: #{transformer_forward.3} parent=112 // pred_region
          %v623 = vld [vmem:[%s604] sm:$0xff]
          %v624 = vld [vmem:[%s2] sm:$0x1]
          %v625 = vld [vmem:[%s3] sm:$0x1]
          %vm626 = vcmask 523264
          %v627 = vsel %vm626, %v623, 0.0
          %628 = vadd.xlane.f32.xlu0 %v627
          %v629 = vpop.xlane.xlu0 %628
          %v630 = vrcp.pop 64.0
          %v631 = vmul.f32 %v629, %v630
          %v632 = vsub.f32 %v623, %v631
          %v633 = vmul.f32 %v632, %v632
          %v634 = vsel %vm626, %v633, 0.0
          %635 = vadd.xlane.f32.xlu0 %v634
          %v636 = vpop.xlane.xlu0 %635
          %v637 = vmul.f32 %v636, %v630
          %v638 = vadd.f32 %v637, 1e-05
          %v639 = vrsqrt.pop %v638
          %v640 = vmul.f32 %v632, %v639
          %v642 = vlaneseq
          %v643 = vshrl.u32 %v642, 7
          %v644 = vsub.s32 0, %v643
          %v645 = vrot.slane %v624, %v644
          %v647 = vmul.f32 %v640, %v645
          %v649 = vlaneseq
          %v650 = vshrl.u32 %v649, 7
          %v651 = vsub.s32 0, %v650
          %v652 = vrot.slane %v625, %v651
          %v654 = vadd.f32 %v647, %v652
          %v655 = vpack.c.bf16 %v654, %v654
          %v656 = vld [vmem:[%s4] sm:$0xff]
          %v657 = vld [vmem:[%s4 + $0x8] sm:$0xff]
          %v658 = vld [vmem:[%s4 + $0x10] sm:$0xff]
          %v659 = vld [vmem:[%s4 + $0x18] sm:$0xff]
          %v660 = vld [vmem:[%s4 + $0x20] sm:$0xff]
          %v661 = vld [vmem:[%s4 + $0x28] sm:$0xff]
          %v662 = vld [vmem:[%s4 + $0x30] sm:$0xff]
          %v663 = vld [vmem:[%s4 + $0x38] sm:$0xff]
          %v664 = vld [vmem:[%s5] sm:$0x3]
          %v666 = vlaneseq
          %v667 = vshrl.u32 %v666, 7
          %v668 = vsub.s32 0, %v667
          %v669 = vrot.slane %v664, %v668
          %v670 = vlaneseq
          %v671 = vshrl.u32 %v670, 7
          %v672 = vsub.s32 1, %v671
          %v673 = vrot.slane %v664, %v672
          %v684 = vunpack.c.l.b16 %v656
          %v685 = vunpack.c.h.b16 %v656
          %v686 = vunpack.c.l.b16 %v657
          %v687 = vunpack.c.h.b16 %v657
          %v688 = vunpack.c.l.b16 %v658
          %v689 = vunpack.c.h.b16 %v658
          %v690 = vunpack.c.l.b16 %v659
          %v691 = vunpack.c.h.b16 %v659
          %v692 = vunpack.c.l.b16 %v660
          %v693 = vunpack.c.h.b16 %v660
          %v694 = vunpack.c.l.b16 %v661
          %v695 = vunpack.c.h.b16 %v661
          %v696 = vunpack.c.l.b16 %v662
          %v697 = vunpack.c.h.b16 %v662
          %v698 = vunpack.c.l.b16 %v663
          %v699 = vunpack.c.h.b16 %v663
          %v700 = vpack.c.b16 %v686, %v684
          %v701 = vpack.c.b16 %v687, %v685
          %v702 = vpack.c.b16 %v690, %v688
          %v703 = vpack.c.b16 %v691, %v689
          %v704 = vpack.c.b16 %v694, %v692
          %v705 = vpack.c.b16 %v695, %v693
          %v706 = vpack.c.b16 %v698, %v696
          %v707 = vpack.c.b16 %v699, %v697
          %v717 = vsel %vm626, %v655, 0
          %719 = vmatprep.subr.bf16.mxu0 %v701
          %720 = vmatpush1.bf16.msra.mxu0 %v700
          %721 = vmatprep.subr.bf16.mxu0 %v703
          %722 = vmatpush1.bf16.msra.mxu0 %v702
          %723 = vmatprep.subr.bf16.mxu0 %v705
          %724 = vmatpush1.bf16.msra.mxu0 %v704
          %725 = vmatprep.subr.bf16.mxu0 %v707
          %726 = vmatpush1.bf16.msra.mxu0 %v706
          %727 = vmatprep.subr.bf16.mxu0 0
          %728 = vmatpush1.bf16.msra.mxu0 0
          %729 = vmatprep.subr.bf16.mxu0 0
          %730 = vmatpush1.bf16.msra.mxu0 0
          %731 = vmatprep.subr.bf16.mxu0 0
          %732 = vmatpush1.bf16.msra.mxu0 0
          %733 = vmatprep.subr.bf16.mxu0 0
          %734 = vmatpush1.bf16.msra.mxu0 0
          %735 = vmatprep.subr.bf16.mxu0 0
          %736 = vmatpush1.bf16.msra.mxu0 0
          %737 = vmatprep.subr.bf16.mxu0 0
          %738 = vmatpush1.bf16.msra.mxu0 0
          %739 = vmatprep.subr.bf16.mxu0 0
          %740 = vmatpush1.bf16.msra.mxu0 0
          %741 = vmatprep.subr.bf16.mxu0 0
          %742 = vmatpush1.bf16.msra.mxu0 0
          %743 = vmatprep.subr.bf16.mxu0 0
          %744 = vmatpush1.bf16.msra.mxu0 0
          %745 = vmatprep.subr.bf16.mxu0 0
          %746 = vmatpush1.bf16.msra.mxu0 0
          %747 = vmatprep.subr.bf16.mxu0 0
          %748 = vmatpush1.bf16.msra.mxu0 0
          %749 = vmatprep.subr.bf16.mxu0 0
          %750 = vmatpush1.bf16.msra.mxu0 0
          %751 = vmatprep.mubr.bf16.mxu0 0
          %752 = vmatmul.mubr.bf16.gmra.mrb[0].mxu0 %v717
          %v753 = vpop.f32.mrb[0].mxu0
          %v754 = vadd.f32 %v669, %v753
          %v755 = vpop.f32.mrb[0].mxu0
          %v756 = vadd.f32 %v673, %v755
          %v757 = vpop.f32.mrb[0].mxu0
          %v758 = vpop.f32.mrb[0].mxu0
          %759 = vdwg.mxu0
          %v760 = vld [vmem:[%s600] sm:$0x1]
          %762 = vrot.lane.b32.xlu0 %v754, 112
          %v763 = vpop.permute.xlu0 %762
          %765 = vrot.lane.b32.xlu0 %v754, 96
          %v766 = vpop.permute.xlu0 %765
          %768 = vrot.lane.b32.xlu0 %v754, 80
          %v769 = vpop.permute.xlu0 %768
          %v771 = vcombine.low %v754, %v766
          %v772 = vcombine.high %v754, %v766
          %v774 = vunpack.c.l.s4 1983009808
          %v775 = vunpack.c.0.s8 %v774
          %v776 = vlaneseq
          %v777 = vshrl.u32 %v776, 7
          %v778 = vsub.s32 %v775, %v777
          %v779 = vrot.slane %v771, %v778
          %v781 = vunpack.c.l.s4 1983009808
          %v782 = vunpack.c.0.s8 %v781
          %v783 = vlaneseq
          %v784 = vshrl.u32 %v783, 7
          %v785 = vsub.s32 %v782, %v784
          %v786 = vrot.slane %v772, %v785
          %v787 = vcombine.low %v763, %v769
          %v788 = vcombine.high %v763, %v769
          %v790 = vunpack.c.l.s4 1983009808
          %v791 = vunpack.c.0.s8 %v790
          %v792 = vlaneseq
          %v793 = vshrl.u32 %v792, 7
          %v794 = vsub.s32 %v791, %v793
          %v795 = vrot.slane %v787, %v794
          %v797 = vunpack.c.l.s4 1983009808
          %v798 = vunpack.c.0.s8 %v797
          %v799 = vlaneseq
          %v800 = vshrl.u32 %v799, 7
          %v801 = vsub.s32 %v798, %v800
          %v802 = vrot.slane %v788, %v801
          %v803 = vcombine.low %v779, %v795
          %v804 = vcombine.high %v779, %v795
          %v806 = vunpack.c.l.s4 1934713408
          %v807 = vunpack.c.0.s8 %v806
          %v808 = vlaneseq
          %v809 = vshrl.u32 %v808, 7
          %v810 = vsub.s32 %v807, %v809
          %v811 = vrot.slane %v803, %v810
          %v813 = vunpack.c.l.s4 1934713408
          %v814 = vunpack.c.0.s8 %v813
          %v815 = vlaneseq
          %v816 = vshrl.u32 %v815, 7
          %v817 = vsub.s32 %v814, %v816
          %v818 = vrot.slane %v804, %v817
          %v819 = vcombine.low %v786, %v802
          %v820 = vcombine.high %v786, %v802
          %v822 = vunpack.c.l.s4 1934713408
          %v823 = vunpack.c.0.s8 %v822
          %v824 = vlaneseq
          %v825 = vshrl.u32 %v824, 7
          %v826 = vsub.s32 %v823, %v825
          %v827 = vrot.slane %v819, %v826
          %v829 = vunpack.c.l.s4 1934713408
          %v830 = vunpack.c.0.s8 %v829
          %v831 = vlaneseq
          %v832 = vshrl.u32 %v831, 7
          %v833 = vsub.s32 %v830, %v832
          %v834 = vrot.slane %v820, %v833
          %v835 = vcombine.high %v811, 0.0
          %v836 = vcombine.high %v818, 0.0
          %v837 = vcombine.high %v827, 0.0
          %v838 = vcombine.high %v834, 0.0
          %v839 = vcombine.low %v811, %v818
          %v841 = vunpack.c.l.s4 1983009808
          %v842 = vunpack.c.0.s8 %v841
          %v843 = vlaneseq
          %v844 = vshrl.u32 %v843, 7
          %v845 = vsub.s32 %v842, %v844
          %v846 = vrot.slane %v839, %v845
          %v847 = vcombine.low %v835, %v836
          %v849 = vunpack.c.l.s4 1983009808
          %v850 = vunpack.c.0.s8 %v849
          %v851 = vlaneseq
          %v852 = vshrl.u32 %v851, 7
          %v853 = vsub.s32 %v850, %v852
          %v854 = vrot.slane %v847, %v853
          %v855 = vcombine.low %v827, %v834
          %v857 = vunpack.c.l.s4 1983009808
          %v858 = vunpack.c.0.s8 %v857
          %v859 = vlaneseq
          %v860 = vshrl.u32 %v859, 7
          %v861 = vsub.s32 %v858, %v860
          %v862 = vrot.slane %v855, %v861
          %v863 = vcombine.low %v837, %v838
          %v865 = vunpack.c.l.s4 1983009808
          %v866 = vunpack.c.0.s8 %v865
          %v867 = vlaneseq
          %v868 = vshrl.u32 %v867, 7
          %v869 = vsub.s32 %v866, %v868
          %v870 = vrot.slane %v863, %v869
          %v871 = vcombine.low %v846, %v854
          %v872 = vcombine.high %v846, %v854
          %v874 = vunpack.c.l.s4 1934713408
          %v875 = vunpack.c.0.s8 %v874
          %v876 = vlaneseq
          %v877 = vshrl.u32 %v876, 7
          %v878 = vsub.s32 %v875, %v877
          %v879 = vrot.slane %v871, %v878
          %v881 = vunpack.c.l.s4 1934713408
          %v882 = vunpack.c.0.s8 %v881
          %v883 = vlaneseq
          %v884 = vshrl.u32 %v883, 7
          %v885 = vsub.s32 %v882, %v884
          %v886 = vrot.slane %v872, %v885
          %v887 = vcombine.low %v862, %v870
          %v888 = vcombine.high %v862, %v870
          %v890 = vunpack.c.l.s4 1934713408
          %v891 = vunpack.c.0.s8 %v890
          %v892 = vlaneseq
          %v893 = vshrl.u32 %v892, 7
          %v894 = vsub.s32 %v891, %v893
          %v895 = vrot.slane %v887, %v894
          %v897 = vunpack.c.l.s4 1934713408
          %v898 = vunpack.c.0.s8 %v897
          %v899 = vlaneseq
          %v900 = vshrl.u32 %v899, 7
          %v901 = vsub.s32 %v898, %v900
          %v902 = vrot.slane %v888, %v901
          %v903 = vcombine.low %v879, %v895
          %v904 = vcombine.high %v879, %v895
          %v905 = vcombine.low %v886, %v902
          %v906 = vcombine.high %v886, %v902
          %907 = vrot.lane.b32.xlu0 %v754, 64
          %v908 = vpop.permute.xlu0 %907
          %909 = vrot.lane.b32.xlu0 %v763, 64
          %v910 = vpop.permute.xlu0 %909
          %911 = vrot.lane.b32.xlu0 %v766, 64
          %v912 = vpop.permute.xlu0 %911
          %913 = vrot.lane.b32.xlu0 %v769, 64
          %v914 = vpop.permute.xlu0 %913
          %v919 = vcombine.low %v908, %v912
          %v920 = vcombine.high %v908, %v912
          %v922 = vunpack.c.l.s4 1983009808
          %v923 = vunpack.c.0.s8 %v922
          %v924 = vlaneseq
          %v925 = vshrl.u32 %v924, 7
          %v926 = vsub.s32 %v923, %v925
          %v927 = vrot.slane %v919, %v926
          %v929 = vunpack.c.l.s4 1983009808
          %v930 = vunpack.c.0.s8 %v929
          %v931 = vlaneseq
          %v932 = vshrl.u32 %v931, 7
          %v933 = vsub.s32 %v930, %v932
          %v934 = vrot.slane %v920, %v933
          %v935 = vcombine.low %v910, %v914
          %v936 = vcombine.high %v910, %v914
          %v938 = vunpack.c.l.s4 1983009808
          %v939 = vunpack.c.0.s8 %v938
          %v940 = vlaneseq
          %v941 = vshrl.u32 %v940, 7
          %v942 = vsub.s32 %v939, %v941
          %v943 = vrot.slane %v935, %v942
          %v945 = vunpack.c.l.s4 1983009808
          %v946 = vunpack.c.0.s8 %v945
          %v947 = vlaneseq
          %v948 = vshrl.u32 %v947, 7
          %v949 = vsub.s32 %v946, %v948
          %v950 = vrot.slane %v936, %v949
          %v951 = vcombine.low %v927, %v943
          %v952 = vcombine.high %v927, %v943
          %v954 = vunpack.c.l.s4 1934713408
          %v955 = vunpack.c.0.s8 %v954
          %v956 = vlaneseq
          %v957 = vshrl.u32 %v956, 7
          %v958 = vsub.s32 %v955, %v957
          %v959 = vrot.slane %v951, %v958
          %v961 = vunpack.c.l.s4 1934713408
          %v962 = vunpack.c.0.s8 %v961
          %v963 = vlaneseq
          %v964 = vshrl.u32 %v963, 7
          %v965 = vsub.s32 %v962, %v964
          %v966 = vrot.slane %v952, %v965
          %v967 = vcombine.low %v934, %v950
          %v968 = vcombine.high %v934, %v950
          %v970 = vunpack.c.l.s4 1934713408
          %v971 = vunpack.c.0.s8 %v970
          %v972 = vlaneseq
          %v973 = vshrl.u32 %v972, 7
          %v974 = vsub.s32 %v971, %v973
          %v975 = vrot.slane %v967, %v974
          %v977 = vunpack.c.l.s4 1934713408
          %v978 = vunpack.c.0.s8 %v977
          %v979 = vlaneseq
          %v980 = vshrl.u32 %v979, 7
          %v981 = vsub.s32 %v978, %v980
          %v982 = vrot.slane %v968, %v981
          %v983 = vcombine.high %v959, 0.0
          %v984 = vcombine.high %v966, 0.0
          %v985 = vcombine.high %v975, 0.0
          %v986 = vcombine.high %v982, 0.0
          %v987 = vcombine.low %v959, %v966
          %v989 = vunpack.c.l.s4 1983009808
          %v990 = vunpack.c.0.s8 %v989
          %v991 = vlaneseq
          %v992 = vshrl.u32 %v991, 7
          %v993 = vsub.s32 %v990, %v992
          %v994 = vrot.slane %v987, %v993
          %v995 = vcombine.low %v983, %v984
          %v997 = vunpack.c.l.s4 1983009808
          %v998 = vunpack.c.0.s8 %v997
          %v999 = vlaneseq
          %v1000 = vshrl.u32 %v999, 7
          %v1001 = vsub.s32 %v998, %v1000
          %v1002 = vrot.slane %v995, %v1001
          %v1003 = vcombine.low %v975, %v982
          %v1005 = vunpack.c.l.s4 1983009808
          %v1006 = vunpack.c.0.s8 %v1005
          %v1007 = vlaneseq
          %v1008 = vshrl.u32 %v1007, 7
          %v1009 = vsub.s32 %v1006, %v1008
          %v1010 = vrot.slane %v1003, %v1009
          %v1011 = vcombine.low %v985, %v986
          %v1013 = vunpack.c.l.s4 1983009808
          %v1014 = vunpack.c.0.s8 %v1013
          %v1015 = vlaneseq
          %v1016 = vshrl.u32 %v1015, 7
          %v1017 = vsub.s32 %v1014, %v1016
          %v1018 = vrot.slane %v1011, %v1017
          %v1019 = vcombine.low %v994, %v1002
          %v1020 = vcombine.high %v994, %v1002
          %v1022 = vunpack.c.l.s4 1934713408
          %v1023 = vunpack.c.0.s8 %v1022
          %v1024 = vlaneseq
          %v1025 = vshrl.u32 %v1024, 7
          %v1026 = vsub.s32 %v1023, %v1025
          %v1027 = vrot.slane %v1019, %v1026
          %v1029 = vunpack.c.l.s4 1934713408
          %v1030 = vunpack.c.0.s8 %v1029
          %v1031 = vlaneseq
          %v1032 = vshrl.u32 %v1031, 7
          %v1033 = vsub.s32 %v1030, %v1032
          %v1034 = vrot.slane %v1020, %v1033
          %v1035 = vcombine.low %v1010, %v1018
          %v1036 = vcombine.high %v1010, %v1018
          %v1038 = vunpack.c.l.s4 1934713408
          %v1039 = vunpack.c.0.s8 %v1038
          %v1040 = vlaneseq
          %v1041 = vshrl.u32 %v1040, 7
          %v1042 = vsub.s32 %v1039, %v1041
          %v1043 = vrot.slane %v1035, %v1042
          %v1045 = vunpack.c.l.s4 1934713408
          %v1046 = vunpack.c.0.s8 %v1045
          %v1047 = vlaneseq
          %v1048 = vshrl.u32 %v1047, 7
          %v1049 = vsub.s32 %v1046, %v1048
          %v1050 = vrot.slane %v1036, %v1049
          %v1051 = vcombine.low %v1027, %v1043
          %v1052 = vcombine.high %v1027, %v1043
          %v1053 = vcombine.low %v1034, %v1050
          %v1054 = vcombine.high %v1034, %v1050
          %1056 = vrot.lane.b32.xlu0 %v756, 112
          %v1057 = vpop.permute.xlu0 %1056
          %1059 = vrot.lane.b32.xlu0 %v756, 96
          %v1060 = vpop.permute.xlu0 %1059
          %1062 = vrot.lane.b32.xlu0 %v756, 80
          %v1063 = vpop.permute.xlu0 %1062
          %v1065 = vcombine.low %v756, %v1060
          %v1066 = vcombine.high %v756, %v1060
          %v1068 = vunpack.c.l.s4 1983009808
          %v1069 = vunpack.c.0.s8 %v1068
          %v1070 = vlaneseq
          %v1071 = vshrl.u32 %v1070, 7
          %v1072 = vsub.s32 %v1069, %v1071
          %v1073 = vrot.slane %v1065, %v1072
          %v1075 = vunpack.c.l.s4 1983009808
          %v1076 = vunpack.c.0.s8 %v1075
          %v1077 = vlaneseq
          %v1078 = vshrl.u32 %v1077, 7
          %v1079 = vsub.s32 %v1076, %v1078
          %v1080 = vrot.slane %v1066, %v1079
          %v1081 = vcombine.low %v1057, %v1063
          %v1082 = vcombine.high %v1057, %v1063
          %v1084 = vunpack.c.l.s4 1983009808
          %v1085 = vunpack.c.0.s8 %v1084
          %v1086 = vlaneseq
          %v1087 = vshrl.u32 %v1086, 7
          %v1088 = vsub.s32 %v1085, %v1087
          %v1089 = vrot.slane %v1081, %v1088
          %v1091 = vunpack.c.l.s4 1983009808
          %v1092 = vunpack.c.0.s8 %v1091
          %v1093 = vlaneseq
          %v1094 = vshrl.u32 %v1093, 7
          %v1095 = vsub.s32 %v1092, %v1094
          %v1096 = vrot.slane %v1082, %v1095
          %v1097 = vcombine.low %v1073, %v1089
          %v1098 = vcombine.high %v1073, %v1089
          %v1100 = vunpack.c.l.s4 1934713408
          %v1101 = vunpack.c.0.s8 %v1100
          %v1102 = vlaneseq
          %v1103 = vshrl.u32 %v1102, 7
          %v1104 = vsub.s32 %v1101, %v1103
          %v1105 = vrot.slane %v1097, %v1104
          %v1107 = vunpack.c.l.s4 1934713408
          %v1108 = vunpack.c.0.s8 %v1107
          %v1109 = vlaneseq
          %v1110 = vshrl.u32 %v1109, 7
          %v1111 = vsub.s32 %v1108, %v1110
          %v1112 = vrot.slane %v1098, %v1111
          %v1113 = vcombine.low %v1080, %v1096
          %v1114 = vcombine.high %v1080, %v1096
          %v1116 = vunpack.c.l.s4 1934713408
          %v1117 = vunpack.c.0.s8 %v1116
          %v1118 = vlaneseq
          %v1119 = vshrl.u32 %v1118, 7
          %v1120 = vsub.s32 %v1117, %v1119
          %v1121 = vrot.slane %v1113, %v1120
          %v1123 = vunpack.c.l.s4 1934713408
          %v1124 = vunpack.c.0.s8 %v1123
          %v1125 = vlaneseq
          %v1126 = vshrl.u32 %v1125, 7
          %v1127 = vsub.s32 %v1124, %v1126
          %v1128 = vrot.slane %v1114, %v1127
          %v1129 = vcombine.high %v1105, 0.0
          %v1130 = vcombine.high %v1112, 0.0
          %v1131 = vcombine.high %v1121, 0.0
          %v1132 = vcombine.high %v1128, 0.0
          %v1133 = vcombine.low %v1105, %v1112
          %v1135 = vunpack.c.l.s4 1983009808
          %v1136 = vunpack.c.0.s8 %v1135
          %v1137 = vlaneseq
          %v1138 = vshrl.u32 %v1137, 7
          %v1139 = vsub.s32 %v1136, %v1138
          %v1140 = vrot.slane %v1133, %v1139
          %v1141 = vcombine.low %v1129, %v1130
          %v1143 = vunpack.c.l.s4 1983009808
          %v1144 = vunpack.c.0.s8 %v1143
          %v1145 = vlaneseq
          %v1146 = vshrl.u32 %v1145, 7
          %v1147 = vsub.s32 %v1144, %v1146
          %v1148 = vrot.slane %v1141, %v1147
          %v1149 = vcombine.low %v1121, %v1128
          %v1151 = vunpack.c.l.s4 1983009808
          %v1152 = vunpack.c.0.s8 %v1151
          %v1153 = vlaneseq
          %v1154 = vshrl.u32 %v1153, 7
          %v1155 = vsub.s32 %v1152, %v1154
          %v1156 = vrot.slane %v1149, %v1155
          %v1157 = vcombine.low %v1131, %v1132
          %v1159 = vunpack.c.l.s4 1983009808
          %v1160 = vunpack.c.0.s8 %v1159
          %v1161 = vlaneseq
          %v1162 = vshrl.u32 %v1161, 7
          %v1163 = vsub.s32 %v1160, %v1162
          %v1164 = vrot.slane %v1157, %v1163
          %v1165 = vcombine.low %v1140, %v1148
          %v1166 = vcombine.high %v1140, %v1148
          %v1168 = vunpack.c.l.s4 1934713408
          %v1169 = vunpack.c.0.s8 %v1168
          %v1170 = vlaneseq
          %v1171 = vshrl.u32 %v1170, 7
          %v1172 = vsub.s32 %v1169, %v1171
          %v1173 = vrot.slane %v1165, %v1172
          %v1175 = vunpack.c.l.s4 1934713408
          %v1176 = vunpack.c.0.s8 %v1175
          %v1177 = vlaneseq
          %v1178 = vshrl.u32 %v1177, 7
          %v1179 = vsub.s32 %v1176, %v1178
          %v1180 = vrot.slane %v1166, %v1179
          %v1181 = vcombine.low %v1156, %v1164
          %v1182 = vcombine.high %v1156, %v1164
          %v1184 = vunpack.c.l.s4 1934713408
          %v1185 = vunpack.c.0.s8 %v1184
          %v1186 = vlaneseq
          %v1187 = vshrl.u32 %v1186, 7
          %v1188 = vsub.s32 %v1185, %v1187
          %v1189 = vrot.slane %v1181, %v1188
          %v1191 = vunpack.c.l.s4 1934713408
          %v1192 = vunpack.c.0.s8 %v1191
          %v1193 = vlaneseq
          %v1194 = vshrl.u32 %v1193, 7
          %v1195 = vsub.s32 %v1192, %v1194
          %v1196 = vrot.slane %v1182, %v1195
          %v1197 = vcombine.low %v1173, %v1189
          %v1198 = vcombine.high %v1173, %v1189
          %v1199 = vcombine.low %v1180, %v1196
          %v1200 = vcombine.high %v1180, %v1196
          %v1201 = vpack.c.bf16 %v903, %v903
          %v1202 = vpack.c.bf16 %v904, %v904
          %v1203 = vpack.c.bf16 %v905, %v905
          %v1204 = vpack.c.bf16 %v906, %v906
          %v1205 = vpack.c.bf16 %v1051, %v1051
          %v1206 = vpack.c.bf16 %v1052, %v1052
          %v1207 = vpack.c.bf16 %v1053, %v1053
          %v1208 = vpack.c.bf16 %v1054, %v1054
          %v1210 = vlaneseq
          %v1211 = vshrl.u32 %v1210, 7
          %v1212 = vsub.s32 0, %v1211
          %v1213 = vrot.slane %v760, %v1212
          %vm1215 = vcmask 130048
          %v1217 = vsel %vm1215, %v1201, 0
          %v1220 = vsel %vm1215, %v1205, 0
          %1222 = vmatprep.subr.bf16.mxu0 0
          %1223 = vmatpush1.bf16.xpose.msra.mxu0 %v1220
          %1224 = vmatprep.subr.bf16.mxu0 0
          %1225 = vmatpush1.bf16.xpose.msra.mxu0 0
          %1226 = vmatprep.subr.bf16.mxu0 0
          %1227 = vmatpush1.bf16.xpose.msra.mxu0 0
          %1228 = vmatprep.subr.bf16.mxu0 0
          %1229 = vmatpush1.bf16.xpose.msra.mxu0 0
          %1230 = vmatprep.subr.bf16.mxu0 0
          %1231 = vmatpush1.bf16.xpose.msra.mxu0 0
          %1232 = vmatprep.subr.bf16.mxu0 0
          %1233 = vmatpush1.bf16.xpose.msra.mxu0 0
          %1234 = vmatprep.subr.bf16.mxu0 0
          %1235 = vmatpush1.bf16.xpose.msra.mxu0 0
          %1236 = vmatprep.subr.bf16.mxu0 0
          %1237 = vmatpush1.bf16.xpose.msra.mxu0 0
          %1238 = vmatprep.subr.bf16.mxu0 0
          %1239 = vmatpush1.bf16.xpose.msra.mxu0 0
          %1240 = vmatprep.subr.bf16.mxu0 0
          %1241 = vmatpush1.bf16.xpose.msra.mxu0 0
          %1242 = vmatprep.subr.bf16.mxu0 0
          %1243 = vmatpush1.bf16.xpose.msra.mxu0 0
          %1244 = vmatprep.subr.bf16.mxu0 0
          %1245 = vmatpush1.bf16.xpose.msra.mxu0 0
          %1246 = vmatprep.subr.bf16.mxu0 0
          %1247 = vmatpush1.bf16.xpose.msra.mxu0 0
          %1248 = vmatprep.subr.bf16.mxu0 0
          %1249 = vmatpush1.bf16.xpose.msra.mxu0 0
          %1250 = vmatprep.subr.bf16.mxu0 0
          %1251 = vmatpush1.bf16.xpose.msra.mxu0 0
          %1252 = vmatprep.subr.bf16.mxu0 0
          %1253 = vmatpush1.bf16.xpose.msra.mxu0 0
          %1254 = vmatprep.mubr.bf16.mxu0 0
          %1255 = vmatmul.mubr.bf16.gmra.mrb[0].mxu0 %v1217
          %v1256 = vpop.f32.mrb[0].mxu0
          %v1257 = vadd.f32 %v1213, %v1256
          %v1258 = vpop.f32.mrb[0].mxu0
          %v1259 = vpop.f32.mrb[0].mxu0
          %v1260 = vpop.f32.mrb[0].mxu0
          %1261 = vdwg.mxu0
          %v1263 = vsel %vm1215, %v1202, 0
          %v1266 = vsel %vm1215, %v1206, 0
          %1268 = vmatprep.subr.bf16.mxu0 0
          %1269 = vmatpush1.bf16.xpose.msra.mxu0 %v1266
          %1270 = vmatprep.subr.bf16.mxu0 0
          %1271 = vmatpush1.bf16.xpose.msra.mxu0 0
          %1272 = vmatprep.subr.bf16.mxu0 0
          %1273 = vmatpush1.bf16.xpose.msra.mxu0 0
          %1274 = vmatprep.subr.bf16.mxu0 0
          %1275 = vmatpush1.bf16.xpose.msra.mxu0 0
          %1276 = vmatprep.subr.bf16.mxu0 0
          %1277 = vmatpush1.bf16.xpose.msra.mxu0 0
          %1278 = vmatprep.subr.bf16.mxu0 0
          %1279 = vmatpush1.bf16.xpose.msra.mxu0 0
          %1280 = vmatprep.subr.bf16.mxu0 0
          %1281 = vmatpush1.bf16.xpose.msra.mxu0 0
          %1282 = vmatprep.subr.bf16.mxu0 0
          %1283 = vmatpush1.bf16.xpose.msra.mxu0 0
          %1284 = vmatprep.subr.bf16.mxu0 0
          %1285 = vmatpush1.bf16.xpose.msra.mxu0 0
          %1286 = vmatprep.subr.bf16.mxu0 0
          %1287 = vmatpush1.bf16.xpose.msra.mxu0 0
          %1288 = vmatprep.subr.bf16.mxu0 0
          %1289 = vmatpush1.bf16.xpose.msra.mxu0 0
          %1290 = vmatprep.subr.bf16.mxu0 0
          %1291 = vmatpush1.bf16.xpose.msra.mxu0 0
          %1292 = vmatprep.subr.bf16.mxu0 0
          %1293 = vmatpush1.bf16.xpose.msra.mxu0 0
          %1294 = vmatprep.subr.bf16.mxu0 0
          %1295 = vmatpush1.bf16.xpose.msra.mxu0 0
          %1296 = vmatprep.subr.bf16.mxu0 0
          %1297 = vmatpush1.bf16.xpose.msra.mxu0 0
          %1298 = vmatprep.subr.bf16.mxu0 0
          %1299 = vmatpush1.bf16.xpose.msra.mxu0 0
          %1300 = vmatprep.mubr.bf16.mxu0 0
          %1301 = vmatmul.mubr.bf16.gmra.mrb[0].mxu0 %v1263
          %v1302 = vpop.f32.mrb[0].mxu0
          %v1303 = vadd.f32 %v1213, %v1302
          %v1304 = vpop.f32.mrb[0].mxu0
          %v1305 = vpop.f32.mrb[0].mxu0
          %v1306 = vpop.f32.mrb[0].mxu0
          %1307 = vdwg.mxu0
          %v1309 = vsel %vm1215, %v1203, 0
          %v1312 = vsel %vm1215, %v1207, 0
          %1314 = vmatprep.subr.bf16.mxu0 0
          %1315 = vmatpush1.bf16.xpose.msra.mxu0 %v1312
          %1316 = vmatprep.subr.bf16.mxu0 0
          %1317 = vmatpush1.bf16.xpose.msra.mxu0 0
          %1318 = vmatprep.subr.bf16.mxu0 0
          %1319 = vmatpush1.bf16.xpose.msra.mxu0 0
          %1320 = vmatprep.subr.bf16.mxu0 0
          %1321 = vmatpush1.bf16.xpose.msra.mxu0 0
          %1322 = vmatprep.subr.bf16.mxu0 0
          %1323 = vmatpush1.bf16.xpose.msra.mxu0 0
          %1324 = vmatprep.subr.bf16.mxu0 0
          %1325 = vmatpush1.bf16.xpose.msra.mxu0 0
          %1326 = vmatprep.subr.bf16.mxu0 0
          %1327 = vmatpush1.bf16.xpose.msra.mxu0 0
          %1328 = vmatprep.subr.bf16.mxu0 0
          %1329 = vmatpush1.bf16.xpose.msra.mxu0 0
          %1330 = vmatprep.subr.bf16.mxu0 0
          %1331 = vmatpush1.bf16.xpose.msra.mxu0 0
          %1332 = vmatprep.subr.bf16.mxu0 0
          %1333 = vmatpush1.bf16.xpose.msra.mxu0 0
          %1334 = vmatprep.subr.bf16.mxu0 0
          %1335 = vmatpush1.bf16.xpose.msra.mxu0 0
          %1336 = vmatprep.subr.bf16.mxu0 0
          %1337 = vmatpush1.bf16.xpose.msra.mxu0 0
          %1338 = vmatprep.subr.bf16.mxu0 0
          %1339 = vmatpush1.bf16.xpose.msra.mxu0 0
          %1340 = vmatprep.subr.bf16.mxu0 0
          %1341 = vmatpush1.bf16.xpose.msra.mxu0 0
          %1342 = vmatprep.subr.bf16.mxu0 0
          %1343 = vmatpush1.bf16.xpose.msra.mxu0 0
          %1344 = vmatprep.subr.bf16.mxu0 0
          %1345 = vmatpush1.bf16.xpose.msra.mxu0 0
          %1346 = vmatprep.mubr.bf16.mxu0 0
          %1347 = vmatmul.mubr.bf16.gmra.mrb[0].mxu0 %v1309
          %v1348 = vpop.f32.mrb[0].mxu0
          %v1349 = vadd.f32 %v1213, %v1348
          %v1350 = vpop.f32.mrb[0].mxu0
          %v1351 = vpop.f32.mrb[0].mxu0
          %v1352 = vpop.f32.mrb[0].mxu0
          %1353 = vdwg.mxu0
          %v1355 = vsel %vm1215, %v1204, 0
          %v1358 = vsel %vm1215, %v1208, 0
          %1360 = vmatprep.subr.bf16.mxu0 0
          %1361 = vmatpush1.bf16.xpose.msra.mxu0 %v1358
          %1362 = vmatprep.subr.bf16.mxu0 0
          %1363 = vmatpush1.bf16.xpose.msra.mxu0 0
          %1364 = vmatprep.subr.bf16.mxu0 0
          %1365 = vmatpush1.bf16.xpose.msra.mxu0 0
          %1366 = vmatprep.subr.bf16.mxu0 0
          %1367 = vmatpush1.bf16.xpose.msra.mxu0 0
          %1368 = vmatprep.subr.bf16.mxu0 0
          %1369 = vmatpush1.bf16.xpose.msra.mxu0 0
          %1370 = vmatprep.subr.bf16.mxu0 0
          %1371 = vmatpush1.bf16.xpose.msra.mxu0 0
          %1372 = vmatprep.subr.bf16.mxu0 0
          %1373 = vmatpush1.bf16.xpose.msra.mxu0 0
          %1374 = vmatprep.subr.bf16.mxu0 0
          %1375 = vmatpush1.bf16.xpose.msra.mxu0 0
          %1376 = vmatprep.subr.bf16.mxu0 0
          %1377 = vmatpush1.bf16.xpose.msra.mxu0 0
          %1378 = vmatprep.subr.bf16.mxu0 0
          %1379 = vmatpush1.bf16.xpose.msra.mxu0 0
          %1380 = vmatprep.subr.bf16.mxu0 0
          %1381 = vmatpush1.bf16.xpose.msra.mxu0 0
          %1382 = vmatprep.subr.bf16.mxu0 0
          %1383 = vmatpush1.bf16.xpose.msra.mxu0 0
          %1384 = vmatprep.subr.bf16.mxu0 0
          %1385 = vmatpush1.bf16.xpose.msra.mxu0 0
          %1386 = vmatprep.subr.bf16.mxu0 0
          %1387 = vmatpush1.bf16.xpose.msra.mxu0 0
          %1388 = vmatprep.subr.bf16.mxu0 0
          %1389 = vmatpush1.bf16.xpose.msra.mxu0 0
          %1390 = vmatprep.subr.bf16.mxu0 0
          %1391 = vmatpush1.bf16.xpose.msra.mxu0 0
          %1392 = vmatprep.mubr.bf16.mxu0 0
          %1393 = vmatmul.mubr.bf16.gmra.mrb[0].mxu0 %v1355
          %v1394 = vpop.f32.mrb[0].mxu0
          %v1395 = vadd.f32 %v1213, %v1394
          %v1396 = vpop.f32.mrb[0].mxu0
          %v1397 = vpop.f32.mrb[0].mxu0
          %v1398 = vpop.f32.mrb[0].mxu0
          %1399 = vdwg.mxu0
          %vm1400 = vcmask 64512
          %v1401 = vsel %vm1400, %v1257, -inf
          %1402 = vmax.xlane.f32.xlu0 %v1401
          %v1403 = vpop.xlane.xlu0 %1402
          %v1404 = vsel %vm1400, %v1303, -inf
          %1405 = vmax.xlane.f32.xlu0 %v1404
          %v1406 = vpop.xlane.xlu0 %1405
          %v1407 = vsel %vm1400, %v1349, -inf
          %1408 = vmax.xlane.f32.xlu0 %v1407
          %v1409 = vpop.xlane.xlu0 %1408
          %v1410 = vsel %vm1400, %v1395, -inf
          %1411 = vmax.xlane.f32.xlu0 %v1410
          %v1412 = vpop.xlane.xlu0 %1411
          %v1413 = vsub.f32 %v1257, %v1403
          %v1414 = vsub.f32 %v1303, %v1406
          %v1415 = vsub.f32 %v1349, %v1409
          %v1416 = vsub.f32 %v1395, %v1412
          %v1417 = vmul.f32 %v1413, 1.442695
          %v1418 = vpow.pop %v1417
          %v1419 = vmul.f32 %v1414, 1.442695
          %v1420 = vpow.pop %v1419
          %v1421 = vmul.f32 %v1415, 1.442695
          %v1422 = vpow.pop %v1421
          %v1423 = vmul.f32 %v1416, 1.442695
          %v1424 = vpow.pop %v1423
          %v1425 = vsel %vm1400, %v1418, 0.0
          %1426 = vadd.xlane.f32.xlu0 %v1425
          %v1427 = vpop.xlane.xlu0 %1426
          %v1428 = vsel %vm1400, %v1420, 0.0
          %1429 = vadd.xlane.f32.xlu0 %v1428
          %v1430 = vpop.xlane.xlu0 %1429
          %v1431 = vsel %vm1400, %v1422, 0.0
          %1432 = vadd.xlane.f32.xlu0 %v1431
          %v1433 = vpop.xlane.xlu0 %1432
          %v1434 = vsel %vm1400, %v1424, 0.0
          %1435 = vadd.xlane.f32.xlu0 %v1434
          %v1436 = vpop.xlane.xlu0 %1435
          %v1437 = vrcp.pop %v1427
          %v1438 = vrcp.pop %v1430
          %v1439 = vrcp.pop %v1433
          %v1440 = vrcp.pop %v1436
          %v1441 = vmul.f32 %v1418, %v1437
          %v1442 = vmul.f32 %v1420, %v1438
          %v1443 = vmul.f32 %v1422, %v1439
          %v1444 = vmul.f32 %v1424, %v1440
          %v1445 = vpack.c.bf16 %v1441, %v1441
          %v1446 = vpack.c.bf16 %v1442, %v1442
          %v1447 = vpack.c.bf16 %v1443, %v1443
          %v1448 = vpack.c.bf16 %v1444, %v1444
          %v1449 = vpack.c.bf16 %v1197, %v1197
          %v1450 = vpack.c.bf16 %v1198, %v1198
          %v1451 = vpack.c.bf16 %v1199, %v1199
          %v1452 = vpack.c.bf16 %v1200, %v1200
          %v1454 = vsel %vm1400, %v1445, 0
          %vm1456 = vcmask 1043456
          %v1458 = vsel %vm1456, %v1449, 0
          %1460 = vmatprep.subr.bf16.mxu0 0
          %1461 = vmatpush1.bf16.msra.mxu0 %v1458
          %1462 = vmatprep.subr.bf16.mxu0 0
          %1463 = vmatpush1.bf16.msra.mxu0 0
          %1464 = vmatprep.subr.bf16.mxu0 0
          %1465 = vmatpush1.bf16.msra.mxu0 0
          %1466 = vmatprep.subr.bf16.mxu0 0
          %1467 = vmatpush1.bf16.msra.mxu0 0
          %1468 = vmatprep.subr.bf16.mxu0 0
          %1469 = vmatpush1.bf16.msra.mxu0 0
          %1470 = vmatprep.subr.bf16.mxu0 0
          %1471 = vmatpush1.bf16.msra.mxu0 0
          %1472 = vmatprep.subr.bf16.mxu0 0
          %1473 = vmatpush1.bf16.msra.mxu0 0
          %1474 = vmatprep.subr.bf16.mxu0 0
          %1475 = vmatpush1.bf16.msra.mxu0 0
          %1476 = vmatprep.subr.bf16.mxu0 0
          %1477 = vmatpush1.bf16.msra.mxu0 0
          %1478 = vmatprep.subr.bf16.mxu0 0
          %1479 = vmatpush1.bf16.msra.mxu0 0
          %1480 = vmatprep.subr.bf16.mxu0 0
          %1481 = vmatpush1.bf16.msra.mxu0 0
          %1482 = vmatprep.subr.bf16.mxu0 0
          %1483 = vmatpush1.bf16.msra.mxu0 0
          %1484 = vmatprep.subr.bf16.mxu0 0
          %1485 = vmatpush1.bf16.msra.mxu0 0
          %1486 = vmatprep.subr.bf16.mxu0 0
          %1487 = vmatpush1.bf16.msra.mxu0 0
          %1488 = vmatprep.subr.bf16.mxu0 0
          %1489 = vmatpush1.bf16.msra.mxu0 0
          %1490 = vmatprep.subr.bf16.mxu0 0
          %1491 = vmatpush1.bf16.msra.mxu0 0
          %1492 = vmatprep.mubr.bf16.mxu0 0
          %1493 = vmatmul.mubr.bf16.gmra.mrb[0].mxu0 %v1454
          %v1494 = vpop.f32.mrb[0].mxu0
          %v1495 = vadd.f32 0.0, %v1494
          %v1496 = vpop.f32.mrb[0].mxu0
          %v1497 = vpop.f32.mrb[0].mxu0
          %v1498 = vpop.f32.mrb[0].mxu0
          %1499 = vdwg.mxu0
          %v1501 = vsel %vm1400, %v1446, 0
          %v1504 = vsel %vm1456, %v1450, 0
          %1506 = vmatprep.subr.bf16.mxu0 0
          %1507 = vmatpush1.bf16.msra.mxu0 %v1504
          %1508 = vmatprep.subr.bf16.mxu0 0
          %1509 = vmatpush1.bf16.msra.mxu0 0
          %1510 = vmatprep.subr.bf16.mxu0 0
          %1511 = vmatpush1.bf16.msra.mxu0 0
          %1512 = vmatprep.subr.bf16.mxu0 0
          %1513 = vmatpush1.bf16.msra.mxu0 0
          %1514 = vmatprep.subr.bf16.mxu0 0
          %1515 = vmatpush1.bf16.msra.mxu0 0
          %1516 = vmatprep.subr.bf16.mxu0 0
          %1517 = vmatpush1.bf16.msra.mxu0 0
          %1518 = vmatprep.subr.bf16.mxu0 0
          %1519 = vmatpush1.bf16.msra.mxu0 0
          %1520 = vmatprep.subr.bf16.mxu0 0
          %1521 = vmatpush1.bf16.msra.mxu0 0
          %1522 = vmatprep.subr.bf16.mxu0 0
          %1523 = vmatpush1.bf16.msra.mxu0 0
          %1524 = vmatprep.subr.bf16.mxu0 0
          %1525 = vmatpush1.bf16.msra.mxu0 0
          %1526 = vmatprep.subr.bf16.mxu0 0
          %1527 = vmatpush1.bf16.msra.mxu0 0
          %1528 = vmatprep.subr.bf16.mxu0 0
          %1529 = vmatpush1.bf16.msra.mxu0 0
          %1530 = vmatprep.subr.bf16.mxu0 0
          %1531 = vmatpush1.bf16.msra.mxu0 0
          %1532 = vmatprep.subr.bf16.mxu0 0
          %1533 = vmatpush1.bf16.msra.mxu0 0
          %1534 = vmatprep.subr.bf16.mxu0 0
          %1535 = vmatpush1.bf16.msra.mxu0 0
          %1536 = vmatprep.subr.bf16.mxu0 0
          %1537 = vmatpush1.bf16.msra.mxu0 0
          %1538 = vmatprep.mubr.bf16.mxu0 0
          %1539 = vmatmul.mubr.bf16.gmra.mrb[0].mxu0 %v1501
          %v1540 = vpop.f32.mrb[0].mxu0
          %v1541 = vadd.f32 0.0, %v1540
          %v1542 = vpop.f32.mrb[0].mxu0
          %v1543 = vpop.f32.mrb[0].mxu0
          %v1544 = vpop.f32.mrb[0].mxu0
          %1545 = vdwg.mxu0
          %v1547 = vsel %vm1400, %v1447, 0
          %v1550 = vsel %vm1456, %v1451, 0
          %1552 = vmatprep.subr.bf16.mxu0 0
          %1553 = vmatpush1.bf16.msra.mxu0 %v1550
          %1554 = vmatprep.subr.bf16.mxu0 0
          %1555 = vmatpush1.bf16.msra.mxu0 0
          %1556 = vmatprep.subr.bf16.mxu0 0
          %1557 = vmatpush1.bf16.msra.mxu0 0
          %1558 = vmatprep.subr.bf16.mxu0 0
          %1559 = vmatpush1.bf16.msra.mxu0 0
          %1560 = vmatprep.subr.bf16.mxu0 0
          %1561 = vmatpush1.bf16.msra.mxu0 0
          %1562 = vmatprep.subr.bf16.mxu0 0
          %1563 = vmatpush1.bf16.msra.mxu0 0
          %1564 = vmatprep.subr.bf16.mxu0 0
          %1565 = vmatpush1.bf16.msra.mxu0 0
          %1566 = vmatprep.subr.bf16.mxu0 0
          %1567 = vmatpush1.bf16.msra.mxu0 0
          %1568 = vmatprep.subr.bf16.mxu0 0
          %1569 = vmatpush1.bf16.msra.mxu0 0
          %1570 = vmatprep.subr.bf16.mxu0 0
          %1571 = vmatpush1.bf16.msra.mxu0 0
          %1572 = vmatprep.subr.bf16.mxu0 0
          %1573 = vmatpush1.bf16.msra.mxu0 0
          %1574 = vmatprep.subr.bf16.mxu0 0
          %1575 = vmatpush1.bf16.msra.mxu0 0
          %1576 = vmatprep.subr.bf16.mxu0 0
          %1577 = vmatpush1.bf16.msra.mxu0 0
          %1578 = vmatprep.subr.bf16.mxu0 0
          %1579 = vmatpush1.bf16.msra.mxu0 0
          %1580 = vmatprep.subr.bf16.mxu0 0
          %1581 = vmatpush1.bf16.msra.mxu0 0
          %1582 = vmatprep.subr.bf16.mxu0 0
          %1583 = vmatpush1.bf16.msra.mxu0 0
          %1584 = vmatprep.mubr.bf16.mxu0 0
          %1585 = vmatmul.mubr.bf16.gmra.mrb[0].mxu0 %v1547
          %v1586 = vpop.f32.mrb[0].mxu0
          %v1587 = vadd.f32 0.0, %v1586
          %v1588 = vpop.f32.mrb[0].mxu0
          %v1589 = vpop.f32.mrb[0].mxu0
          %v1590 = vpop.f32.mrb[0].mxu0
          %1591 = vdwg.mxu0
          %v1593 = vsel %vm1400, %v1448, 0
          %v1596 = vsel %vm1456, %v1452, 0
          %1598 = vmatprep.subr.bf16.mxu0 0
          %1599 = vmatpush1.bf16.msra.mxu0 %v1596
          %1600 = vmatprep.subr.bf16.mxu0 0
          %1601 = vmatpush1.bf16.msra.mxu0 0
          %1602 = vmatprep.subr.bf16.mxu0 0
          %1603 = vmatpush1.bf16.msra.mxu0 0
          %1604 = vmatprep.subr.bf16.mxu0 0
          %1605 = vmatpush1.bf16.msra.mxu0 0
          %1606 = vmatprep.subr.bf16.mxu0 0
          %1607 = vmatpush1.bf16.msra.mxu0 0
          %1608 = vmatprep.subr.bf16.mxu0 0
          %1609 = vmatpush1.bf16.msra.mxu0 0
          %1610 = vmatprep.subr.bf16.mxu0 0
          %1611 = vmatpush1.bf16.msra.mxu0 0
          %1612 = vmatprep.subr.bf16.mxu0 0
          %1613 = vmatpush1.bf16.msra.mxu0 0
          %1614 = vmatprep.subr.bf16.mxu0 0
          %1615 = vmatpush1.bf16.msra.mxu0 0
          %1616 = vmatprep.subr.bf16.mxu0 0
          %1617 = vmatpush1.bf16.msra.mxu0 0
          %1618 = vmatprep.subr.bf16.mxu0 0
          %1619 = vmatpush1.bf16.msra.mxu0 0
          %1620 = vmatprep.subr.bf16.mxu0 0
          %1621 = vmatpush1.bf16.msra.mxu0 0
          %1622 = vmatprep.subr.bf16.mxu0 0
          %1623 = vmatpush1.bf16.msra.mxu0 0
          %1624 = vmatprep.subr.bf16.mxu0 0
          %1625 = vmatpush1.bf16.msra.mxu0 0
          %1626 = vmatprep.subr.bf16.mxu0 0
          %1627 = vmatpush1.bf16.msra.mxu0 0
          %1628 = vmatprep.subr.bf16.mxu0 0
          %1629 = vmatpush1.bf16.msra.mxu0 0
          %1630 = vmatprep.mubr.bf16.mxu0 0
          %1631 = vmatmul.mubr.bf16.gmra.mrb[0].mxu0 %v1593
          %v1632 = vpop.f32.mrb[0].mxu0
          %v1633 = vadd.f32 0.0, %v1632
          %v1634 = vpop.f32.mrb[0].mxu0
          %v1635 = vpop.f32.mrb[0].mxu0
          %v1636 = vpop.f32.mrb[0].mxu0
          %1637 = vdwg.mxu0
          %v1638 = vcombine.low %v1495, %v1587
          %v1639 = vcombine.high %v1495, %v1587
          %v1641 = vunpack.c.l.s4 1983009808
          %v1642 = vunpack.c.0.s8 %v1641
          %v1643 = vlaneseq
          %v1644 = vshrl.u32 %v1643, 7
          %v1645 = vsub.s32 %v1642, %v1644
          %v1646 = vrot.slane %v1638, %v1645
          %v1648 = vunpack.c.l.s4 1983009808
          %v1649 = vunpack.c.0.s8 %v1648
          %v1650 = vlaneseq
          %v1651 = vshrl.u32 %v1650, 7
          %v1652 = vsub.s32 %v1649, %v1651
          %v1653 = vrot.slane %v1639, %v1652
          %v1654 = vcombine.low %v1541, %v1633
          %v1655 = vcombine.high %v1541, %v1633
          %v1657 = vunpack.c.l.s4 1983009808
          %v1658 = vunpack.c.0.s8 %v1657
          %v1659 = vlaneseq
          %v1660 = vshrl.u32 %v1659, 7
          %v1661 = vsub.s32 %v1658, %v1660
          %v1662 = vrot.slane %v1654, %v1661
          %v1664 = vunpack.c.l.s4 1983009808
          %v1665 = vunpack.c.0.s8 %v1664
          %v1666 = vlaneseq
          %v1667 = vshrl.u32 %v1666, 7
          %v1668 = vsub.s32 %v1665, %v1667
          %v1669 = vrot.slane %v1655, %v1668
          %v1670 = vcombine.low %v1646, %v1662
          %v1671 = vcombine.high %v1646, %v1662
          %v1673 = vunpack.c.l.s4 1934713408
          %v1674 = vunpack.c.0.s8 %v1673
          %v1675 = vlaneseq
          %v1676 = vshrl.u32 %v1675, 7
          %v1677 = vsub.s32 %v1674, %v1676
          %v1678 = vrot.slane %v1670, %v1677
          %v1680 = vunpack.c.l.s4 1934713408
          %v1681 = vunpack.c.0.s8 %v1680
          %v1682 = vlaneseq
          %v1683 = vshrl.u32 %v1682, 7
          %v1684 = vsub.s32 %v1681, %v1683
          %v1685 = vrot.slane %v1671, %v1684
          %v1686 = vcombine.low %v1653, %v1669
          %v1687 = vcombine.high %v1653, %v1669
          %v1689 = vunpack.c.l.s4 1934713408
          %v1690 = vunpack.c.0.s8 %v1689
          %v1691 = vlaneseq
          %v1692 = vshrl.u32 %v1691, 7
          %v1693 = vsub.s32 %v1690, %v1692
          %v1694 = vrot.slane %v1686, %v1693
          %v1696 = vunpack.c.l.s4 1934713408
          %v1697 = vunpack.c.0.s8 %v1696
          %v1698 = vlaneseq
          %v1699 = vshrl.u32 %v1698, 7
          %v1700 = vsub.s32 %v1697, %v1699
          %v1701 = vrot.slane %v1687, %v1700
          %v1702 = vcombine.high %v1678, 0.0
          %v1703 = vcombine.high %v1685, 0.0
          %v1704 = vcombine.high %v1694, 0.0
          %v1705 = vcombine.high %v1701, 0.0
          %v1706 = vcombine.low %v1678, %v1685
          %v1708 = vunpack.c.l.s4 1983009808
          %v1709 = vunpack.c.0.s8 %v1708
          %v1710 = vlaneseq
          %v1711 = vshrl.u32 %v1710, 7
          %v1712 = vsub.s32 %v1709, %v1711
          %v1713 = vrot.slane %v1706, %v1712
          %v1714 = vcombine.low %v1702, %v1703
          %v1716 = vunpack.c.l.s4 1983009808
          %v1717 = vunpack.c.0.s8 %v1716
          %v1718 = vlaneseq
          %v1719 = vshrl.u32 %v1718, 7
          %v1720 = vsub.s32 %v1717, %v1719
          %v1721 = vrot.slane %v1714, %v1720
          %v1722 = vcombine.low %v1694, %v1701
          %v1724 = vunpack.c.l.s4 1983009808
          %v1725 = vunpack.c.0.s8 %v1724
          %v1726 = vlaneseq
          %v1727 = vshrl.u32 %v1726, 7
          %v1728 = vsub.s32 %v1725, %v1727
          %v1729 = vrot.slane %v1722, %v1728
          %v1730 = vcombine.low %v1704, %v1705
          %v1732 = vunpack.c.l.s4 1983009808
          %v1733 = vunpack.c.0.s8 %v1732
          %v1734 = vlaneseq
          %v1735 = vshrl.u32 %v1734, 7
          %v1736 = vsub.s32 %v1733, %v1735
          %v1737 = vrot.slane %v1730, %v1736
          %v1738 = vcombine.low %v1713, %v1721
          %v1739 = vcombine.high %v1713, %v1721
          %v1741 = vunpack.c.l.s4 1934713408
          %v1742 = vunpack.c.0.s8 %v1741
          %v1743 = vlaneseq
          %v1744 = vshrl.u32 %v1743, 7
          %v1745 = vsub.s32 %v1742, %v1744
          %v1746 = vrot.slane %v1738, %v1745
          %v1748 = vunpack.c.l.s4 1934713408
          %v1749 = vunpack.c.0.s8 %v1748
          %v1750 = vlaneseq
          %v1751 = vshrl.u32 %v1750, 7
          %v1752 = vsub.s32 %v1749, %v1751
          %v1753 = vrot.slane %v1739, %v1752
          %v1754 = vcombine.low %v1729, %v1737
          %v1755 = vcombine.high %v1729, %v1737
          %v1757 = vunpack.c.l.s4 1934713408
          %v1758 = vunpack.c.0.s8 %v1757
          %v1759 = vlaneseq
          %v1760 = vshrl.u32 %v1759, 7
          %v1761 = vsub.s32 %v1758, %v1760
          %v1762 = vrot.slane %v1754, %v1761
          %v1764 = vunpack.c.l.s4 1934713408
          %v1765 = vunpack.c.0.s8 %v1764
          %v1766 = vlaneseq
          %v1767 = vshrl.u32 %v1766, 7
          %v1768 = vsub.s32 %v1765, %v1767
          %v1769 = vrot.slane %v1755, %v1768
          %v1770 = vcombine.low %v1746, %v1762
          %v1771 = vcombine.high %v1746, %v1762
          %v1772 = vcombine.low %v1753, %v1769
          %v1773 = vcombine.high %v1753, %v1769
          %1775 = vrot.lane.b32.xlu0 %v1771, 16
          %v1776 = vpop.permute.xlu0 %1775
          %1779 = vrot.lane.b32.xlu0 %v1772, 32
          %v1780 = vpop.permute.xlu0 %1779
          %1783 = vrot.lane.b32.xlu0 %v1773, 48
          %v1784 = vpop.permute.xlu0 %1783
          %v1786 = vsel %vm1215, %v1770, %v1776
          %vm1787 = vcmask 261120
          %v1788 = vsel %vm1787, %v1786, %v1780
          %vm1789 = vcmask 392192
          %v1790 = vsel %vm1789, %v1788, %v1784
          %v1791 = vpack.c.bf16 %v1790, %v1790
          %v1792 = vld [vmem:[%s6] sm:$0xf]
          %v1793 = vld [vmem:[%s6 + $0x4] sm:$0xf]
          %v1794 = vld [vmem:[%s6 + $0x8] sm:$0xf]
          %v1795 = vld [vmem:[%s6 + $0xc] sm:$0xf]
          %v1796 = vld [vmem:[%s6 + $0x10] sm:$0xf]
          %v1797 = vld [vmem:[%s6 + $0x14] sm:$0xf]
          %v1798 = vld [vmem:[%s6 + $0x18] sm:$0xf]
          %v1799 = vld [vmem:[%s6 + $0x1c] sm:$0xf]
          %v1800 = vld [vmem:[%s7] sm:$0x1]
          %v1802 = vlaneseq
          %v1803 = vshrl.u32 %v1802, 7
          %v1804 = vsub.s32 0, %v1803
          %v1805 = vrot.slane %v1800, %v1804
          %v1815 = vunpack.c.l.b16 %v1792
          %v1816 = vunpack.c.l.b16 %v1793
          %v1817 = vunpack.c.l.b16 %v1794
          %v1818 = vunpack.c.l.b16 %v1795
          %v1819 = vunpack.c.l.b16 %v1796
          %v1820 = vunpack.c.l.b16 %v1797
          %v1821 = vunpack.c.l.b16 %v1798
          %v1822 = vunpack.c.l.b16 %v1799
          %v1823 = vpack.c.b16 %v1816, %v1815
          %v1824 = vpack.c.b16 %v1818, %v1817
          %v1825 = vpack.c.b16 %v1820, %v1819
          %v1826 = vpack.c.b16 %v1822, %v1821
          %v1832 = vsel %vm626, %v1791, 0
          %1834 = vmatprep.subr.bf16.mxu0 0
          %1835 = vmatpush1.bf16.msra.mxu0 %v1823
          %1836 = vmatprep.subr.bf16.mxu0 0
          %1837 = vmatpush1.bf16.msra.mxu0 %v1824
          %1838 = vmatprep.subr.bf16.mxu0 0
          %1839 = vmatpush1.bf16.msra.mxu0 %v1825
          %1840 = vmatprep.subr.bf16.mxu0 0
          %1841 = vmatpush1.bf16.msra.mxu0 %v1826
          %1842 = vmatprep.subr.bf16.mxu0 0
          %1843 = vmatpush1.bf16.msra.mxu0 0
          %1844 = vmatprep.subr.bf16.mxu0 0
          %1845 = vmatpush1.bf16.msra.mxu0 0
          %1846 = vmatprep.subr.bf16.mxu0 0
          %1847 = vmatpush1.bf16.msra.mxu0 0
          %1848 = vmatprep.subr.bf16.mxu0 0
          %1849 = vmatpush1.bf16.msra.mxu0 0
          %1850 = vmatprep.subr.bf16.mxu0 0
          %1851 = vmatpush1.bf16.msra.mxu0 0
          %1852 = vmatprep.subr.bf16.mxu0 0
          %1853 = vmatpush1.bf16.msra.mxu0 0
          %1854 = vmatprep.subr.bf16.mxu0 0
          %1855 = vmatpush1.bf16.msra.mxu0 0
          %1856 = vmatprep.subr.bf16.mxu0 0
          %1857 = vmatpush1.bf16.msra.mxu0 0
          %1858 = vmatprep.subr.bf16.mxu0 0
          %1859 = vmatpush1.bf16.msra.mxu0 0
          %1860 = vmatprep.subr.bf16.mxu0 0
          %1861 = vmatpush1.bf16.msra.mxu0 0
          %1862 = vmatprep.subr.bf16.mxu0 0
          %1863 = vmatpush1.bf16.msra.mxu0 0
          %1864 = vmatprep.subr.bf16.mxu0 0
          %1865 = vmatpush1.bf16.msra.mxu0 0
          %1866 = vmatprep.mubr.bf16.mxu0 0
          %1867 = vmatmul.mubr.bf16.gmra.mrb[0].mxu0 %v1832
          %v1868 = vpop.f32.mrb[0].mxu0
          %v1869 = vadd.f32 %v1805, %v1868
          %v1870 = vpop.f32.mrb[0].mxu0
          %v1871 = vpop.f32.mrb[0].mxu0
          %v1872 = vpop.f32.mrb[0].mxu0
          %1873 = vdwg.mxu0
          %v1874 = vadd.f32 %v623, %v1869
          %1875 = vst.msk [vmem:[#allocation2] sm:$0xff] %vm626, %v1874
          %v1876 = vld [vmem:[%s8] sm:$0x1]
          %v1877 = vld [vmem:[%s9] sm:$0x1]
          %v1878 = vsel %vm626, %v1874, 0.0
          %1879 = vadd.xlane.f32.xlu0 %v1878
          %v1880 = vpop.xlane.xlu0 %1879
          %v1881 = vmul.f32 %v1880, %v630
          %v1882 = vsub.f32 %v1874, %v1881
          %v1883 = vmul.f32 %v1882, %v1882
          %v1884 = vsel %vm626, %v1883, 0.0
          %1885 = vadd.xlane.f32.xlu0 %v1884
          %v1886 = vpop.xlane.xlu0 %1885
          %v1887 = vmul.f32 %v1886, %v630
          %v1888 = vadd.f32 %v1887, 1e-05
          %v1889 = vrsqrt.pop %v1888
          %v1890 = vmul.f32 %v1882, %v1889
          %v1892 = vlaneseq
          %v1893 = vshrl.u32 %v1892, 7
          %v1894 = vsub.s32 0, %v1893
          %v1895 = vrot.slane %v1876, %v1894
          %v1897 = vmul.f32 %v1890, %v1895
          %v1899 = vlaneseq
          %v1900 = vshrl.u32 %v1899, 7
          %v1901 = vsub.s32 0, %v1900
          %v1902 = vrot.slane %v1877, %v1901
          %v1904 = vadd.f32 %v1897, %v1902
          %v1905 = vpack.c.bf16 %v1904, %v1904
          %vm1906 = vcmask 519168
          %1907 = vst.msk [vmem:[#allocation3] sm:$0xf] %vm1906, %v1905
          %1908 = vst.msk [vmem:[#allocation4] sm:$0xff] %vm626, 0.0
        $region121: #{transformer_forward.3} parent=112 // pred_fallthru
          _
        %v1909 = vld [vmem:[#allocation3] sm:$0xf]
        %v1910 = vld [vmem:[%s540] sm:$0xf]
        %v1911 = vld [vmem:[%s540 + $0x4] sm:$0xf]
        %v1912 = vld [vmem:[%s540 + $0x8] sm:$0xf]
        %v1913 = vld [vmem:[%s540 + $0xc] sm:$0xf]
        %v1914 = vld [vmem:[%s540 + $0x10] sm:$0xf]
        %v1915 = vld [vmem:[%s540 + $0x14] sm:$0xf]
        %v1916 = vld [vmem:[%s540 + $0x18] sm:$0xf]
        %v1917 = vld [vmem:[%s540 + $0x1c] sm:$0xf]
        %v1918 = vld [vmem:[%s607] sm:$0x1]
        %v1920 = vlaneseq
        %v1921 = vshrl.u32 %v1920, 7
        %v1922 = vsub.s32 0, %v1921
        %v1923 = vrot.slane %v1918, %v1922
        %v1933 = vunpack.c.l.b16 %v1910
        %v1934 = vunpack.c.l.b16 %v1911
        %v1935 = vunpack.c.l.b16 %v1912
        %v1936 = vunpack.c.l.b16 %v1913
        %v1937 = vunpack.c.l.b16 %v1914
        %v1938 = vunpack.c.l.b16 %v1915
        %v1939 = vunpack.c.l.b16 %v1916
        %v1940 = vunpack.c.l.b16 %v1917
        %v1941 = vpack.c.b16 %v1934, %v1933
        %v1942 = vpack.c.b16 %v1936, %v1935
        %v1943 = vpack.c.b16 %v1938, %v1937
        %v1944 = vpack.c.b16 %v1940, %v1939
        %vm1949 = vcmask 523264
        %v1951 = vsel %vm1949, %v1909, 0
        %1953 = vmatprep.subr.bf16.mxu0 0
        %1954 = vmatpush1.bf16.msra.mxu0 %v1941
        %1955 = vmatprep.subr.bf16.mxu0 0
        %1956 = vmatpush1.bf16.msra.mxu0 %v1942
        %1957 = vmatprep.subr.bf16.mxu0 0
        %1958 = vmatpush1.bf16.msra.mxu0 %v1943
        %1959 = vmatprep.subr.bf16.mxu0 0
        %1960 = vmatpush1.bf16.msra.mxu0 %v1944
        %1961 = vmatprep.subr.bf16.mxu0 0
        %1962 = vmatpush1.bf16.msra.mxu0 0
        %1963 = vmatprep.subr.bf16.mxu0 0
        %1964 = vmatpush1.bf16.msra.mxu0 0
        %1965 = vmatprep.subr.bf16.mxu0 0
        %1966 = vmatpush1.bf16.msra.mxu0 0
        %1967 = vmatprep.subr.bf16.mxu0 0
        %1968 = vmatpush1.bf16.msra.mxu0 0
        %1969 = vmatprep.subr.bf16.mxu0 0
        %1970 = vmatpush1.bf16.msra.mxu0 0
        %1971 = vmatprep.subr.bf16.mxu0 0
        %1972 = vmatpush1.bf16.msra.mxu0 0
        %1973 = vmatprep.subr.bf16.mxu0 0
        %1974 = vmatpush1.bf16.msra.mxu0 0
        %1975 = vmatprep.subr.bf16.mxu0 0
        %1976 = vmatpush1.bf16.msra.mxu0 0
        %1977 = vmatprep.subr.bf16.mxu0 0
        %1978 = vmatpush1.bf16.msra.mxu0 0
        %1979 = vmatprep.subr.bf16.mxu0 0
        %1980 = vmatpush1.bf16.msra.mxu0 0
        %1981 = vmatprep.subr.bf16.mxu0 0
        %1982 = vmatpush1.bf16.msra.mxu0 0
        %1983 = vmatprep.subr.bf16.mxu0 0
        %1984 = vmatpush1.bf16.msra.mxu0 0
        %1985 = vmatprep.mubr.bf16.mxu0 0
        %1986 = vmatmul.mubr.bf16.gmra.mrb[0].mxu0 %v1951
        %v1987 = vpop.f32.mrb[0].mxu0
        %v1988 = vadd.f32 %v1923, %v1987
        %v1989 = vpop.f32.mrb[0].mxu0
        %v1990 = vpop.f32.mrb[0].mxu0
        %v1991 = vpop.f32.mrb[0].mxu0
        %1992 = vdwg.mxu0
        %v1993 = vpack.c.bf16 %v1988, %v1988
        %v1994 = vmul.bf16 %v1993, 1056980736
        %v1995 = vmul.bf16 %v1993, 1027030327
        %v1996 = vmul.bf16 %v1995, %v1993
        %v1997 = vmul.bf16 %v1996, %v1993
        %v1998 = vadd.bf16 %v1993, %v1997
        %v1999 = vmul.bf16 %v1998, 1061961548
        %v2000 = vtanh.bf16.pop %v1999
        %v2001 = vadd.bf16 %v2000, 1065369472
        %v2002 = vmul.bf16 %v1994, %v2001
        %v2003 = vld [vmem:[#allocation4] sm:$0xff]
        %v2004 = vld [vmem:[%s612] sm:$0xf]
        %v2005 = vld [vmem:[%s612 + $0x4] sm:$0xf]
        %v2006 = vld [vmem:[%s612 + $0x8] sm:$0xf]
        %v2007 = vld [vmem:[%s612 + $0xc] sm:$0xf]
        %v2008 = vld [vmem:[%s612 + $0x10] sm:$0xf]
        %v2009 = vld [vmem:[%s612 + $0x14] sm:$0xf]
        %v2010 = vld [vmem:[%s612 + $0x18] sm:$0xf]
        %v2011 = vld [vmem:[%s612 + $0x1c] sm:$0xf]
        %v2012 = vld [vmem:[%s612 + $0x20] sm:$0xf]
        %v2013 = vld [vmem:[%s612 + $0x24] sm:$0xf]
        %v2014 = vld [vmem:[%s612 + $0x28] sm:$0xf]
        %v2015 = vld [vmem:[%s612 + $0x2c] sm:$0xf]
        %v2016 = vld [vmem:[%s612 + $0x30] sm:$0xf]
        %v2017 = vld [vmem:[%s612 + $0x34] sm:$0xf]
        %v2018 = vld [vmem:[%s612 + $0x38] sm:$0xf]
        %v2019 = vld [vmem:[%s612 + $0x3c] sm:$0xf]
        %v2036 = vunpack.c.l.b16 %v2004
        %v2037 = vunpack.c.l.b16 %v2005
        %v2038 = vunpack.c.l.b16 %v2006
        %v2039 = vunpack.c.l.b16 %v2007
        %v2040 = vunpack.c.l.b16 %v2008
        %v2041 = vunpack.c.l.b16 %v2009
        %v2042 = vunpack.c.l.b16 %v2010
        %v2043 = vunpack.c.l.b16 %v2011
        %v2044 = vunpack.c.l.b16 %v2012
        %v2045 = vunpack.c.l.b16 %v2013
        %v2046 = vunpack.c.l.b16 %v2014
        %v2047 = vunpack.c.l.b16 %v2015
        %v2048 = vunpack.c.l.b16 %v2016
        %v2049 = vunpack.c.l.b16 %v2017
        %v2050 = vunpack.c.l.b16 %v2018
        %v2051 = vunpack.c.l.b16 %v2019
        %v2052 = vpack.c.b16 %v2037, %v2036
        %v2053 = vpack.c.b16 %v2039, %v2038
        %v2054 = vpack.c.b16 %v2041, %v2040
        %v2055 = vpack.c.b16 %v2043, %v2042
        %v2056 = vpack.c.b16 %v2045, %v2044
        %v2057 = vpack.c.b16 %v2047, %v2046
        %v2058 = vpack.c.b16 %v2049, %v2048
        %v2059 = vpack.c.b16 %v2051, %v2050
        %2068 = vmatprep.subr.bf16.mxu0 0
        %2069 = vmatpush1.bf16.msra.mxu0 %v2052
        %2070 = vmatprep.subr.bf16.mxu0 0
        %2071 = vmatpush1.bf16.msra.mxu0 %v2053
        %2072 = vmatprep.subr.bf16.mxu0 0
        %2073 = vmatpush1.bf16.msra.mxu0 %v2054
        %2074 = vmatprep.subr.bf16.mxu0 0
        %2075 = vmatpush1.bf16.msra.mxu0 %v2055
        %2076 = vmatprep.subr.bf16.mxu0 0
        %2077 = vmatpush1.bf16.msra.mxu0 %v2056
        %2078 = vmatprep.subr.bf16.mxu0 0
        %2079 = vmatpush1.bf16.msra.mxu0 %v2057
        %2080 = vmatprep.subr.bf16.mxu0 0
        %2081 = vmatpush1.bf16.msra.mxu0 %v2058
        %2082 = vmatprep.subr.bf16.mxu0 0
        %2083 = vmatpush1.bf16.msra.mxu0 %v2059
        %2084 = vmatprep.subr.bf16.mxu0 0
        %2085 = vmatpush1.bf16.msra.mxu0 0
        %2086 = vmatprep.subr.bf16.mxu0 0
        %2087 = vmatpush1.bf16.msra.mxu0 0
        %2088 = vmatprep.subr.bf16.mxu0 0
        %2089 = vmatpush1.bf16.msra.mxu0 0
        %2090 = vmatprep.subr.bf16.mxu0 0
        %2091 = vmatpush1.bf16.msra.mxu0 0
        %2092 = vmatprep.subr.bf16.mxu0 0
        %2093 = vmatpush1.bf16.msra.mxu0 0
        %2094 = vmatprep.subr.bf16.mxu0 0
        %2095 = vmatpush1.bf16.msra.mxu0 0
        %2096 = vmatprep.subr.bf16.mxu0 0
        %2097 = vmatpush1.bf16.msra.mxu0 0
        %2098 = vmatprep.subr.bf16.mxu0 0
        %2099 = vmatpush1.bf16.msra.mxu0 0
        %2100 = vmatprep.mubr.bf16.mxu0 0
        %2101 = vmatmul.mubr.bf16.gmra.mrb[0].mxu0 %v2002
        %v2102 = vpop.f32.mrb[0].mxu0
        %v2103 = vadd.f32 0.0, %v2102
        %v2104 = vpop.f32.mrb[0].mxu0
        %v2105 = vpop.f32.mrb[0].mxu0
        %v2106 = vpop.f32.mrb[0].mxu0
        %2107 = vdwg.mxu0
        %v2108 = vadd.f32 %v2003, %v2103
        %2109 = vst.msk [vmem:[#allocation4] sm:$0xff] %vm1949, %v2108
        %p2110 = scmp.eq.s32.totalorder %s33, 1
        // Predicated region
        $region122: #{transformer_forward.3} parent=112 // pred_check
          %p2111 = pneg %p2110
        $region123: #{transformer_forward.3} parent=112 // pred_check_branch
          %2113 = sbr.rel (%p2111) target = $region125
        $region124: #{transformer_forward.3} parent=112 // pred_region
          %v2114 = vld [vmem:[#allocation2] sm:$0xff]
          %v2115 = vld [vmem:[#allocation4] sm:$0xff]
          %v2116 = vadd.f32 %v2114, %v2115
          %v2117 = vld [vmem:[%s13] sm:$0x1]
          %v2119 = vlaneseq
          %v2120 = vshrl.u32 %v2119, 7
          %v2121 = vsub.s32 0, %v2120
          %v2122 = vrot.slane %v2117, %v2121
          %v2124 = vadd.f32 %v2116, %v2122
          %2125 = vst.msk [vmem:[%s597] sm:$0xff] %vm1949, %v2124
        $region125: #{transformer_forward.3} parent=112 // pred_fallthru
          _
        %s2126 = sand.u32 %s367, 1
        %s2127 = scalar_lea.sflag [#allocation7], %s2126
        %s2128 = sand.u32 %s367, 1
        %s2129 = smul.addr %s2128, 8
        %s2130 = scalar_lea.vmem [#allocation6], %s2129
        // Predicated region
        $region126: #{transformer_forward.3} parent=112 // pred_check
          %p2131 = pneg %p377
        $region127: #{transformer_forward.3} parent=112 // pred_check_branch
          %2133 = sbr.rel (%p2131) target = $region129
        $region128: #{transformer_forward.3} parent=112 // pred_region
          %s2135 = ssub.s32 128, 128
          %2136 = vsyncadd %s2127, %s2135
          %s2137 = smul.addr %s32, 128
          %s2138 = scalar_lea.hbm %s14, %s2137
          %s2140 = sshll.u32 %s2130, 4
          %s2141 = int_to_ptr.vmem [resolvable:$true] %s2140
          %2143 = dma.vmem_to_hbm [thread:$0]  %s2141, 128, %s2138, %s2127
        $region129: #{transformer_forward.3} parent=112 // pred_fallthru
          _
      $region113: #{transformer_forward.3} parent=5 // pred_fallthru
        _
      %p2144 = scmp.le.s32.totalorder 2, %s23
      // Predicated region
      $region130: #{transformer_forward.3} parent=5 // pred_check
        %p2145 = pneg %p2144
      $region131: #{transformer_forward.3} parent=5 // pred_check_branch
        %2147 = sbr.rel (%p2145) target = $region133
      $region132: #{transformer_forward.3} parent=5 // pred_region
        %s2148 = ssub.s32 %s23, 2
        // Predicated region
        $region134: #{transformer_forward.3} parent=132 // pred_check
          %p2149 = pneg %p383
        $region135: #{transformer_forward.3} parent=132 // pred_check_branch
          %2151 = sbr.rel (%p2149) target = $region137
        $region136: #{transformer_forward.3} parent=132 // pred_region
          %s2152 = sand.u32 %s368, 1
          %s2153 = scalar_lea.sflag [#allocation7], %s2152
          %s2154 = sand.u32 %s368, 1
          %s2155 = smul.addr %s2154, 8
          %s2156 = scalar_lea.vmem [#allocation6], %s2155
          %2157 = dma.done %s2153, 128
        $region137: #{transformer_forward.3} parent=132 // pred_fallthru
          _
      $region133: #{transformer_forward.3} parent=5 // pred_fallthru
        _
    $region6: #{transformer_forward.3} parent=1 // loop_footer
      %s27 = sadd.s32 1, %s23
    $region7: #{transformer_forward.3} parent=1 // loop_footer_branch
      %22 = sbr.rel target = $region3
    $region8: #{transformer_forward.3} parent=1 // loop_exit
      _
    %2158 = vsyncpa [#allocation7], 1
    %s2159 = scalar_lea.sflag [#allocation7], 1
    %2160 = vsyncpa %s2159, 1

// kernel: transformer_forward.2
$region0: #{transformer_forward.2}
  #allocation0 [shape = 'u32[]', space=smem, size = 0x4, offset = 0x4, fixed_abs, tag = 'smem constant byte address 0x4 - core index']
  #allocation1 [shape = 'u32[144,128]{1,0:T(1,128)}', space=vmem, size = 0x12000, scoped, tag = 'internal scratch']
  #allocation2 [shape = 'f32[8,64]{1,0:T(8,128)}', space=vmem, size = 0x1000, scoped, tag = 'scratch operand']
  #allocation3 [shape = 'bf16[8,64]{1,0:T(8,128)(2,1)}', space=vmem, size = 0x800, scoped, tag = 'scratch operand']
  #allocation4 [shape = 'f32[8,64]{1,0:T(8,128)}', space=vmem, size = 0x1000, scoped, tag = 'scratch operand']
  %s0 = inlined_call_operand.vmem [shape: f32[2,1,8], index: 0, kind: input, shape index: {}]
  %s1 = inlined_call_operand.vmem [shape: f32[2,8,64], index: 1, kind: input, shape index: {}]
  %s2 = inlined_call_operand.vmem [shape: f32[1,64], index: 2, kind: input, shape index: {}]
  %s3 = inlined_call_operand.vmem [shape: f32[1,64], index: 3, kind: input, shape index: {}]
  %s4 = inlined_call_operand.vmem [shape: bf16[64,192], index: 4, kind: input, shape index: {}]
  %s5 = inlined_call_operand.vmem [shape: f32[1,192], index: 5, kind: input, shape index: {}]
  %s6 = inlined_call_operand.vmem [shape: bf16[64,64], index: 6, kind: input, shape index: {}]
  %s7 = inlined_call_operand.vmem [shape: f32[1,64], index: 7, kind: input, shape index: {}]
  %s8 = inlined_call_operand.vmem [shape: f32[1,64], index: 8, kind: input, shape index: {}]
  %s9 = inlined_call_operand.vmem [shape: f32[1,64], index: 9, kind: input, shape index: {}]
  %s10 = inlined_call_operand.vmem [shape: bf16[64,256], index: 10, kind: input, shape index: {}]
  %s11 = inlined_call_operand.vmem [shape: f32[1,256], index: 11, kind: input, shape index: {}]
  %s12 = inlined_call_operand.vmem [shape: bf16[256,64], index: 12, kind: input, shape index: {}]
  %s13 = inlined_call_operand.vmem [shape: f32[1,64], index: 13, kind: input, shape index: {}]
  %s14 = inlined_call_operand.vmem [shape: f32[2,8,64], index: 14, kind: output, shape index: {}]
  %s15 = sld [smem:[#allocation0]]
  $region138: #{transformer_forward.2} parent=0
    _
  %s17 = ssub.s32 1, %s15
  %s18 = scalar_select 0, %s17, %s15
  $region1: #{transformer_forward.2} parent=0
    #allocation5 [shape = 'u8[32768]{0}', space=vmem, size = 0x8000, scoped, tag = 'input window, operand 10']
    loop: start=0, step=1, limit=6
    $region2: #{transformer_forward.2} parent=1 // loop_pre_header
      _
    $region3: #{transformer_forward.2} parent=1 // loop_header
      %s20 = sphi 0, %s24
      %p21 = scmp.ge.s32.totalorder %s20, 6
      %s27 = sphi 0, %s39
      %s28 = sphi 0, %s35
      %s29 = sphi 0, %s27
      %s30 = sphi 0, %s28
      %s31 = sphi 0, %s29
      %s32 = sphi 0, %s30
      %s42 = sphi 0, %s44
      %s45 = sphi 0, %s42
      %s46 = sphi 0, %s45
      %s62 = sphi 0, %s46
      %s68 = sphi 0, %s70
      %s71 = sphi 0, %s68
      %s72 = sphi 0, %s71
      %s88 = sphi 0, %s72
      %s92 = sphi 0, %s92
      %s94 = sphi 0, %s92
      %s95 = sphi 0, %s94
      %s109 = sphi 0, %s95
      %s113 = sphi 0, %s113
      %s115 = sphi 0, %s113
      %s116 = sphi 0, %s115
      %s130 = sphi 0, %s116
      %s134 = sphi 0, %s134
      %s136 = sphi 0, %s134
      %s137 = sphi 0, %s136
      %s151 = sphi 0, %s137
      %s155 = sphi 0, %s155
      %s157 = sphi 0, %s155
      %s158 = sphi 0, %s157
      %s172 = sphi 0, %s158
      %s176 = sphi 0, %s176
      %s178 = sphi 0, %s176
      %s179 = sphi 0, %s178
      %s193 = sphi 0, %s179
      %s197 = sphi 0, %s197
      %s199 = sphi 0, %s197
      %s200 = sphi 0, %s199
      %s214 = sphi 0, %s200
      %s218 = sphi 0, %s218
      %s220 = sphi 0, %s218
      %s221 = sphi 0, %s220
      %s235 = sphi 0, %s221
      %s239 = sphi 0, %s239
      %s241 = sphi 0, %s239
      %s242 = sphi 0, %s241
      %s256 = sphi 0, %s242
      %s262 = sphi 0, %s264
      %s265 = sphi 0, %s262
      %s266 = sphi 0, %s265
      %s282 = sphi 0, %s266
      %s288 = sphi 0, %s290
      %s291 = sphi 0, %s288
      %s292 = sphi 0, %s291
      %s308 = sphi 0, %s292
      %s314 = sphi 0, %s316
      %s317 = sphi 0, %s314
      %s318 = sphi 0, %s317
      %s334 = sphi 0, %s318
      %s338 = sphi 0, %s338
      %s340 = sphi 0, %s338
      %s341 = sphi 0, %s340
      %s355 = sphi 0, %s341
      %s361 = sphi 0, %s363
      %s364 = sphi 0, %s361
      %s365 = sphi 0, %s364
      %s381 = sphi 0, %s365
    $region4: #{transformer_forward.2} parent=1 // loop_header_branch
      %23 = sbr.rel (%p21) target = $region8
    $region5: #{transformer_forward.2} parent=1 // loop_body
      %s25 = ssub.s32 %s20, 1
      %s26 = ssub.s32 %s20, 2
      %s33 = sadd.s32 1, %s28
      %p34 = scmp.ge.s32.totalorder %s33, 2
      %s35 = scalar_select %p34, 0, %s33
      %s36 = sadd.s32 1, %s27
      %s37 = scalar_select %p34, %s36, %s27
      %p38 = scmp.ge.s32.totalorder %s37, 2
      %s39 = scalar_select %p38, 0, %s37
      %s40 = ssub.s32 %s27, %s39
      %p41 = scmp.eq.s32.totalorder %s40, 0
      %s43 = sadd.s32 %s42, 1
      %s44 = scalar_select %p41, %s42, %s43
      %p47 = pneg %p41
      %p48 = scmp.eq.s32.totalorder %s20, 3
      %p49 = por %p47, %p48
      %p50 = scmp.ne.s32.totalorder %s42, %s45
      %p51 = scmp.eq.s32.totalorder %s20, 0
      %p52 = por %p50, %p51
      %p53 = scmp.ne.s32.totalorder %s42, %s45
      %p54 = scmp.eq.s32.totalorder %s25, 3
      %p55 = por %p53, %p54
      %p56 = scmp.ne.s32.totalorder %s45, %s46
      %p57 = scmp.eq.s32.totalorder %s25, 0
      %p58 = por %p56, %p57
      %p59 = scmp.ne.s32.totalorder %s45, %s46
      %p60 = scmp.eq.s32.totalorder %s26, 3
      %p61 = por %p59, %p60
      %p63 = scmp.ne.s32.totalorder %s46, %s62
      %p64 = scmp.eq.s32.totalorder %s26, 0
      %p65 = por %p63, %p64
      %s66 = ssub.s32 %s27, %s39
      %p67 = scmp.eq.s32.totalorder %s66, 0
      %s69 = sadd.s32 %s68, 1
      %s70 = scalar_select %p67, %s68, %s69
      %p73 = pneg %p67
      %p74 = scmp.eq.s32.totalorder %s20, 3
      %p75 = por %p73, %p74
      %p76 = scmp.ne.s32.totalorder %s68, %s71
      %p77 = scmp.eq.s32.totalorder %s20, 0
      %p78 = por %p76, %p77
      %p79 = scmp.ne.s32.totalorder %s68, %s71
      %p80 = scmp.eq.s32.totalorder %s25, 3
      %p81 = por %p79, %p80
      %p82 = scmp.ne.s32.totalorder %s71, %s72
      %p83 = scmp.eq.s32.totalorder %s25, 0
      %p84 = por %p82, %p83
      %p85 = scmp.ne.s32.totalorder %s71, %s72
      %p86 = scmp.eq.s32.totalorder %s26, 3
      %p87 = por %p85, %p86
      %p89 = scmp.ne.s32.totalorder %s72, %s88
      %p90 = scmp.eq.s32.totalorder %s26, 0
      %p91 = por %p89, %p90
      %s93 = sadd.s32 %s92, 1
      %p96 = scmp.eq.s32.totalorder %s20, 3
      %p97 = scmp.ne.s32.totalorder %s92, %s94
      %p98 = scmp.eq.s32.totalorder %s20, 0
      %p99 = por %p97, %p98
      %p100 = scmp.ne.s32.totalorder %s92, %s94
      %p101 = scmp.eq.s32.totalorder %s25, 3
      %p102 = por %p100, %p101
      %p103 = scmp.ne.s32.totalorder %s94, %s95
      %p104 = scmp.eq.s32.totalorder %s25, 0
      %p105 = por %p103, %p104
      %p106 = scmp.ne.s32.totalorder %s94, %s95
      %p107 = scmp.eq.s32.totalorder %s26, 3
      %p108 = por %p106, %p107
      %p110 = scmp.ne.s32.totalorder %s95, %s109
      %p111 = scmp.eq.s32.totalorder %s26, 0
      %p112 = por %p110, %p111
      %s114 = sadd.s32 %s113, 1
      %p117 = scmp.eq.s32.totalorder %s20, 3
      %p118 = scmp.ne.s32.totalorder %s113, %s115
      %p119 = scmp.eq.s32.totalorder %s20, 0
      %p120 = por %p118, %p119
      %p121 = scmp.ne.s32.totalorder %s113, %s115
      %p122 = scmp.eq.s32.totalorder %s25, 3
      %p123 = por %p121, %p122
      %p124 = scmp.ne.s32.totalorder %s115, %s116
      %p125 = scmp.eq.s32.totalorder %s25, 0
      %p126 = por %p124, %p125
      %p127 = scmp.ne.s32.totalorder %s115, %s116
      %p128 = scmp.eq.s32.totalorder %s26, 3
      %p129 = por %p127, %p128
      %p131 = scmp.ne.s32.totalorder %s116, %s130
      %p132 = scmp.eq.s32.totalorder %s26, 0
      %p133 = por %p131, %p132
      %s135 = sadd.s32 %s134, 1
      %p138 = scmp.eq.s32.totalorder %s20, 3
      %p139 = scmp.ne.s32.totalorder %s134, %s136
      %p140 = scmp.eq.s32.totalorder %s20, 0
      %p141 = por %p139, %p140
      %p142 = scmp.ne.s32.totalorder %s134, %s136
      %p143 = scmp.eq.s32.totalorder %s25, 3
      %p144 = por %p142, %p143
      %p145 = scmp.ne.s32.totalorder %s136, %s137
      %p146 = scmp.eq.s32.totalorder %s25, 0
      %p147 = por %p145, %p146
      %p148 = scmp.ne.s32.totalorder %s136, %s137
      %p149 = scmp.eq.s32.totalorder %s26, 3
      %p150 = por %p148, %p149
      %p152 = scmp.ne.s32.totalorder %s137, %s151
      %p153 = scmp.eq.s32.totalorder %s26, 0
      %p154 = por %p152, %p153
      %s156 = sadd.s32 %s155, 1
      %p159 = scmp.eq.s32.totalorder %s20, 3
      %p160 = scmp.ne.s32.totalorder %s155, %s157
      %p161 = scmp.eq.s32.totalorder %s20, 0
      %p162 = por %p160, %p161
      %p163 = scmp.ne.s32.totalorder %s155, %s157
      %p164 = scmp.eq.s32.totalorder %s25, 3
      %p165 = por %p163, %p164
      %p166 = scmp.ne.s32.totalorder %s157, %s158
      %p167 = scmp.eq.s32.totalorder %s25, 0
      %p168 = por %p166, %p167
      %p169 = scmp.ne.s32.totalorder %s157, %s158
      %p170 = scmp.eq.s32.totalorder %s26, 3
      %p171 = por %p169, %p170
      %p173 = scmp.ne.s32.totalorder %s158, %s172
      %p174 = scmp.eq.s32.totalorder %s26, 0
      %p175 = por %p173, %p174
      %s177 = sadd.s32 %s176, 1
      %p180 = scmp.eq.s32.totalorder %s20, 3
      %p181 = scmp.ne.s32.totalorder %s176, %s178
      %p182 = scmp.eq.s32.totalorder %s20, 0
      %p183 = por %p181, %p182
      %p184 = scmp.ne.s32.totalorder %s176, %s178
      %p185 = scmp.eq.s32.totalorder %s25, 3
      %p186 = por %p184, %p185
      %p187 = scmp.ne.s32.totalorder %s178, %s179
      %p188 = scmp.eq.s32.totalorder %s25, 0
      %p189 = por %p187, %p188
      %p190 = scmp.ne.s32.totalorder %s178, %s179
      %p191 = scmp.eq.s32.totalorder %s26, 3
      %p192 = por %p190, %p191
      %p194 = scmp.ne.s32.totalorder %s179, %s193
      %p195 = scmp.eq.s32.totalorder %s26, 0
      %p196 = por %p194, %p195
      %s198 = sadd.s32 %s197, 1
      %p201 = scmp.eq.s32.totalorder %s20, 3
      %p202 = scmp.ne.s32.totalorder %s197, %s199
      %p203 = scmp.eq.s32.totalorder %s20, 0
      %p204 = por %p202, %p203
      %p205 = scmp.ne.s32.totalorder %s197, %s199
      %p206 = scmp.eq.s32.totalorder %s25, 3
      %p207 = por %p205, %p206
      %p208 = scmp.ne.s32.totalorder %s199, %s200
      %p209 = scmp.eq.s32.totalorder %s25, 0
      %p210 = por %p208, %p209
      %p211 = scmp.ne.s32.totalorder %s199, %s200
      %p212 = scmp.eq.s32.totalorder %s26, 3
      %p213 = por %p211, %p212
      %p215 = scmp.ne.s32.totalorder %s200, %s214
      %p216 = scmp.eq.s32.totalorder %s26, 0
      %p217 = por %p215, %p216
      %s219 = sadd.s32 %s218, 1
      %p222 = scmp.eq.s32.totalorder %s20, 3
      %p223 = scmp.ne.s32.totalorder %s218, %s220
      %p224 = scmp.eq.s32.totalorder %s20, 0
      %p225 = por %p223, %p224
      %p226 = scmp.ne.s32.totalorder %s218, %s220
      %p227 = scmp.eq.s32.totalorder %s25, 3
      %p228 = por %p226, %p227
      %p229 = scmp.ne.s32.totalorder %s220, %s221
      %p230 = scmp.eq.s32.totalorder %s25, 0
      %p231 = por %p229, %p230
      %p232 = scmp.ne.s32.totalorder %s220, %s221
      %p233 = scmp.eq.s32.totalorder %s26, 3
      %p234 = por %p232, %p233
      %p236 = scmp.ne.s32.totalorder %s221, %s235
      %p237 = scmp.eq.s32.totalorder %s26, 0
      %p238 = por %p236, %p237
      %s240 = sadd.s32 %s239, 1
      %p243 = scmp.eq.s32.totalorder %s20, 3
      %p244 = scmp.ne.s32.totalorder %s239, %s241
      %p245 = scmp.eq.s32.totalorder %s20, 0
      %p246 = por %p244, %p245
      %p247 = scmp.ne.s32.totalorder %s239, %s241
      %p248 = scmp.eq.s32.totalorder %s25, 3
      %p249 = por %p247, %p248
      %p250 = scmp.ne.s32.totalorder %s241, %s242
      %p251 = scmp.eq.s32.totalorder %s25, 0
      %p252 = por %p250, %p251
      %p253 = scmp.ne.s32.totalorder %s241, %s242
      %p254 = scmp.eq.s32.totalorder %s26, 3
      %p255 = por %p253, %p254
      %p257 = scmp.ne.s32.totalorder %s242, %s256
      %p258 = scmp.eq.s32.totalorder %s26, 0
      %p259 = por %p257, %p258
      %s260 = ssub.s32 %s28, %s35
      %p261 = scmp.eq.s32.totalorder %s260, 0
      %s263 = sadd.s32 %s262, 1
      %s264 = scalar_select %p261, %s262, %s263
      %p267 = pneg %p261
      %p268 = scmp.eq.s32.totalorder %s20, 3
      %p269 = por %p267, %p268
      %p270 = scmp.ne.s32.totalorder %s262, %s265
      %p271 = scmp.eq.s32.totalorder %s20, 0
      %p272 = por %p270, %p271
      %p273 = scmp.ne.s32.totalorder %s262, %s265
      %p274 = scmp.eq.s32.totalorder %s25, 3
      %p275 = por %p273, %p274
      %p276 = scmp.ne.s32.totalorder %s265, %s266
      %p277 = scmp.eq.s32.totalorder %s25, 0
      %p278 = por %p276, %p277
      %p279 = scmp.ne.s32.totalorder %s265, %s266
      %p280 = scmp.eq.s32.totalorder %s26, 3
      %p281 = por %p279, %p280
      %p283 = scmp.ne.s32.totalorder %s266, %s282
      %p284 = scmp.eq.s32.totalorder %s26, 0
      %p285 = por %p283, %p284
      %s286 = ssub.s32 %s28, %s35
      %p287 = scmp.eq.s32.totalorder %s286, 0
      %s289 = sadd.s32 %s288, 1
      %s290 = scalar_select %p287, %s288, %s289
      %p293 = pneg %p287
      %p294 = scmp.eq.s32.totalorder %s20, 3
      %p295 = por %p293, %p294
      %p296 = scmp.ne.s32.totalorder %s288, %s291
      %p297 = scmp.eq.s32.totalorder %s20, 0
      %p298 = por %p296, %p297
      %p299 = scmp.ne.s32.totalorder %s288, %s291
      %p300 = scmp.eq.s32.totalorder %s25, 3
      %p301 = por %p299, %p300
      %p302 = scmp.ne.s32.totalorder %s291, %s292
      %p303 = scmp.eq.s32.totalorder %s25, 0
      %p304 = por %p302, %p303
      %p305 = scmp.ne.s32.totalorder %s291, %s292
      %p306 = scmp.eq.s32.totalorder %s26, 3
      %p307 = por %p305, %p306
      %p309 = scmp.ne.s32.totalorder %s292, %s308
      %p310 = scmp.eq.s32.totalorder %s26, 0
      %p311 = por %p309, %p310
      %s312 = ssub.s32 %s28, %s35
      %p313 = scmp.eq.s32.totalorder %s312, 0
      %s315 = sadd.s32 %s314, 1
      %s316 = scalar_select %p313, %s314, %s315
      %p319 = pneg %p313
      %p320 = scmp.eq.s32.totalorder %s20, 3
      %p321 = por %p319, %p320
      %p322 = scmp.ne.s32.totalorder %s314, %s317
      %p323 = scmp.eq.s32.totalorder %s20, 0
      %p324 = por %p322, %p323
      %p325 = scmp.ne.s32.totalorder %s314, %s317
      %p326 = scmp.eq.s32.totalorder %s25, 3
      %p327 = por %p325, %p326
      %p328 = scmp.ne.s32.totalorder %s317, %s318
      %p329 = scmp.eq.s32.totalorder %s25, 0
      %p330 = por %p328, %p329
      %p331 = scmp.ne.s32.totalorder %s317, %s318
      %p332 = scmp.eq.s32.totalorder %s26, 3
      %p333 = por %p331, %p332
      %p335 = scmp.ne.s32.totalorder %s318, %s334
      %p336 = scmp.eq.s32.totalorder %s26, 0
      %p337 = por %p335, %p336
      %s339 = sadd.s32 %s338, 1
      %p342 = scmp.eq.s32.totalorder %s20, 3
      %p343 = scmp.ne.s32.totalorder %s338, %s340
      %p344 = scmp.eq.s32.totalorder %s20, 0
      %p345 = por %p343, %p344
      %p346 = scmp.ne.s32.totalorder %s338, %s340
      %p347 = scmp.eq.s32.totalorder %s25, 3
      %p348 = por %p346, %p347
      %p349 = scmp.ne.s32.totalorder %s340, %s341
      %p350 = scmp.eq.s32.totalorder %s25, 0
      %p351 = por %p349, %p350
      %p352 = scmp.ne.s32.totalorder %s340, %s341
      %p353 = scmp.eq.s32.totalorder %s26, 3
      %p354 = por %p352, %p353
      %p356 = scmp.ne.s32.totalorder %s341, %s355
      %p357 = scmp.eq.s32.totalorder %s26, 0
      %p358 = por %p356, %p357
      %s359 = ssub.s32 %s27, %s39
      %p360 = scmp.eq.s32.totalorder %s359, 0
      %s362 = sadd.s32 %s361, 1
      %s363 = scalar_select %p360, %s361, %s362
      %p366 = pneg %p360
      %p367 = scmp.eq.s32.totalorder %s20, 3
      %p368 = por %p366, %p367
      %p369 = scmp.ne.s32.totalorder %s361, %s364
      %p370 = scmp.eq.s32.totalorder %s20, 0
      %p371 = por %p369, %p370
      %p372 = scmp.ne.s32.totalorder %s361, %s364
      %p373 = scmp.eq.s32.totalorder %s25, 3
      %p374 = por %p372, %p373
      %p375 = scmp.ne.s32.totalorder %s364, %s365
      %p376 = scmp.eq.s32.totalorder %s25, 0
      %p377 = por %p375, %p376
      %p378 = scmp.ne.s32.totalorder %s364, %s365
      %p379 = scmp.eq.s32.totalorder %s26, 3
      %p380 = por %p378, %p379
      %p382 = scmp.ne.s32.totalorder %s365, %s381
      %p383 = scmp.eq.s32.totalorder %s26, 0
      %p384 = por %p382, %p383
      %p385 = scmp.le.s32.totalorder 1, %s20
      %p386 = scmp.lt.s32.totalorder %s20, 5
      %p387 = pnand %p385, %p386
      %p388 = pneg %p387
      // Predicated region
      $region9: #{transformer_forward.2} parent=5 // pred_check
        _
      $region10: #{transformer_forward.2} parent=5 // pred_check_branch
        %390 = sbr.rel (%p387) target = $region12
      $region11: #{transformer_forward.2} parent=5 // pred_region
        %s391 = ssub.s32 %s20, 1
        // Predicated region
        $region13: #{transformer_forward.2} parent=11 // pred_check
          %p392 = pneg %p105
        $region14: #{transformer_forward.2} parent=11 // pred_check_branch
          %394 = sbr.rel (%p392) target = $region16
        $region15: #{transformer_forward.2} parent=11 // pred_region
          _
        $region16: #{transformer_forward.2} parent=11 // pred_fallthru
          _
        // Predicated region
        $region17: #{transformer_forward.2} parent=11 // pred_check
          %p395 = pneg %p126
        $region18: #{transformer_forward.2} parent=11 // pred_check_branch
          %397 = sbr.rel (%p395) target = $region20
        $region19: #{transformer_forward.2} parent=11 // pred_region
          _
        $region20: #{transformer_forward.2} parent=11 // pred_fallthru
          _
        // Predicated region
        $region21: #{transformer_forward.2} parent=11 // pred_check
          %p398 = pneg %p147
        $region22: #{transformer_forward.2} parent=11 // pred_check_branch
          %400 = sbr.rel (%p398) target = $region24
        $region23: #{transformer_forward.2} parent=11 // pred_region
          _
        $region24: #{transformer_forward.2} parent=11 // pred_fallthru
          _
        // Predicated region
        $region25: #{transformer_forward.2} parent=11 // pred_check
          %p401 = pneg %p168
        $region26: #{transformer_forward.2} parent=11 // pred_check_branch
          %403 = sbr.rel (%p401) target = $region28
        $region27: #{transformer_forward.2} parent=11 // pred_region
          _
        $region28: #{transformer_forward.2} parent=11 // pred_fallthru
          _
        // Predicated region
        $region29: #{transformer_forward.2} parent=11 // pred_check
          %p404 = pneg %p189
        $region30: #{transformer_forward.2} parent=11 // pred_check_branch
          %406 = sbr.rel (%p404) target = $region32
        $region31: #{transformer_forward.2} parent=11 // pred_region
          _
        $region32: #{transformer_forward.2} parent=11 // pred_fallthru
          _
        // Predicated region
        $region33: #{transformer_forward.2} parent=11 // pred_check
          %p407 = pneg %p210
        $region34: #{transformer_forward.2} parent=11 // pred_check_branch
          %409 = sbr.rel (%p407) target = $region36
        $region35: #{transformer_forward.2} parent=11 // pred_region
          _
        $region36: #{transformer_forward.2} parent=11 // pred_fallthru
          _
        // Predicated region
        $region37: #{transformer_forward.2} parent=11 // pred_check
          %p410 = pneg %p231
        $region38: #{transformer_forward.2} parent=11 // pred_check_branch
          %412 = sbr.rel (%p410) target = $region40
        $region39: #{transformer_forward.2} parent=11 // pred_region
          _
        $region40: #{transformer_forward.2} parent=11 // pred_fallthru
          _
        // Predicated region
        $region41: #{transformer_forward.2} parent=11 // pred_check
          %p413 = pneg %p252
        $region42: #{transformer_forward.2} parent=11 // pred_check_branch
          %415 = sbr.rel (%p413) target = $region44
        $region43: #{transformer_forward.2} parent=11 // pred_region
          _
        $region44: #{transformer_forward.2} parent=11 // pred_fallthru
          _
        // Predicated region
        $region45: #{transformer_forward.2} parent=11 // pred_check
          %p416 = pneg %p351
        $region46: #{transformer_forward.2} parent=11 // pred_check_branch
          %418 = sbr.rel (%p416) target = $region48
        $region47: #{transformer_forward.2} parent=11 // pred_region
          _
        $region48: #{transformer_forward.2} parent=11 // pred_fallthru
          _
      $region12: #{transformer_forward.2} parent=5 // pred_fallthru
        _
      %p419 = scmp.lt.s32.totalorder %s20, 4
      // Predicated region
      $region49: #{transformer_forward.2} parent=5 // pred_check
        %p420 = pneg %p419
      $region50: #{transformer_forward.2} parent=5 // pred_check_branch
        %422 = sbr.rel (%p420) target = $region52
      $region51: #{transformer_forward.2} parent=5 // pred_region
        // Predicated region
        $region53: #{transformer_forward.2} parent=51 // pred_check
          %p423 = pneg %p52
        $region54: #{transformer_forward.2} parent=51 // pred_check_branch
          %425 = sbr.rel (%p423) target = $region56
        $region55: #{transformer_forward.2} parent=51 // pred_region
          %p426 = scmp.lt.s32.totalorder %s27, 1
          %s427 = scalar_select %p426, %s27, 1
          %s428 = scalar_lea.vmem %s0, %s427
        $region56: #{transformer_forward.2} parent=51 // pred_fallthru
          _
        // Predicated region
        $region57: #{transformer_forward.2} parent=51 // pred_check
          %p429 = pneg %p78
        $region58: #{transformer_forward.2} parent=51 // pred_check_branch
          %431 = sbr.rel (%p429) target = $region60
        $region59: #{transformer_forward.2} parent=51 // pred_region
          %p432 = scmp.lt.s32.totalorder %s27, 1
          %s433 = scalar_select %p432, %s27, 1
          %s434 = smul.addr %s433, 8
          %s435 = scalar_lea.vmem %s1, %s434
        $region60: #{transformer_forward.2} parent=51 // pred_fallthru
          _
        // Predicated region
        $region61: #{transformer_forward.2} parent=51 // pred_check
          %p436 = pneg %p272
        $region62: #{transformer_forward.2} parent=51 // pred_check_branch
          %438 = sbr.rel (%p436) target = $region64
        $region63: #{transformer_forward.2} parent=51 // pred_region
          %s439 = sand.u32 %s262, 1
          %s440 = sand.u32 %s262, 1
          %s441 = smul.addr %s440, 32
          %s442 = scalar_lea.vmem [#allocation5], %s441
          %s443 = smul.addr %s28, 4
          %s444 = scalar_lea.vmem %s10, %s443
          // Predicated region
          $region65: #{transformer_forward.2} parent=63 // pred_check
            _
          $region66: #{transformer_forward.2} parent=63 // pred_check_branch
            %446 = sbr.rel (0) target = $region68
          $region67: #{transformer_forward.2} parent=63 // pred_region
            // Predicated region
            $region69: #{transformer_forward.2} parent=67 // pred_check
              _
            $region70: #{transformer_forward.2} parent=67 // pred_check_branch
              %448 = sbr.rel target = $region72
            $region71: #{transformer_forward.2} parent=67 // pred_region
              // Predicated region
              $region84: #{transformer_forward.2} parent=71 // pred_check
                _
              $region85: #{transformer_forward.2} parent=71 // pred_check_branch
                %477 = sbr.rel (0) target = $region87
              $region86: #{transformer_forward.2} parent=71 // pred_region
                loop: start=0, step=1, limit=1
                $region88: #{transformer_forward.2} parent=86 // loop_pre_header
                  _
                $region89: #{transformer_forward.2} parent=86 // loop_header
                  %s479 = sphi 0, %s483
                  %p480 = scmp.ge.s32.totalorder %s479, 1
                  %s484 = sphi %s444, %s444
                  %s485 = sphi %s442, %s442
                $region90: #{transformer_forward.2} parent=86 // loop_header_branch
                  %482 = sbr.rel (%p480) target = $region94
                $region91: #{transformer_forward.2} parent=86 // loop_body
                  _
                $region92: #{transformer_forward.2} parent=86 // loop_footer
                  %s483 = sadd.s32 1, %s479
                $region93: #{transformer_forward.2} parent=86 // loop_footer_branch
                  %478 = sbr.rel target = $region89
                $region94: #{transformer_forward.2} parent=86 // loop_exit
                  _
                loop: start=0, step=1, limit=1
                $region95: #{transformer_forward.2} parent=86 // loop_pre_header
                  _
                $region96: #{transformer_forward.2} parent=86 // loop_header
                  %s488 = sphi 0, %s492
                  %p489 = scmp.ge.s32.totalorder %s488, 1
                  %s493 = sphi %s444, %s444
                  %s494 = sphi %s442, %s442
                $region97: #{transformer_forward.2} parent=86 // loop_header_branch
                  %491 = sbr.rel (%p489) target = $region101
                $region98: #{transformer_forward.2} parent=86 // loop_body
                  %v495 = vld [vmem:[%s493] sm:$0xf]
                  %496 = vst [vmem:[%s494] sm:$0xf] %v495
                  %v497 = vld [vmem:[%s493 + $0x8] sm:$0xf]
                  %498 = vst [vmem:[%s494 + $0x4] sm:$0xf] %v497
                  %v499 = vld [vmem:[%s493 + $0x10] sm:$0xf]
                  %500 = vst [vmem:[%s494 + $0x8] sm:$0xf] %v499
                  %v501 = vld [vmem:[%s493 + $0x18] sm:$0xf]
                  %502 = vst [vmem:[%s494 + $0xc] sm:$0xf] %v501
                  %v503 = vld [vmem:[%s493 + $0x20] sm:$0xf]
                  %504 = vst [vmem:[%s494 + $0x10] sm:$0xf] %v503
                  %v505 = vld [vmem:[%s493 + $0x28] sm:$0xf]
                  %506 = vst [vmem:[%s494 + $0x14] sm:$0xf] %v505
                  %v507 = vld [vmem:[%s493 + $0x30] sm:$0xf]
                  %508 = vst [vmem:[%s494 + $0x18] sm:$0xf] %v507
                  %v509 = vld [vmem:[%s493 + $0x38] sm:$0xf]
                  %510 = vst [vmem:[%s494 + $0x1c] sm:$0xf] %v509
                $region99: #{transformer_forward.2} parent=86 // loop_footer
                  %s492 = sadd.s32 1, %s488
                $region100: #{transformer_forward.2} parent=86 // loop_footer_branch
                  %487 = sbr.rel target = $region96
                $region101: #{transformer_forward.2} parent=86 // loop_exit
                  _
              $region87: #{transformer_forward.2} parent=71 // pred_fallthru
                _
            $region72: #{transformer_forward.2} parent=67 // pred_fallthru
              _
            // Predicated region
            $region73: #{transformer_forward.2} parent=67 // pred_check
              _
            $region74: #{transformer_forward.2} parent=67 // pred_check_branch
              %450 = sbr.rel (0) target = $region76
            $region75: #{transformer_forward.2} parent=67 // pred_region
              loop: start=0, step=1, limit=1
              $region77: #{transformer_forward.2} parent=75 // loop_pre_header
                _
              $region78: #{transformer_forward.2} parent=75 // loop_header
                %s453 = sphi 0, %s457
                %p454 = scmp.ge.s32.totalorder %s453, 1
                %s458 = sphi %s444, %s444
                %s459 = sphi %s442, %s442
              $region79: #{transformer_forward.2} parent=75 // loop_header_branch
                %456 = sbr.rel (%p454) target = $region83
              $region80: #{transformer_forward.2} parent=75 // loop_body
                %v460 = vld [vmem:[%s458] sm:$0xf]
                %461 = vst [vmem:[%s459] sm:$0xf] %v460
                %v462 = vld [vmem:[%s458 + $0x8] sm:$0xf]
                %463 = vst [vmem:[%s459 + $0x4] sm:$0xf] %v462
                %v464 = vld [vmem:[%s458 + $0x10] sm:$0xf]
                %465 = vst [vmem:[%s459 + $0x8] sm:$0xf] %v464
                %v466 = vld [vmem:[%s458 + $0x18] sm:$0xf]
                %467 = vst [vmem:[%s459 + $0xc] sm:$0xf] %v466
                %v468 = vld [vmem:[%s458 + $0x20] sm:$0xf]
                %469 = vst [vmem:[%s459 + $0x10] sm:$0xf] %v468
                %v470 = vld [vmem:[%s458 + $0x28] sm:$0xf]
                %471 = vst [vmem:[%s459 + $0x14] sm:$0xf] %v470
                %v472 = vld [vmem:[%s458 + $0x30] sm:$0xf]
                %473 = vst [vmem:[%s459 + $0x18] sm:$0xf] %v472
                %v474 = vld [vmem:[%s458 + $0x38] sm:$0xf]
                %475 = vst [vmem:[%s459 + $0x1c] sm:$0xf] %v474
              $region81: #{transformer_forward.2} parent=75 // loop_footer
                %s457 = sadd.s32 1, %s453
              $region82: #{transformer_forward.2} parent=75 // loop_footer_branch
                %452 = sbr.rel target = $region78
              $region83: #{transformer_forward.2} parent=75 // loop_exit
                _
            $region76: #{transformer_forward.2} parent=67 // pred_fallthru
              _
          $region68: #{transformer_forward.2} parent=63 // pred_fallthru
            _
          %511 = vnop
        $region64: #{transformer_forward.2} parent=51 // pred_fallthru
          _
        // Predicated region
        $region102: #{transformer_forward.2} parent=51 // pred_check
          %p512 = pneg %p298
        $region103: #{transformer_forward.2} parent=51 // pred_check_branch
          %514 = sbr.rel (%p512) target = $region105
        $region104: #{transformer_forward.2} parent=51 // pred_region
          %p515 = scmp.lt.s32.totalorder %s28, 1
          %s516 = scalar_select %p515, %s28, 1
          %s517 = scalar_lea.vmem %s11, %s516
        $region105: #{transformer_forward.2} parent=51 // pred_fallthru
          _
        // Predicated region
        $region106: #{transformer_forward.2} parent=51 // pred_check
          %p518 = pneg %p324
        $region107: #{transformer_forward.2} parent=51 // pred_check_branch
          %520 = sbr.rel (%p518) target = $region109
        $region108: #{transformer_forward.2} parent=51 // pred_region
          %s521 = smul.u32 16, %s28
          %p522 = scmp.lt.s32.totalorder %s521, 31
          %s523 = scalar_select %p522, %s521, 31
          %s524 = smul.addr %s523, 4
          %s525 = scalar_lea.vmem %s12, %s524
          %s526 = smul.u32 16, %s28
        $region109: #{transformer_forward.2} parent=51 // pred_fallthru
          _
      $region52: #{transformer_forward.2} parent=5 // pred_fallthru
        _
      %p527 = scmp.le.s32.totalorder 1, %s20
      %p528 = scmp.lt.s32.totalorder %s20, 5
      %p529 = pnand %p527, %p528
      %p530 = pneg %p529
      // Predicated region
      $region110: #{transformer_forward.2} parent=5 // pred_check
        _
      $region111: #{transformer_forward.2} parent=5 // pred_check_branch
        %532 = sbr.rel (%p529) target = $region113
      $region112: #{transformer_forward.2} parent=5 // pred_region
        %s533 = ssub.s32 %s20, 1
        %s534 = sand.u32 %s265, 1
        %s535 = sand.u32 %s265, 1
        %s536 = smul.addr %s535, 32
        %s537 = scalar_lea.vmem [#allocation5], %s536
        // Predicated region
        $region114: #{transformer_forward.2} parent=112 // pred_check
          %p538 = pneg %p278
        $region115: #{transformer_forward.2} parent=112 // pred_check_branch
          %540 = sbr.rel (%p538) target = $region117
        $region116: #{transformer_forward.2} parent=112 // pred_region
          _
        $region117: #{transformer_forward.2} parent=112 // pred_fallthru
          _
        %p541 = scmp.lt.s32.totalorder %s29, 1
        %s542 = scalar_select %p541, %s29, 1
        %s543 = scalar_lea.vmem %s0, %s542
        %p544 = pneg %p58
        %p545 = pneg %p55
        %p546 = scmp.lt.s32.totalorder %s29, 1
        %s547 = scalar_select %p546, %s29, 1
        %s548 = smul.addr %s547, 8
        %s549 = scalar_lea.vmem %s1, %s548
        %p550 = pneg %p84
        %p551 = pneg %p81
        %p552 = pneg %p105
        %p553 = pneg %p102
        %p554 = pneg %p126
        %p555 = pneg %p123
        %p556 = pneg %p147
        %p557 = pneg %p144
        %p558 = pneg %p168
        %p559 = pneg %p165
        %p560 = pneg %p189
        %p561 = pneg %p186
        %p562 = pneg %p210
        %p563 = pneg %p207
        %p564 = pneg %p231
        %p565 = pneg %p228
        %p566 = pneg %p252
        %p567 = pneg %p249
        %s568 = sand.u32 %s265, 1
        %s569 = sand.u32 %s265, 1
        %s570 = smul.addr %s569, 32
        %s571 = scalar_lea.vmem [#allocation5], %s570
        %p572 = pneg %p278
        %p573 = pneg %p275
        %p574 = scmp.lt.s32.totalorder %s30, 1
        %s575 = scalar_select %p574, %s30, 1
        %s576 = scalar_lea.vmem %s11, %s575
        %p577 = pneg %p304
        %p578 = pneg %p301
        %s579 = smul.u32 16, %s30
        %p580 = scmp.lt.s32.totalorder %s579, 31
        %s581 = scalar_select %p580, %s579, 31
        %s582 = smul.addr %s581, 4
        %s583 = scalar_lea.vmem %s12, %s582
        %p584 = pneg %p330
        %p585 = pneg %p327
        %p586 = pneg %p351
        %p587 = pneg %p348
        %p588 = pneg %p377
        %p589 = pneg %p374
        %p590 = scmp.lt.s32.totalorder %s29, 1
        %s591 = scalar_select %p590, %s29, 1
        %s592 = smul.addr %s591, 8
        %s593 = scalar_lea.vmem %s14, %s592
        %p594 = scmp.lt.s32.totalorder %s29, 1
        %s595 = scalar_select %p594, %s29, 1
        %s596 = scalar_lea.vmem %s0, %s595
        %p597 = scmp.lt.s32.totalorder %s29, 1
        %s598 = scalar_select %p597, %s29, 1
        %s599 = smul.addr %s598, 8
        %s600 = scalar_lea.vmem %s1, %s599
        %p601 = scmp.lt.s32.totalorder %s30, 1
        %s602 = scalar_select %p601, %s30, 1
        %s603 = scalar_lea.vmem %s11, %s602
        %s604 = smul.u32 16, %s30
        %p605 = scmp.lt.s32.totalorder %s604, 31
        %s606 = scalar_select %p605, %s604, 31
        %s607 = smul.addr %s606, 4
        %s608 = scalar_lea.vmem %s12, %s607
        %s609 = smul.u32 16, %s30
        %p610 = scmp.lt.s32.totalorder %s29, 1
        %s611 = scalar_select %p610, %s29, 1
        %s612 = smul.addr %s611, 8
        %s613 = scalar_lea.vmem %s14, %s612
        %p619 = scmp.eq.s32.totalorder %s30, 0
        // Predicated region
        $region118: #{transformer_forward.2} parent=112 // pred_check
          %p620 = pneg %p619
        $region119: #{transformer_forward.2} parent=112 // pred_check_branch
          %622 = sbr.rel (%p620) target = $region121
        $region120: #{transformer_forward.2} parent=112 // pred_region
          %v623 = vld [vmem:[%s600] sm:$0xff]
          %v624 = vld [vmem:[%s2] sm:$0x1]
          %v625 = vld [vmem:[%s3] sm:$0x1]
          %vm626 = vcmask 523264
          %v627 = vsel %vm626, %v623, 0.0
          %628 = vadd.xlane.f32.xlu0 %v627
          %v629 = vpop.xlane.xlu0 %628
          %v630 = vrcp.pop 64.0
          %v631 = vmul.f32 %v629, %v630
          %v632 = vsub.f32 %v623, %v631
          %v633 = vmul.f32 %v632, %v632
          %v634 = vsel %vm626, %v633, 0.0
          %635 = vadd.xlane.f32.xlu0 %v634
          %v636 = vpop.xlane.xlu0 %635
          %v637 = vmul.f32 %v636, %v630
          %v638 = vadd.f32 %v637, 1e-05
          %v639 = vrsqrt.pop %v638
          %v640 = vmul.f32 %v632, %v639
          %v642 = vlaneseq
          %v643 = vshrl.u32 %v642, 7
          %v644 = vsub.s32 0, %v643
          %v645 = vrot.slane %v624, %v644
          %v647 = vmul.f32 %v640, %v645
          %v649 = vlaneseq
          %v650 = vshrl.u32 %v649, 7
          %v651 = vsub.s32 0, %v650
          %v652 = vrot.slane %v625, %v651
          %v654 = vadd.f32 %v647, %v652
          %v655 = vpack.c.bf16 %v654, %v654
          %v656 = vld [vmem:[%s4] sm:$0xff]
          %v657 = vld [vmem:[%s4 + $0x8] sm:$0xff]
          %v658 = vld [vmem:[%s4 + $0x10] sm:$0xff]
          %v659 = vld [vmem:[%s4 + $0x18] sm:$0xff]
          %v660 = vld [vmem:[%s4 + $0x20] sm:$0xff]
          %v661 = vld [vmem:[%s4 + $0x28] sm:$0xff]
          %v662 = vld [vmem:[%s4 + $0x30] sm:$0xff]
          %v663 = vld [vmem:[%s4 + $0x38] sm:$0xff]
          %v664 = vld [vmem:[%s5] sm:$0x3]
          %v666 = vlaneseq
          %v667 = vshrl.u32 %v666, 7
          %v668 = vsub.s32 0, %v667
          %v669 = vrot.slane %v664, %v668
          %v670 = vlaneseq
          %v671 = vshrl.u32 %v670, 7
          %v672 = vsub.s32 1, %v671
          %v673 = vrot.slane %v664, %v672
          %v684 = vunpack.c.l.b16 %v656
          %v685 = vunpack.c.h.b16 %v656
          %v686 = vunpack.c.l.b16 %v657
          %v687 = vunpack.c.h.b16 %v657
          %v688 = vunpack.c.l.b16 %v658
          %v689 = vunpack.c.h.b16 %v658
          %v690 = vunpack.c.l.b16 %v659
          %v691 = vunpack.c.h.b16 %v659
          %v692 = vunpack.c.l.b16 %v660
          %v693 = vunpack.c.h.b16 %v660
          %v694 = vunpack.c.l.b16 %v661
          %v695 = vunpack.c.h.b16 %v661
          %v696 = vunpack.c.l.b16 %v662
          %v697 = vunpack.c.h.b16 %v662
          %v698 = vunpack.c.l.b16 %v663
          %v699 = vunpack.c.h.b16 %v663
          %v700 = vpack.c.b16 %v686, %v684
          %v701 = vpack.c.b16 %v687, %v685
          %v702 = vpack.c.b16 %v690, %v688
          %v703 = vpack.c.b16 %v691, %v689
          %v704 = vpack.c.b16 %v694, %v692
          %v705 = vpack.c.b16 %v695, %v693
          %v706 = vpack.c.b16 %v698, %v696
          %v707 = vpack.c.b16 %v699, %v697
          %v717 = vsel %vm626, %v655, 0
          %719 = vmatprep.subr.bf16.mxu0 %v701
          %720 = vmatpush1.bf16.msra.mxu0 %v700
          %721 = vmatprep.subr.bf16.mxu0 %v703
          %722 = vmatpush1.bf16.msra.mxu0 %v702
          %723 = vmatprep.subr.bf16.mxu0 %v705
          %724 = vmatpush1.bf16.msra.mxu0 %v704
          %725 = vmatprep.subr.bf16.mxu0 %v707
          %726 = vmatpush1.bf16.msra.mxu0 %v706
          %727 = vmatprep.subr.bf16.mxu0 0
          %728 = vmatpush1.bf16.msra.mxu0 0
          %729 = vmatprep.subr.bf16.mxu0 0
          %730 = vmatpush1.bf16.msra.mxu0 0
          %731 = vmatprep.subr.bf16.mxu0 0
          %732 = vmatpush1.bf16.msra.mxu0 0
          %733 = vmatprep.subr.bf16.mxu0 0
          %734 = vmatpush1.bf16.msra.mxu0 0
          %735 = vmatprep.subr.bf16.mxu0 0
          %736 = vmatpush1.bf16.msra.mxu0 0
          %737 = vmatprep.subr.bf16.mxu0 0
          %738 = vmatpush1.bf16.msra.mxu0 0
          %739 = vmatprep.subr.bf16.mxu0 0
          %740 = vmatpush1.bf16.msra.mxu0 0
          %741 = vmatprep.subr.bf16.mxu0 0
          %742 = vmatpush1.bf16.msra.mxu0 0
          %743 = vmatprep.subr.bf16.mxu0 0
          %744 = vmatpush1.bf16.msra.mxu0 0
          %745 = vmatprep.subr.bf16.mxu0 0
          %746 = vmatpush1.bf16.msra.mxu0 0
          %747 = vmatprep.subr.bf16.mxu0 0
          %748 = vmatpush1.bf16.msra.mxu0 0
          %749 = vmatprep.subr.bf16.mxu0 0
          %750 = vmatpush1.bf16.msra.mxu0 0
          %751 = vmatprep.mubr.bf16.mxu0 0
          %752 = vmatmul.mubr.bf16.gmra.mrb[0].mxu0 %v717
          %v753 = vpop.f32.mrb[0].mxu0
          %v754 = vadd.f32 %v669, %v753
          %v755 = vpop.f32.mrb[0].mxu0
          %v756 = vadd.f32 %v673, %v755
          %v757 = vpop.f32.mrb[0].mxu0
          %v758 = vpop.f32.mrb[0].mxu0
          %759 = vdwg.mxu0
          %v760 = vld [vmem:[%s596] sm:$0x1]
          %762 = vrot.lane.b32.xlu0 %v754, 112
          %v763 = vpop.permute.xlu0 %762
          %765 = vrot.lane.b32.xlu0 %v754, 96
          %v766 = vpop.permute.xlu0 %765
          %768 = vrot.lane.b32.xlu0 %v754, 80
          %v769 = vpop.permute.xlu0 %768
          %v771 = vcombine.low %v754, %v766
          %v772 = vcombine.high %v754, %v766
          %v774 = vunpack.c.l.s4 1983009808
          %v775 = vunpack.c.0.s8 %v774
          %v776 = vlaneseq
          %v777 = vshrl.u32 %v776, 7
          %v778 = vsub.s32 %v775, %v777
          %v779 = vrot.slane %v771, %v778
          %v781 = vunpack.c.l.s4 1983009808
          %v782 = vunpack.c.0.s8 %v781
          %v783 = vlaneseq
          %v784 = vshrl.u32 %v783, 7
          %v785 = vsub.s32 %v782, %v784
          %v786 = vrot.slane %v772, %v785
          %v787 = vcombine.low %v763, %v769
          %v788 = vcombine.high %v763, %v769
          %v790 = vunpack.c.l.s4 1983009808
          %v791 = vunpack.c.0.s8 %v790
          %v792 = vlaneseq
          %v793 = vshrl.u32 %v792, 7
          %v794 = vsub.s32 %v791, %v793
          %v795 = vrot.slane %v787, %v794
          %v797 = vunpack.c.l.s4 1983009808
          %v798 = vunpack.c.0.s8 %v797
          %v799 = vlaneseq
          %v800 = vshrl.u32 %v799, 7
          %v801 = vsub.s32 %v798, %v800
          %v802 = vrot.slane %v788, %v801
          %v803 = vcombine.low %v779, %v795
          %v804 = vcombine.high %v779, %v795
          %v806 = vunpack.c.l.s4 1934713408
          %v807 = vunpack.c.0.s8 %v806
          %v808 = vlaneseq
          %v809 = vshrl.u32 %v808, 7
          %v810 = vsub.s32 %v807, %v809
          %v811 = vrot.slane %v803, %v810
          %v813 = vunpack.c.l.s4 1934713408
          %v814 = vunpack.c.0.s8 %v813
          %v815 = vlaneseq
          %v816 = vshrl.u32 %v815, 7
          %v817 = vsub.s32 %v814, %v816
          %v818 = vrot.slane %v804, %v817
          %v819 = vcombine.low %v786, %v802
          %v820 = vcombine.high %v786, %v802
          %v822 = vunpack.c.l.s4 1934713408
          %v823 = vunpack.c.0.s8 %v822
          %v824 = vlaneseq
          %v825 = vshrl.u32 %v824, 7
          %v826 = vsub.s32 %v823, %v825
          %v827 = vrot.slane %v819, %v826
          %v829 = vunpack.c.l.s4 1934713408
          %v830 = vunpack.c.0.s8 %v829
          %v831 = vlaneseq
          %v832 = vshrl.u32 %v831, 7
          %v833 = vsub.s32 %v830, %v832
          %v834 = vrot.slane %v820, %v833
          %v835 = vcombine.high %v811, 0.0
          %v836 = vcombine.high %v818, 0.0
          %v837 = vcombine.high %v827, 0.0
          %v838 = vcombine.high %v834, 0.0
          %v839 = vcombine.low %v811, %v818
          %v841 = vunpack.c.l.s4 1983009808
          %v842 = vunpack.c.0.s8 %v841
          %v843 = vlaneseq
          %v844 = vshrl.u32 %v843, 7
          %v845 = vsub.s32 %v842, %v844
          %v846 = vrot.slane %v839, %v845
          %v847 = vcombine.low %v835, %v836
          %v849 = vunpack.c.l.s4 1983009808
          %v850 = vunpack.c.0.s8 %v849
          %v851 = vlaneseq
          %v852 = vshrl.u32 %v851, 7
          %v853 = vsub.s32 %v850, %v852
          %v854 = vrot.slane %v847, %v853
          %v855 = vcombine.low %v827, %v834
          %v857 = vunpack.c.l.s4 1983009808
          %v858 = vunpack.c.0.s8 %v857
          %v859 = vlaneseq
          %v860 = vshrl.u32 %v859, 7
          %v861 = vsub.s32 %v858, %v860
          %v862 = vrot.slane %v855, %v861
          %v863 = vcombine.low %v837, %v838
          %v865 = vunpack.c.l.s4 1983009808
          %v866 = vunpack.c.0.s8 %v865
          %v867 = vlaneseq
          %v868 = vshrl.u32 %v867, 7
          %v869 = vsub.s32 %v866, %v868
          %v870 = vrot.slane %v863, %v869
          %v871 = vcombine.low %v846, %v854
          %v872 = vcombine.high %v846, %v854
          %v874 = vunpack.c.l.s4 1934713408
          %v875 = vunpack.c.0.s8 %v874
          %v876 = vlaneseq
          %v877 = vshrl.u32 %v876, 7
          %v878 = vsub.s32 %v875, %v877
          %v879 = vrot.slane %v871, %v878
          %v881 = vunpack.c.l.s4 1934713408
          %v882 = vunpack.c.0.s8 %v881
          %v883 = vlaneseq
          %v884 = vshrl.u32 %v883, 7
          %v885 = vsub.s32 %v882, %v884
          %v886 = vrot.slane %v872, %v885
          %v887 = vcombine.low %v862, %v870
          %v888 = vcombine.high %v862, %v870
          %v890 = vunpack.c.l.s4 1934713408
          %v891 = vunpack.c.0.s8 %v890
          %v892 = vlaneseq
          %v893 = vshrl.u32 %v892, 7
          %v894 = vsub.s32 %v891, %v893
          %v895 = vrot.slane %v887, %v894
          %v897 = vunpack.c.l.s4 1934713408
          %v898 = vunpack.c.0.s8 %v897
          %v899 = vlaneseq
          %v900 = vshrl.u32 %v899, 7
          %v901 = vsub.s32 %v898, %v900
          %v902 = vrot.slane %v888, %v901
          %v903 = vcombine.low %v879, %v895
          %v904 = vcombine.high %v879, %v895
          %v905 = vcombine.low %v886, %v902
          %v906 = vcombine.high %v886, %v902
          %907 = vrot.lane.b32.xlu0 %v754, 64
          %v908 = vpop.permute.xlu0 %907
          %909 = vrot.lane.b32.xlu0 %v763, 64
          %v910 = vpop.permute.xlu0 %909
          %911 = vrot.lane.b32.xlu0 %v766, 64
          %v912 = vpop.permute.xlu0 %911
          %913 = vrot.lane.b32.xlu0 %v769, 64
          %v914 = vpop.permute.xlu0 %913
          %v919 = vcombine.low %v908, %v912
          %v920 = vcombine.high %v908, %v912
          %v922 = vunpack.c.l.s4 1983009808
          %v923 = vunpack.c.0.s8 %v922
          %v924 = vlaneseq
          %v925 = vshrl.u32 %v924, 7
          %v926 = vsub.s32 %v923, %v925
          %v927 = vrot.slane %v919, %v926
          %v929 = vunpack.c.l.s4 1983009808
          %v930 = vunpack.c.0.s8 %v929
          %v931 = vlaneseq
          %v932 = vshrl.u32 %v931, 7
          %v933 = vsub.s32 %v930, %v932
          %v934 = vrot.slane %v920, %v933
          %v935 = vcombine.low %v910, %v914
          %v936 = vcombine.high %v910, %v914
          %v938 = vunpack.c.l.s4 1983009808
          %v939 = vunpack.c.0.s8 %v938
          %v940 = vlaneseq
          %v941 = vshrl.u32 %v940, 7
          %v942 = vsub.s32 %v939, %v941
          %v943 = vrot.slane %v935, %v942
          %v945 = vunpack.c.l.s4 1983009808
          %v946 = vunpack.c.0.s8 %v945
          %v947 = vlaneseq
          %v948 = vshrl.u32 %v947, 7
          %v949 = vsub.s32 %v946, %v948
          %v950 = vrot.slane %v936, %v949
          %v951 = vcombine.low %v927, %v943
          %v952 = vcombine.high %v927, %v943
          %v954 = vunpack.c.l.s4 1934713408
          %v955 = vunpack.c.0.s8 %v954
          %v956 = vlaneseq
          %v957 = vshrl.u32 %v956, 7
          %v958 = vsub.s32 %v955, %v957
          %v959 = vrot.slane %v951, %v958
          %v961 = vunpack.c.l.s4 1934713408
          %v962 = vunpack.c.0.s8 %v961
          %v963 = vlaneseq
          %v964 = vshrl.u32 %v963, 7
          %v965 = vsub.s32 %v962, %v964
          %v966 = vrot.slane %v952, %v965
          %v967 = vcombine.low %v934, %v950
          %v968 = vcombine.high %v934, %v950
          %v970 = vunpack.c.l.s4 1934713408
          %v971 = vunpack.c.0.s8 %v970
          %v972 = vlaneseq
          %v973 = vshrl.u32 %v972, 7
          %v974 = vsub.s32 %v971, %v973
          %v975 = vrot.slane %v967, %v974
          %v977 = vunpack.c.l.s4 1934713408
          %v978 = vunpack.c.0.s8 %v977
          %v979 = vlaneseq
          %v980 = vshrl.u32 %v979, 7
          %v981 = vsub.s32 %v978, %v980
          %v982 = vrot.slane %v968, %v981
          %v983 = vcombine.high %v959, 0.0
          %v984 = vcombine.high %v966, 0.0
          %v985 = vcombine.high %v975, 0.0
          %v986 = vcombine.high %v982, 0.0
          %v987 = vcombine.low %v959, %v966
          %v989 = vunpack.c.l.s4 1983009808
          %v990 = vunpack.c.0.s8 %v989
          %v991 = vlaneseq
          %v992 = vshrl.u32 %v991, 7
          %v993 = vsub.s32 %v990, %v992
          %v994 = vrot.slane %v987, %v993
          %v995 = vcombine.low %v983, %v984
          %v997 = vunpack.c.l.s4 1983009808
          %v998 = vunpack.c.0.s8 %v997
          %v999 = vlaneseq
          %v1000 = vshrl.u32 %v999, 7
          %v1001 = vsub.s32 %v998, %v1000
          %v1002 = vrot.slane %v995, %v1001
          %v1003 = vcombine.low %v975, %v982
          %v1005 = vunpack.c.l.s4 1983009808
          %v1006 = vunpack.c.0.s8 %v1005
          %v1007 = vlaneseq
          %v1008 = vshrl.u32 %v1007, 7
          %v1009 = vsub.s32 %v1006, %v1008
          %v1010 = vrot.slane %v1003, %v1009
          %v1011 = vcombine.low %v985, %v986
          %v1013 = vunpack.c.l.s4 1983009808
          %v1014 = vunpack.c.0.s8 %v1013
          %v1015 = vlaneseq
          %v1016 = vshrl.u32 %v1015, 7
          %v1017 = vsub.s32 %v1014, %v1016
          %v1018 = vrot.slane %v1011, %v1017
          %v1019 = vcombine.low %v994, %v1002
          %v1020 = vcombine.high %v994, %v1002
          %v1022 = vunpack.c.l.s4 1934713408
          %v1023 = vunpack.c.0.s8 %v1022
          %v1024 = vlaneseq
          %v1025 = vshrl.u32 %v1024, 7
          %v1026 = vsub.s32 %v1023, %v1025
          %v1027 = vrot.slane %v1019, %v1026
          %v1029 = vunpack.c.l.s4 1934713408
          %v1030 = vunpack.c.0.s8 %v1029
          %v1031 = vlaneseq
          %v1032 = vshrl.u32 %v1031, 7
          %v1033 = vsub.s32 %v1030, %v1032
          %v1034 = vrot.slane %v1020, %v1033
          %v1035 = vcombine.low %v1010, %v1018
          %v1036 = vcombine.high %v1010, %v1018
          %v1038 = vunpack.c.l.s4 1934713408
          %v1039 = vunpack.c.0.s8 %v1038
          %v1040 = vlaneseq
          %v1041 = vshrl.u32 %v1040, 7
          %v1042 = vsub.s32 %v1039, %v1041
          %v1043 = vrot.slane %v1035, %v1042
          %v1045 = vunpack.c.l.s4 1934713408
          %v1046 = vunpack.c.0.s8 %v1045
          %v1047 = vlaneseq
          %v1048 = vshrl.u32 %v1047, 7
          %v1049 = vsub.s32 %v1046, %v1048
          %v1050 = vrot.slane %v1036, %v1049
          %v1051 = vcombine.low %v1027, %v1043
          %v1052 = vcombine.high %v1027, %v1043
          %v1053 = vcombine.low %v1034, %v1050
          %v1054 = vcombine.high %v1034, %v1050
          %1056 = vrot.lane.b32.xlu0 %v756, 112
          %v1057 = vpop.permute.xlu0 %1056
          %1059 = vrot.lane.b32.xlu0 %v756, 96
          %v1060 = vpop.permute.xlu0 %1059
          %1062 = vrot.lane.b32.xlu0 %v756, 80
          %v1063 = vpop.permute.xlu0 %1062
          %v1065 = vcombine.low %v756, %v1060
          %v1066 = vcombine.high %v756, %v1060
          %v1068 = vunpack.c.l.s4 1983009808
          %v1069 = vunpack.c.0.s8 %v1068
          %v1070 = vlaneseq
          %v1071 = vshrl.u32 %v1070, 7
          %v1072 = vsub.s32 %v1069, %v1071
          %v1073 = vrot.slane %v1065, %v1072
          %v1075 = vunpack.c.l.s4 1983009808
          %v1076 = vunpack.c.0.s8 %v1075
          %v1077 = vlaneseq
          %v1078 = vshrl.u32 %v1077, 7
          %v1079 = vsub.s32 %v1076, %v1078
          %v1080 = vrot.slane %v1066, %v1079
          %v1081 = vcombine.low %v1057, %v1063
          %v1082 = vcombine.high %v1057, %v1063
          %v1084 = vunpack.c.l.s4 1983009808
          %v1085 = vunpack.c.0.s8 %v1084
          %v1086 = vlaneseq
          %v1087 = vshrl.u32 %v1086, 7
          %v1088 = vsub.s32 %v1085, %v1087
          %v1089 = vrot.slane %v1081, %v1088
          %v1091 = vunpack.c.l.s4 1983009808
          %v1092 = vunpack.c.0.s8 %v1091
          %v1093 = vlaneseq
          %v1094 = vshrl.u32 %v1093, 7
          %v1095 = vsub.s32 %v1092, %v1094
          %v1096 = vrot.slane %v1082, %v1095
          %v1097 = vcombine.low %v1073, %v1089
          %v1098 = vcombine.high %v1073, %v1089
          %v1100 = vunpack.c.l.s4 1934713408
          %v1101 = vunpack.c.0.s8 %v1100
          %v1102 = vlaneseq
          %v1103 = vshrl.u32 %v1102, 7
          %v1104 = vsub.s32 %v1101, %v1103
          %v1105 = vrot.slane %v1097, %v1104
          %v1107 = vunpack.c.l.s4 1934713408
          %v1108 = vunpack.c.0.s8 %v1107
          %v1109 = vlaneseq
          %v1110 = vshrl.u32 %v1109, 7
          %v1111 = vsub.s32 %v1108, %v1110
          %v1112 = vrot.slane %v1098, %v1111
          %v1113 = vcombine.low %v1080, %v1096
          %v1114 = vcombine.high %v1080, %v1096
          %v1116 = vunpack.c.l.s4 1934713408
          %v1117 = vunpack.c.0.s8 %v1116
          %v1118 = vlaneseq
          %v1119 = vshrl.u32 %v1118, 7
          %v1120 = vsub.s32 %v1117, %v1119
          %v1121 = vrot.slane %v1113, %v1120
          %v1123 = vunpack.c.l.s4 1934713408
          %v1124 = vunpack.c.0.s8 %v1123
          %v1125 = vlaneseq
          %v1126 = vshrl.u32 %v1125, 7
          %v1127 = vsub.s32 %v1124, %v1126
          %v1128 = vrot.slane %v1114, %v1127
          %v1129 = vcombine.high %v1105, 0.0
          %v1130 = vcombine.high %v1112, 0.0
          %v1131 = vcombine.high %v1121, 0.0
          %v1132 = vcombine.high %v1128, 0.0
          %v1133 = vcombine.low %v1105, %v1112
          %v1135 = vunpack.c.l.s4 1983009808
          %v1136 = vunpack.c.0.s8 %v1135
          %v1137 = vlaneseq
          %v1138 = vshrl.u32 %v1137, 7
          %v1139 = vsub.s32 %v1136, %v1138
          %v1140 = vrot.slane %v1133, %v1139
          %v1141 = vcombine.low %v1129, %v1130
          %v1143 = vunpack.c.l.s4 1983009808
          %v1144 = vunpack.c.0.s8 %v1143
          %v1145 = vlaneseq
          %v1146 = vshrl.u32 %v1145, 7
          %v1147 = vsub.s32 %v1144, %v1146
          %v1148 = vrot.slane %v1141, %v1147
          %v1149 = vcombine.low %v1121, %v1128
          %v1151 = vunpack.c.l.s4 1983009808
          %v1152 = vunpack.c.0.s8 %v1151
          %v1153 = vlaneseq
          %v1154 = vshrl.u32 %v1153, 7
          %v1155 = vsub.s32 %v1152, %v1154
          %v1156 = vrot.slane %v1149, %v1155
          %v1157 = vcombine.low %v1131, %v1132
          %v1159 = vunpack.c.l.s4 1983009808
          %v1160 = vunpack.c.0.s8 %v1159
          %v1161 = vlaneseq
          %v1162 = vshrl.u32 %v1161, 7
          %v1163 = vsub.s32 %v1160, %v1162
          %v1164 = vrot.slane %v1157, %v1163
          %v1165 = vcombine.low %v1140, %v1148
          %v1166 = vcombine.high %v1140, %v1148
          %v1168 = vunpack.c.l.s4 1934713408
          %v1169 = vunpack.c.0.s8 %v1168
          %v1170 = vlaneseq
          %v1171 = vshrl.u32 %v1170, 7
          %v1172 = vsub.s32 %v1169, %v1171
          %v1173 = vrot.slane %v1165, %v1172
          %v1175 = vunpack.c.l.s4 1934713408
          %v1176 = vunpack.c.0.s8 %v1175
          %v1177 = vlaneseq
          %v1178 = vshrl.u32 %v1177, 7
          %v1179 = vsub.s32 %v1176, %v1178
          %v1180 = vrot.slane %v1166, %v1179
          %v1181 = vcombine.low %v1156, %v1164
          %v1182 = vcombine.high %v1156, %v1164
          %v1184 = vunpack.c.l.s4 1934713408
          %v1185 = vunpack.c.0.s8 %v1184
          %v1186 = vlaneseq
          %v1187 = vshrl.u32 %v1186, 7
          %v1188 = vsub.s32 %v1185, %v1187
          %v1189 = vrot.slane %v1181, %v1188
          %v1191 = vunpack.c.l.s4 1934713408
          %v1192 = vunpack.c.0.s8 %v1191
          %v1193 = vlaneseq
          %v1194 = vshrl.u32 %v1193, 7
          %v1195 = vsub.s32 %v1192, %v1194
          %v1196 = vrot.slane %v1182, %v1195
          %v1197 = vcombine.low %v1173, %v1189
          %v1198 = vcombine.high %v1173, %v1189
          %v1199 = vcombine.low %v1180, %v1196
          %v1200 = vcombine.high %v1180, %v1196
          %v1201 = vpack.c.bf16 %v903, %v903
          %v1202 = vpack.c.bf16 %v904, %v904
          %v1203 = vpack.c.bf16 %v905, %v905
          %v1204 = vpack.c.bf16 %v906, %v906
          %v1205 = vpack.c.bf16 %v1051, %v1051
          %v1206 = vpack.c.bf16 %v1052, %v1052
          %v1207 = vpack.c.bf16 %v1053, %v1053
          %v1208 = vpack.c.bf16 %v1054, %v1054
          %v1210 = vlaneseq
          %v1211 = vshrl.u32 %v1210, 7
          %v1212 = vsub.s32 0, %v1211
          %v1213 = vrot.slane %v760, %v1212
          %vm1215 = vcmask 130048
          %v1217 = vsel %vm1215, %v1201, 0
          %v1220 = vsel %vm1215, %v1205, 0
          %1222 = vmatprep.subr.bf16.mxu0 0
          %1223 = vmatpush1.bf16.xpose.msra.mxu0 %v1220
          %1224 = vmatprep.subr.bf16.mxu0 0
          %1225 = vmatpush1.bf16.xpose.msra.mxu0 0
          %1226 = vmatprep.subr.bf16.mxu0 0
          %1227 = vmatpush1.bf16.xpose.msra.mxu0 0
          %1228 = vmatprep.subr.bf16.mxu0 0
          %1229 = vmatpush1.bf16.xpose.msra.mxu0 0
          %1230 = vmatprep.subr.bf16.mxu0 0
          %1231 = vmatpush1.bf16.xpose.msra.mxu0 0
          %1232 = vmatprep.subr.bf16.mxu0 0
          %1233 = vmatpush1.bf16.xpose.msra.mxu0 0
          %1234 = vmatprep.subr.bf16.mxu0 0
          %1235 = vmatpush1.bf16.xpose.msra.mxu0 0
          %1236 = vmatprep.subr.bf16.mxu0 0
          %1237 = vmatpush1.bf16.xpose.msra.mxu0 0
          %1238 = vmatprep.subr.bf16.mxu0 0
          %1239 = vmatpush1.bf16.xpose.msra.mxu0 0
          %1240 = vmatprep.subr.bf16.mxu0 0
          %1241 = vmatpush1.bf16.xpose.msra.mxu0 0
          %1242 = vmatprep.subr.bf16.mxu0 0
          %1243 = vmatpush1.bf16.xpose.msra.mxu0 0
          %1244 = vmatprep.subr.bf16.mxu0 0
          %1245 = vmatpush1.bf16.xpose.msra.mxu0 0
          %1246 = vmatprep.subr.bf16.mxu0 0
          %1247 = vmatpush1.bf16.xpose.msra.mxu0 0
          %1248 = vmatprep.subr.bf16.mxu0 0
          %1249 = vmatpush1.bf16.xpose.msra.mxu0 0
          %1250 = vmatprep.subr.bf16.mxu0 0
          %1251 = vmatpush1.bf16.xpose.msra.mxu0 0
          %1252 = vmatprep.subr.bf16.mxu0 0
          %1253 = vmatpush1.bf16.xpose.msra.mxu0 0
          %1254 = vmatprep.mubr.bf16.mxu0 0
          %1255 = vmatmul.mubr.bf16.gmra.mrb[0].mxu0 %v1217
          %v1256 = vpop.f32.mrb[0].mxu0
          %v1257 = vadd.f32 %v1213, %v1256
          %v1258 = vpop.f32.mrb[0].mxu0
          %v1259 = vpop.f32.mrb[0].mxu0
          %v1260 = vpop.f32.mrb[0].mxu0
          %1261 = vdwg.mxu0
          %v1263 = vsel %vm1215, %v1202, 0
          %v1266 = vsel %vm1215, %v1206, 0
          %1268 = vmatprep.subr.bf16.mxu0 0
          %1269 = vmatpush1.bf16.xpose.msra.mxu0 %v1266
          %1270 = vmatprep.subr.bf16.mxu0 0
          %1271 = vmatpush1.bf16.xpose.msra.mxu0 0
          %1272 = vmatprep.subr.bf16.mxu0 0
          %1273 = vmatpush1.bf16.xpose.msra.mxu0 0
          %1274 = vmatprep.subr.bf16.mxu0 0
          %1275 = vmatpush1.bf16.xpose.msra.mxu0 0
          %1276 = vmatprep.subr.bf16.mxu0 0
          %1277 = vmatpush1.bf16.xpose.msra.mxu0 0
          %1278 = vmatprep.subr.bf16.mxu0 0
          %1279 = vmatpush1.bf16.xpose.msra.mxu0 0
          %1280 = vmatprep.subr.bf16.mxu0 0
          %1281 = vmatpush1.bf16.xpose.msra.mxu0 0
          %1282 = vmatprep.subr.bf16.mxu0 0
          %1283 = vmatpush1.bf16.xpose.msra.mxu0 0
          %1284 = vmatprep.subr.bf16.mxu0 0
          %1285 = vmatpush1.bf16.xpose.msra.mxu0 0
          %1286 = vmatprep.subr.bf16.mxu0 0
          %1287 = vmatpush1.bf16.xpose.msra.mxu0 0
          %1288 = vmatprep.subr.bf16.mxu0 0
          %1289 = vmatpush1.bf16.xpose.msra.mxu0 0
          %1290 = vmatprep.subr.bf16.mxu0 0
          %1291 = vmatpush1.bf16.xpose.msra.mxu0 0
          %1292 = vmatprep.subr.bf16.mxu0 0
          %1293 = vmatpush1.bf16.xpose.msra.mxu0 0
          %1294 = vmatprep.subr.bf16.mxu0 0
          %1295 = vmatpush1.bf16.xpose.msra.mxu0 0
          %1296 = vmatprep.subr.bf16.mxu0 0
          %1297 = vmatpush1.bf16.xpose.msra.mxu0 0
          %1298 = vmatprep.subr.bf16.mxu0 0
          %1299 = vmatpush1.bf16.xpose.msra.mxu0 0
          %1300 = vmatprep.mubr.bf16.mxu0 0
          %1301 = vmatmul.mubr.bf16.gmra.mrb[0].mxu0 %v1263
          %v1302 = vpop.f32.mrb[0].mxu0
          %v1303 = vadd.f32 %v1213, %v1302
          %v1304 = vpop.f32.mrb[0].mxu0
          %v1305 = vpop.f32.mrb[0].mxu0
          %v1306 = vpop.f32.mrb[0].mxu0
          %1307 = vdwg.mxu0
          %v1309 = vsel %vm1215, %v1203, 0
          %v1312 = vsel %vm1215, %v1207, 0
          %1314 = vmatprep.subr.bf16.mxu0 0
          %1315 = vmatpush1.bf16.xpose.msra.mxu0 %v1312
          %1316 = vmatprep.subr.bf16.mxu0 0
          %1317 = vmatpush1.bf16.xpose.msra.mxu0 0
          %1318 = vmatprep.subr.bf16.mxu0 0
          %1319 = vmatpush1.bf16.xpose.msra.mxu0 0
          %1320 = vmatprep.subr.bf16.mxu0 0
          %1321 = vmatpush1.bf16.xpose.msra.mxu0 0
          %1322 = vmatprep.subr.bf16.mxu0 0
          %1323 = vmatpush1.bf16.xpose.msra.mxu0 0
          %1324 = vmatprep.subr.bf16.mxu0 0
          %1325 = vmatpush1.bf16.xpose.msra.mxu0 0
          %1326 = vmatprep.subr.bf16.mxu0 0
          %1327 = vmatpush1.bf16.xpose.msra.mxu0 0
          %1328 = vmatprep.subr.bf16.mxu0 0
          %1329 = vmatpush1.bf16.xpose.msra.mxu0 0
          %1330 = vmatprep.subr.bf16.mxu0 0
          %1331 = vmatpush1.bf16.xpose.msra.mxu0 0
          %1332 = vmatprep.subr.bf16.mxu0 0
          %1333 = vmatpush1.bf16.xpose.msra.mxu0 0
          %1334 = vmatprep.subr.bf16.mxu0 0
          %1335 = vmatpush1.bf16.xpose.msra.mxu0 0
          %1336 = vmatprep.subr.bf16.mxu0 0
          %1337 = vmatpush1.bf16.xpose.msra.mxu0 0
          %1338 = vmatprep.subr.bf16.mxu0 0
          %1339 = vmatpush1.bf16.xpose.msra.mxu0 0
          %1340 = vmatprep.subr.bf16.mxu0 0
          %1341 = vmatpush1.bf16.xpose.msra.mxu0 0
          %1342 = vmatprep.subr.bf16.mxu0 0
          %1343 = vmatpush1.bf16.xpose.msra.mxu0 0
          %1344 = vmatprep.subr.bf16.mxu0 0
          %1345 = vmatpush1.bf16.xpose.msra.mxu0 0
          %1346 = vmatprep.mubr.bf16.mxu0 0
          %1347 = vmatmul.mubr.bf16.gmra.mrb[0].mxu0 %v1309
          %v1348 = vpop.f32.mrb[0].mxu0
          %v1349 = vadd.f32 %v1213, %v1348
          %v1350 = vpop.f32.mrb[0].mxu0
          %v1351 = vpop.f32.mrb[0].mxu0
          %v1352 = vpop.f32.mrb[0].mxu0
          %1353 = vdwg.mxu0
          %v1355 = vsel %vm1215, %v1204, 0
          %v1358 = vsel %vm1215, %v1208, 0
          %1360 = vmatprep.subr.bf16.mxu0 0
          %1361 = vmatpush1.bf16.xpose.msra.mxu0 %v1358
          %1362 = vmatprep.subr.bf16.mxu0 0
          %1363 = vmatpush1.bf16.xpose.msra.mxu0 0
          %1364 = vmatprep.subr.bf16.mxu0 0
          %1365 = vmatpush1.bf16.xpose.msra.mxu0 0
          %1366 = vmatprep.subr.bf16.mxu0 0
          %1367 = vmatpush1.bf16.xpose.msra.mxu0 0
          %1368 = vmatprep.subr.bf16.mxu0 0
          %1369 = vmatpush1.bf16.xpose.msra.mxu0 0
          %1370 = vmatprep.subr.bf16.mxu0 0
          %1371 = vmatpush1.bf16.xpose.msra.mxu0 0
          %1372 = vmatprep.subr.bf16.mxu0 0
          %1373 = vmatpush1.bf16.xpose.msra.mxu0 0
          %1374 = vmatprep.subr.bf16.mxu0 0
          %1375 = vmatpush1.bf16.xpose.msra.mxu0 0
          %1376 = vmatprep.subr.bf16.mxu0 0
          %1377 = vmatpush1.bf16.xpose.msra.mxu0 0
          %1378 = vmatprep.subr.bf16.mxu0 0
          %1379 = vmatpush1.bf16.xpose.msra.mxu0 0
          %1380 = vmatprep.subr.bf16.mxu0 0
          %1381 = vmatpush1.bf16.xpose.msra.mxu0 0
          %1382 = vmatprep.subr.bf16.mxu0 0
          %1383 = vmatpush1.bf16.xpose.msra.mxu0 0
          %1384 = vmatprep.subr.bf16.mxu0 0
          %1385 = vmatpush1.bf16.xpose.msra.mxu0 0
          %1386 = vmatprep.subr.bf16.mxu0 0
          %1387 = vmatpush1.bf16.xpose.msra.mxu0 0
          %1388 = vmatprep.subr.bf16.mxu0 0
          %1389 = vmatpush1.bf16.xpose.msra.mxu0 0
          %1390 = vmatprep.subr.bf16.mxu0 0
          %1391 = vmatpush1.bf16.xpose.msra.mxu0 0
          %1392 = vmatprep.mubr.bf16.mxu0 0
          %1393 = vmatmul.mubr.bf16.gmra.mrb[0].mxu0 %v1355
          %v1394 = vpop.f32.mrb[0].mxu0
          %v1395 = vadd.f32 %v1213, %v1394
          %v1396 = vpop.f32.mrb[0].mxu0
          %v1397 = vpop.f32.mrb[0].mxu0
          %v1398 = vpop.f32.mrb[0].mxu0
          %1399 = vdwg.mxu0
          %vm1400 = vcmask 64512
          %v1401 = vsel %vm1400, %v1257, -inf
          %1402 = vmax.xlane.f32.xlu0 %v1401
          %v1403 = vpop.xlane.xlu0 %1402
          %v1404 = vsel %vm1400, %v1303, -inf
          %1405 = vmax.xlane.f32.xlu0 %v1404
          %v1406 = vpop.xlane.xlu0 %1405
          %v1407 = vsel %vm1400, %v1349, -inf
          %1408 = vmax.xlane.f32.xlu0 %v1407
          %v1409 = vpop.xlane.xlu0 %1408
          %v1410 = vsel %vm1400, %v1395, -inf
          %1411 = vmax.xlane.f32.xlu0 %v1410
          %v1412 = vpop.xlane.xlu0 %1411
          %v1413 = vsub.f32 %v1257, %v1403
          %v1414 = vsub.f32 %v1303, %v1406
          %v1415 = vsub.f32 %v1349, %v1409
          %v1416 = vsub.f32 %v1395, %v1412
          %v1417 = vmul.f32 %v1413, 1.442695
          %v1418 = vpow.pop %v1417
          %v1419 = vmul.f32 %v1414, 1.442695
          %v1420 = vpow.pop %v1419
          %v1421 = vmul.f32 %v1415, 1.442695
          %v1422 = vpow.pop %v1421
          %v1423 = vmul.f32 %v1416, 1.442695
          %v1424 = vpow.pop %v1423
          %v1425 = vsel %vm1400, %v1418, 0.0
          %1426 = vadd.xlane.f32.xlu0 %v1425
          %v1427 = vpop.xlane.xlu0 %1426
          %v1428 = vsel %vm1400, %v1420, 0.0
          %1429 = vadd.xlane.f32.xlu0 %v1428
          %v1430 = vpop.xlane.xlu0 %1429
          %v1431 = vsel %vm1400, %v1422, 0.0
          %1432 = vadd.xlane.f32.xlu0 %v1431
          %v1433 = vpop.xlane.xlu0 %1432
          %v1434 = vsel %vm1400, %v1424, 0.0
          %1435 = vadd.xlane.f32.xlu0 %v1434
          %v1436 = vpop.xlane.xlu0 %1435
          %v1437 = vrcp.pop %v1427
          %v1438 = vrcp.pop %v1430
          %v1439 = vrcp.pop %v1433
          %v1440 = vrcp.pop %v1436
          %v1441 = vmul.f32 %v1418, %v1437
          %v1442 = vmul.f32 %v1420, %v1438
          %v1443 = vmul.f32 %v1422, %v1439
          %v1444 = vmul.f32 %v1424, %v1440
          %v1445 = vpack.c.bf16 %v1441, %v1441
          %v1446 = vpack.c.bf16 %v1442, %v1442
          %v1447 = vpack.c.bf16 %v1443, %v1443
          %v1448 = vpack.c.bf16 %v1444, %v1444
          %v1449 = vpack.c.bf16 %v1197, %v1197
          %v1450 = vpack.c.bf16 %v1198, %v1198
          %v1451 = vpack.c.bf16 %v1199, %v1199
          %v1452 = vpack.c.bf16 %v1200, %v1200
          %v1454 = vsel %vm1400, %v1445, 0
          %vm1456 = vcmask 1043456
          %v1458 = vsel %vm1456, %v1449, 0
          %1460 = vmatprep.subr.bf16.mxu0 0
          %1461 = vmatpush1.bf16.msra.mxu0 %v1458
          %1462 = vmatprep.subr.bf16.mxu0 0
          %1463 = vmatpush1.bf16.msra.mxu0 0
          %1464 = vmatprep.subr.bf16.mxu0 0
          %1465 = vmatpush1.bf16.msra.mxu0 0
          %1466 = vmatprep.subr.bf16.mxu0 0
          %1467 = vmatpush1.bf16.msra.mxu0 0
          %1468 = vmatprep.subr.bf16.mxu0 0
          %1469 = vmatpush1.bf16.msra.mxu0 0
          %1470 = vmatprep.subr.bf16.mxu0 0
          %1471 = vmatpush1.bf16.msra.mxu0 0
          %1472 = vmatprep.subr.bf16.mxu0 0
          %1473 = vmatpush1.bf16.msra.mxu0 0
          %1474 = vmatprep.subr.bf16.mxu0 0
          %1475 = vmatpush1.bf16.msra.mxu0 0
          %1476 = vmatprep.subr.bf16.mxu0 0
          %1477 = vmatpush1.bf16.msra.mxu0 0
          %1478 = vmatprep.subr.bf16.mxu0 0
          %1479 = vmatpush1.bf16.msra.mxu0 0
          %1480 = vmatprep.subr.bf16.mxu0 0
          %1481 = vmatpush1.bf16.msra.mxu0 0
          %1482 = vmatprep.subr.bf16.mxu0 0
          %1483 = vmatpush1.bf16.msra.mxu0 0
          %1484 = vmatprep.subr.bf16.mxu0 0
          %1485 = vmatpush1.bf16.msra.mxu0 0
          %1486 = vmatprep.subr.bf16.mxu0 0
          %1487 = vmatpush1.bf16.msra.mxu0 0
          %1488 = vmatprep.subr.bf16.mxu0 0
          %1489 = vmatpush1.bf16.msra.mxu0 0
          %1490 = vmatprep.subr.bf16.mxu0 0
          %1491 = vmatpush1.bf16.msra.mxu0 0
          %1492 = vmatprep.mubr.bf16.mxu0 0
          %1493 = vmatmul.mubr.bf16.gmra.mrb[0].mxu0 %v1454
          %v1494 = vpop.f32.mrb[0].mxu0
          %v1495 = vadd.f32 0.0, %v1494
          %v1496 = vpop.f32.mrb[0].mxu0
          %v1497 = vpop.f32.mrb[0].mxu0
          %v1498 = vpop.f32.mrb[0].mxu0
          %1499 = vdwg.mxu0
          %v1501 = vsel %vm1400, %v1446, 0
          %v1504 = vsel %vm1456, %v1450, 0
          %1506 = vmatprep.subr.bf16.mxu0 0
          %1507 = vmatpush1.bf16.msra.mxu0 %v1504
          %1508 = vmatprep.subr.bf16.mxu0 0
          %1509 = vmatpush1.bf16.msra.mxu0 0
          %1510 = vmatprep.subr.bf16.mxu0 0
          %1511 = vmatpush1.bf16.msra.mxu0 0
          %1512 = vmatprep.subr.bf16.mxu0 0
          %1513 = vmatpush1.bf16.msra.mxu0 0
          %1514 = vmatprep.subr.bf16.mxu0 0
          %1515 = vmatpush1.bf16.msra.mxu0 0
          %1516 = vmatprep.subr.bf16.mxu0 0
          %1517 = vmatpush1.bf16.msra.mxu0 0
          %1518 = vmatprep.subr.bf16.mxu0 0
          %1519 = vmatpush1.bf16.msra.mxu0 0
          %1520 = vmatprep.subr.bf16.mxu0 0
          %1521 = vmatpush1.bf16.msra.mxu0 0
          %1522 = vmatprep.subr.bf16.mxu0 0
          %1523 = vmatpush1.bf16.msra.mxu0 0
          %1524 = vmatprep.subr.bf16.mxu0 0
          %1525 = vmatpush1.bf16.msra.mxu0 0
          %1526 = vmatprep.subr.bf16.mxu0 0
          %1527 = vmatpush1.bf16.msra.mxu0 0
          %1528 = vmatprep.subr.bf16.mxu0 0
          %1529 = vmatpush1.bf16.msra.mxu0 0
          %1530 = vmatprep.subr.bf16.mxu0 0
          %1531 = vmatpush1.bf16.msra.mxu0 0
          %1532 = vmatprep.subr.bf16.mxu0 0
          %1533 = vmatpush1.bf16.msra.mxu0 0
          %1534 = vmatprep.subr.bf16.mxu0 0
          %1535 = vmatpush1.bf16.msra.mxu0 0
          %1536 = vmatprep.subr.bf16.mxu0 0
          %1537 = vmatpush1.bf16.msra.mxu0 0
          %1538 = vmatprep.mubr.bf16.mxu0 0
          %1539 = vmatmul.mubr.bf16.gmra.mrb[0].mxu0 %v1501
          %v1540 = vpop.f32.mrb[0].mxu0
          %v1541 = vadd.f32 0.0, %v1540
          %v1542 = vpop.f32.mrb[0].mxu0
          %v1543 = vpop.f32.mrb[0].mxu0
          %v1544 = vpop.f32.mrb[0].mxu0
          %1545 = vdwg.mxu0
          %v1547 = vsel %vm1400, %v1447, 0
          %v1550 = vsel %vm1456, %v1451, 0
          %1552 = vmatprep.subr.bf16.mxu0 0
          %1553 = vmatpush1.bf16.msra.mxu0 %v1550
          %1554 = vmatprep.subr.bf16.mxu0 0
          %1555 = vmatpush1.bf16.msra.mxu0 0
          %1556 = vmatprep.subr.bf16.mxu0 0
          %1557 = vmatpush1.bf16.msra.mxu0 0
          %1558 = vmatprep.subr.bf16.mxu0 0
          %1559 = vmatpush1.bf16.msra.mxu0 0
          %1560 = vmatprep.subr.bf16.mxu0 0
          %1561 = vmatpush1.bf16.msra.mxu0 0
          %1562 = vmatprep.subr.bf16.mxu0 0
          %1563 = vmatpush1.bf16.msra.mxu0 0
          %1564 = vmatprep.subr.bf16.mxu0 0
          %1565 = vmatpush1.bf16.msra.mxu0 0
          %1566 = vmatprep.subr.bf16.mxu0 0
          %1567 = vmatpush1.bf16.msra.mxu0 0
          %1568 = vmatprep.subr.bf16.mxu0 0
          %1569 = vmatpush1.bf16.msra.mxu0 0
          %1570 = vmatprep.subr.bf16.mxu0 0
          %1571 = vmatpush1.bf16.msra.mxu0 0
          %1572 = vmatprep.subr.bf16.mxu0 0
          %1573 = vmatpush1.bf16.msra.mxu0 0
          %1574 = vmatprep.subr.bf16.mxu0 0
          %1575 = vmatpush1.bf16.msra.mxu0 0
          %1576 = vmatprep.subr.bf16.mxu0 0
          %1577 = vmatpush1.bf16.msra.mxu0 0
          %1578 = vmatprep.subr.bf16.mxu0 0
          %1579 = vmatpush1.bf16.msra.mxu0 0
          %1580 = vmatprep.subr.bf16.mxu0 0
          %1581 = vmatpush1.bf16.msra.mxu0 0
          %1582 = vmatprep.subr.bf16.mxu0 0
          %1583 = vmatpush1.bf16.msra.mxu0 0
          %1584 = vmatprep.mubr.bf16.mxu0 0
          %1585 = vmatmul.mubr.bf16.gmra.mrb[0].mxu0 %v1547
          %v1586 = vpop.f32.mrb[0].mxu0
          %v1587 = vadd.f32 0.0, %v1586
          %v1588 = vpop.f32.mrb[0].mxu0
          %v1589 = vpop.f32.mrb[0].mxu0
          %v1590 = vpop.f32.mrb[0].mxu0
          %1591 = vdwg.mxu0
          %v1593 = vsel %vm1400, %v1448, 0
          %v1596 = vsel %vm1456, %v1452, 0
          %1598 = vmatprep.subr.bf16.mxu0 0
          %1599 = vmatpush1.bf16.msra.mxu0 %v1596
          %1600 = vmatprep.subr.bf16.mxu0 0
          %1601 = vmatpush1.bf16.msra.mxu0 0
          %1602 = vmatprep.subr.bf16.mxu0 0
          %1603 = vmatpush1.bf16.msra.mxu0 0
          %1604 = vmatprep.subr.bf16.mxu0 0
          %1605 = vmatpush1.bf16.msra.mxu0 0
          %1606 = vmatprep.subr.bf16.mxu0 0
          %1607 = vmatpush1.bf16.msra.mxu0 0
          %1608 = vmatprep.subr.bf16.mxu0 0
          %1609 = vmatpush1.bf16.msra.mxu0 0
          %1610 = vmatprep.subr.bf16.mxu0 0
          %1611 = vmatpush1.bf16.msra.mxu0 0
          %1612 = vmatprep.subr.bf16.mxu0 0
          %1613 = vmatpush1.bf16.msra.mxu0 0
          %1614 = vmatprep.subr.bf16.mxu0 0
          %1615 = vmatpush1.bf16.msra.mxu0 0
          %1616 = vmatprep.subr.bf16.mxu0 0
          %1617 = vmatpush1.bf16.msra.mxu0 0
          %1618 = vmatprep.subr.bf16.mxu0 0
          %1619 = vmatpush1.bf16.msra.mxu0 0
          %1620 = vmatprep.subr.bf16.mxu0 0
          %1621 = vmatpush1.bf16.msra.mxu0 0
          %1622 = vmatprep.subr.bf16.mxu0 0
          %1623 = vmatpush1.bf16.msra.mxu0 0
          %1624 = vmatprep.subr.bf16.mxu0 0
          %1625 = vmatpush1.bf16.msra.mxu0 0
          %1626 = vmatprep.subr.bf16.mxu0 0
          %1627 = vmatpush1.bf16.msra.mxu0 0
          %1628 = vmatprep.subr.bf16.mxu0 0
          %1629 = vmatpush1.bf16.msra.mxu0 0
          %1630 = vmatprep.mubr.bf16.mxu0 0
          %1631 = vmatmul.mubr.bf16.gmra.mrb[0].mxu0 %v1593
          %v1632 = vpop.f32.mrb[0].mxu0
          %v1633 = vadd.f32 0.0, %v1632
          %v1634 = vpop.f32.mrb[0].mxu0
          %v1635 = vpop.f32.mrb[0].mxu0
          %v1636 = vpop.f32.mrb[0].mxu0
          %1637 = vdwg.mxu0
          %v1638 = vcombine.low %v1495, %v1587
          %v1639 = vcombine.high %v1495, %v1587
          %v1641 = vunpack.c.l.s4 1983009808
          %v1642 = vunpack.c.0.s8 %v1641
          %v1643 = vlaneseq
          %v1644 = vshrl.u32 %v1643, 7
          %v1645 = vsub.s32 %v1642, %v1644
          %v1646 = vrot.slane %v1638, %v1645
          %v1648 = vunpack.c.l.s4 1983009808
          %v1649 = vunpack.c.0.s8 %v1648
          %v1650 = vlaneseq
          %v1651 = vshrl.u32 %v1650, 7
          %v1652 = vsub.s32 %v1649, %v1651
          %v1653 = vrot.slane %v1639, %v1652
          %v1654 = vcombine.low %v1541, %v1633
          %v1655 = vcombine.high %v1541, %v1633
          %v1657 = vunpack.c.l.s4 1983009808
          %v1658 = vunpack.c.0.s8 %v1657
          %v1659 = vlaneseq
          %v1660 = vshrl.u32 %v1659, 7
          %v1661 = vsub.s32 %v1658, %v1660
          %v1662 = vrot.slane %v1654, %v1661
          %v1664 = vunpack.c.l.s4 1983009808
          %v1665 = vunpack.c.0.s8 %v1664
          %v1666 = vlaneseq
          %v1667 = vshrl.u32 %v1666, 7
          %v1668 = vsub.s32 %v1665, %v1667
          %v1669 = vrot.slane %v1655, %v1668
          %v1670 = vcombine.low %v1646, %v1662
          %v1671 = vcombine.high %v1646, %v1662
          %v1673 = vunpack.c.l.s4 1934713408
          %v1674 = vunpack.c.0.s8 %v1673
          %v1675 = vlaneseq
          %v1676 = vshrl.u32 %v1675, 7
          %v1677 = vsub.s32 %v1674, %v1676
          %v1678 = vrot.slane %v1670, %v1677
          %v1680 = vunpack.c.l.s4 1934713408
          %v1681 = vunpack.c.0.s8 %v1680
          %v1682 = vlaneseq
          %v1683 = vshrl.u32 %v1682, 7
          %v1684 = vsub.s32 %v1681, %v1683
          %v1685 = vrot.slane %v1671, %v1684
          %v1686 = vcombine.low %v1653, %v1669
          %v1687 = vcombine.high %v1653, %v1669
          %v1689 = vunpack.c.l.s4 1934713408
          %v1690 = vunpack.c.0.s8 %v1689
          %v1691 = vlaneseq
          %v1692 = vshrl.u32 %v1691, 7
          %v1693 = vsub.s32 %v1690, %v1692
          %v1694 = vrot.slane %v1686, %v1693
          %v1696 = vunpack.c.l.s4 1934713408
          %v1697 = vunpack.c.0.s8 %v1696
          %v1698 = vlaneseq
          %v1699 = vshrl.u32 %v1698, 7
          %v1700 = vsub.s32 %v1697, %v1699
          %v1701 = vrot.slane %v1687, %v1700
          %v1702 = vcombine.high %v1678, 0.0
          %v1703 = vcombine.high %v1685, 0.0
          %v1704 = vcombine.high %v1694, 0.0
          %v1705 = vcombine.high %v1701, 0.0
          %v1706 = vcombine.low %v1678, %v1685
          %v1708 = vunpack.c.l.s4 1983009808
          %v1709 = vunpack.c.0.s8 %v1708
          %v1710 = vlaneseq
          %v1711 = vshrl.u32 %v1710, 7
          %v1712 = vsub.s32 %v1709, %v1711
          %v1713 = vrot.slane %v1706, %v1712
          %v1714 = vcombine.low %v1702, %v1703
          %v1716 = vunpack.c.l.s4 1983009808
          %v1717 = vunpack.c.0.s8 %v1716
          %v1718 = vlaneseq
          %v1719 = vshrl.u32 %v1718, 7
          %v1720 = vsub.s32 %v1717, %v1719
          %v1721 = vrot.slane %v1714, %v1720
          %v1722 = vcombine.low %v1694, %v1701
          %v1724 = vunpack.c.l.s4 1983009808
          %v1725 = vunpack.c.0.s8 %v1724
          %v1726 = vlaneseq
          %v1727 = vshrl.u32 %v1726, 7
          %v1728 = vsub.s32 %v1725, %v1727
          %v1729 = vrot.slane %v1722, %v1728
          %v1730 = vcombine.low %v1704, %v1705
          %v1732 = vunpack.c.l.s4 1983009808
          %v1733 = vunpack.c.0.s8 %v1732
          %v1734 = vlaneseq
          %v1735 = vshrl.u32 %v1734, 7
          %v1736 = vsub.s32 %v1733, %v1735
          %v1737 = vrot.slane %v1730, %v1736
          %v1738 = vcombine.low %v1713, %v1721
          %v1739 = vcombine.high %v1713, %v1721
          %v1741 = vunpack.c.l.s4 1934713408
          %v1742 = vunpack.c.0.s8 %v1741
          %v1743 = vlaneseq
          %v1744 = vshrl.u32 %v1743, 7
          %v1745 = vsub.s32 %v1742, %v1744
          %v1746 = vrot.slane %v1738, %v1745
          %v1748 = vunpack.c.l.s4 1934713408
          %v1749 = vunpack.c.0.s8 %v1748
          %v1750 = vlaneseq
          %v1751 = vshrl.u32 %v1750, 7
          %v1752 = vsub.s32 %v1749, %v1751
          %v1753 = vrot.slane %v1739, %v1752
          %v1754 = vcombine.low %v1729, %v1737
          %v1755 = vcombine.high %v1729, %v1737
          %v1757 = vunpack.c.l.s4 1934713408
          %v1758 = vunpack.c.0.s8 %v1757
          %v1759 = vlaneseq
          %v1760 = vshrl.u32 %v1759, 7
          %v1761 = vsub.s32 %v1758, %v1760
          %v1762 = vrot.slane %v1754, %v1761
          %v1764 = vunpack.c.l.s4 1934713408
          %v1765 = vunpack.c.0.s8 %v1764
          %v1766 = vlaneseq
          %v1767 = vshrl.u32 %v1766, 7
          %v1768 = vsub.s32 %v1765, %v1767
          %v1769 = vrot.slane %v1755, %v1768
          %v1770 = vcombine.low %v1746, %v1762
          %v1771 = vcombine.high %v1746, %v1762
          %v1772 = vcombine.low %v1753, %v1769
          %v1773 = vcombine.high %v1753, %v1769
          %1775 = vrot.lane.b32.xlu0 %v1771, 16
          %v1776 = vpop.permute.xlu0 %1775
          %1779 = vrot.lane.b32.xlu0 %v1772, 32
          %v1780 = vpop.permute.xlu0 %1779
          %1783 = vrot.lane.b32.xlu0 %v1773, 48
          %v1784 = vpop.permute.xlu0 %1783
          %v1786 = vsel %vm1215, %v1770, %v1776
          %vm1787 = vcmask 261120
          %v1788 = vsel %vm1787, %v1786, %v1780
          %vm1789 = vcmask 392192
          %v1790 = vsel %vm1789, %v1788, %v1784
          %v1791 = vpack.c.bf16 %v1790, %v1790
          %v1792 = vld [vmem:[%s6] sm:$0xf]
          %v1793 = vld [vmem:[%s6 + $0x4] sm:$0xf]
          %v1794 = vld [vmem:[%s6 + $0x8] sm:$0xf]
          %v1795 = vld [vmem:[%s6 + $0xc] sm:$0xf]
          %v1796 = vld [vmem:[%s6 + $0x10] sm:$0xf]
          %v1797 = vld [vmem:[%s6 + $0x14] sm:$0xf]
          %v1798 = vld [vmem:[%s6 + $0x18] sm:$0xf]
          %v1799 = vld [vmem:[%s6 + $0x1c] sm:$0xf]
          %v1800 = vld [vmem:[%s7] sm:$0x1]
          %v1802 = vlaneseq
          %v1803 = vshrl.u32 %v1802, 7
          %v1804 = vsub.s32 0, %v1803
          %v1805 = vrot.slane %v1800, %v1804
          %v1815 = vunpack.c.l.b16 %v1792
          %v1816 = vunpack.c.l.b16 %v1793
          %v1817 = vunpack.c.l.b16 %v1794
          %v1818 = vunpack.c.l.b16 %v1795
          %v1819 = vunpack.c.l.b16 %v1796
          %v1820 = vunpack.c.l.b16 %v1797
          %v1821 = vunpack.c.l.b16 %v1798
          %v1822 = vunpack.c.l.b16 %v1799
          %v1823 = vpack.c.b16 %v1816, %v1815
          %v1824 = vpack.c.b16 %v1818, %v1817
          %v1825 = vpack.c.b16 %v1820, %v1819
          %v1826 = vpack.c.b16 %v1822, %v1821
          %v1832 = vsel %vm626, %v1791, 0
          %1834 = vmatprep.subr.bf16.mxu0 0
          %1835 = vmatpush1.bf16.msra.mxu0 %v1823
          %1836 = vmatprep.subr.bf16.mxu0 0
          %1837 = vmatpush1.bf16.msra.mxu0 %v1824
          %1838 = vmatprep.subr.bf16.mxu0 0
          %1839 = vmatpush1.bf16.msra.mxu0 %v1825
          %1840 = vmatprep.subr.bf16.mxu0 0
          %1841 = vmatpush1.bf16.msra.mxu0 %v1826
          %1842 = vmatprep.subr.bf16.mxu0 0
          %1843 = vmatpush1.bf16.msra.mxu0 0
          %1844 = vmatprep.subr.bf16.mxu0 0
          %1845 = vmatpush1.bf16.msra.mxu0 0
          %1846 = vmatprep.subr.bf16.mxu0 0
          %1847 = vmatpush1.bf16.msra.mxu0 0
          %1848 = vmatprep.subr.bf16.mxu0 0
          %1849 = vmatpush1.bf16.msra.mxu0 0
          %1850 = vmatprep.subr.bf16.mxu0 0
          %1851 = vmatpush1.bf16.msra.mxu0 0
          %1852 = vmatprep.subr.bf16.mxu0 0
          %1853 = vmatpush1.bf16.msra.mxu0 0
          %1854 = vmatprep.subr.bf16.mxu0 0
          %1855 = vmatpush1.bf16.msra.mxu0 0
          %1856 = vmatprep.subr.bf16.mxu0 0
          %1857 = vmatpush1.bf16.msra.mxu0 0
          %1858 = vmatprep.subr.bf16.mxu0 0
          %1859 = vmatpush1.bf16.msra.mxu0 0
          %1860 = vmatprep.subr.bf16.mxu0 0
          %1861 = vmatpush1.bf16.msra.mxu0 0
          %1862 = vmatprep.subr.bf16.mxu0 0
          %1863 = vmatpush1.bf16.msra.mxu0 0
          %1864 = vmatprep.subr.bf16.mxu0 0
          %1865 = vmatpush1.bf16.msra.mxu0 0
          %1866 = vmatprep.mubr.bf16.mxu0 0
          %1867 = vmatmul.mubr.bf16.gmra.mrb[0].mxu0 %v1832
          %v1868 = vpop.f32.mrb[0].mxu0
          %v1869 = vadd.f32 %v1805, %v1868
          %v1870 = vpop.f32.mrb[0].mxu0
          %v1871 = vpop.f32.mrb[0].mxu0
          %v1872 = vpop.f32.mrb[0].mxu0
          %1873 = vdwg.mxu0
          %v1874 = vadd.f32 %v623, %v1869
          %1875 = vst.msk [vmem:[#allocation2] sm:$0xff] %vm626, %v1874
          %v1876 = vld [vmem:[%s8] sm:$0x1]
          %v1877 = vld [vmem:[%s9] sm:$0x1]
          %v1878 = vsel %vm626, %v1874, 0.0
          %1879 = vadd.xlane.f32.xlu0 %v1878
          %v1880 = vpop.xlane.xlu0 %1879
          %v1881 = vmul.f32 %v1880, %v630
          %v1882 = vsub.f32 %v1874, %v1881
          %v1883 = vmul.f32 %v1882, %v1882
          %v1884 = vsel %vm626, %v1883, 0.0
          %1885 = vadd.xlane.f32.xlu0 %v1884
          %v1886 = vpop.xlane.xlu0 %1885
          %v1887 = vmul.f32 %v1886, %v630
          %v1888 = vadd.f32 %v1887, 1e-05
          %v1889 = vrsqrt.pop %v1888
          %v1890 = vmul.f32 %v1882, %v1889
          %v1892 = vlaneseq
          %v1893 = vshrl.u32 %v1892, 7
          %v1894 = vsub.s32 0, %v1893
          %v1895 = vrot.slane %v1876, %v1894
          %v1897 = vmul.f32 %v1890, %v1895
          %v1899 = vlaneseq
          %v1900 = vshrl.u32 %v1899, 7
          %v1901 = vsub.s32 0, %v1900
          %v1902 = vrot.slane %v1877, %v1901
          %v1904 = vadd.f32 %v1897, %v1902
          %v1905 = vpack.c.bf16 %v1904, %v1904
          %vm1906 = vcmask 519168
          %1907 = vst.msk [vmem:[#allocation3] sm:$0xf] %vm1906, %v1905
          %1908 = vst.msk [vmem:[#allocation4] sm:$0xff] %vm626, 0.0
        $region121: #{transformer_forward.2} parent=112 // pred_fallthru
          _
        %v1909 = vld [vmem:[#allocation3] sm:$0xf]
        %v1910 = vld [vmem:[%s537] sm:$0xf]
        %v1911 = vld [vmem:[%s537 + $0x4] sm:$0xf]
        %v1912 = vld [vmem:[%s537 + $0x8] sm:$0xf]
        %v1913 = vld [vmem:[%s537 + $0xc] sm:$0xf]
        %v1914 = vld [vmem:[%s537 + $0x10] sm:$0xf]
        %v1915 = vld [vmem:[%s537 + $0x14] sm:$0xf]
        %v1916 = vld [vmem:[%s537 + $0x18] sm:$0xf]
        %v1917 = vld [vmem:[%s537 + $0x1c] sm:$0xf]
        %v1918 = vld [vmem:[%s603] sm:$0x1]
        %v1920 = vlaneseq
        %v1921 = vshrl.u32 %v1920, 7
        %v1922 = vsub.s32 0, %v1921
        %v1923 = vrot.slane %v1918, %v1922
        %v1933 = vunpack.c.l.b16 %v1910
        %v1934 = vunpack.c.l.b16 %v1911
        %v1935 = vunpack.c.l.b16 %v1912
        %v1936 = vunpack.c.l.b16 %v1913
        %v1937 = vunpack.c.l.b16 %v1914
        %v1938 = vunpack.c.l.b16 %v1915
        %v1939 = vunpack.c.l.b16 %v1916
        %v1940 = vunpack.c.l.b16 %v1917
        %v1941 = vpack.c.b16 %v1934, %v1933
        %v1942 = vpack.c.b16 %v1936, %v1935
        %v1943 = vpack.c.b16 %v1938, %v1937
        %v1944 = vpack.c.b16 %v1940, %v1939
        %vm1949 = vcmask 523264
        %v1951 = vsel %vm1949, %v1909, 0
        %1953 = vmatprep.subr.bf16.mxu0 0
        %1954 = vmatpush1.bf16.msra.mxu0 %v1941
        %1955 = vmatprep.subr.bf16.mxu0 0
        %1956 = vmatpush1.bf16.msra.mxu0 %v1942
        %1957 = vmatprep.subr.bf16.mxu0 0
        %1958 = vmatpush1.bf16.msra.mxu0 %v1943
        %1959 = vmatprep.subr.bf16.mxu0 0
        %1960 = vmatpush1.bf16.msra.mxu0 %v1944
        %1961 = vmatprep.subr.bf16.mxu0 0
        %1962 = vmatpush1.bf16.msra.mxu0 0
        %1963 = vmatprep.subr.bf16.mxu0 0
        %1964 = vmatpush1.bf16.msra.mxu0 0
        %1965 = vmatprep.subr.bf16.mxu0 0
        %1966 = vmatpush1.bf16.msra.mxu0 0
        %1967 = vmatprep.subr.bf16.mxu0 0
        %1968 = vmatpush1.bf16.msra.mxu0 0
        %1969 = vmatprep.subr.bf16.mxu0 0
        %1970 = vmatpush1.bf16.msra.mxu0 0
        %1971 = vmatprep.subr.bf16.mxu0 0
        %1972 = vmatpush1.bf16.msra.mxu0 0
        %1973 = vmatprep.subr.bf16.mxu0 0
        %1974 = vmatpush1.bf16.msra.mxu0 0
        %1975 = vmatprep.subr.bf16.mxu0 0
        %1976 = vmatpush1.bf16.msra.mxu0 0
        %1977 = vmatprep.subr.bf16.mxu0 0
        %1978 = vmatpush1.bf16.msra.mxu0 0
        %1979 = vmatprep.subr.bf16.mxu0 0
        %1980 = vmatpush1.bf16.msra.mxu0 0
        %1981 = vmatprep.subr.bf16.mxu0 0
        %1982 = vmatpush1.bf16.msra.mxu0 0
        %1983 = vmatprep.subr.bf16.mxu0 0
        %1984 = vmatpush1.bf16.msra.mxu0 0
        %1985 = vmatprep.mubr.bf16.mxu0 0
        %1986 = vmatmul.mubr.bf16.gmra.mrb[0].mxu0 %v1951
        %v1987 = vpop.f32.mrb[0].mxu0
        %v1988 = vadd.f32 %v1923, %v1987
        %v1989 = vpop.f32.mrb[0].mxu0
        %v1990 = vpop.f32.mrb[0].mxu0
        %v1991 = vpop.f32.mrb[0].mxu0
        %1992 = vdwg.mxu0
        %v1993 = vpack.c.bf16 %v1988, %v1988
        %v1994 = vmul.bf16 %v1993, 1056980736
        %v1995 = vmul.bf16 %v1993, 1027030327
        %v1996 = vmul.bf16 %v1995, %v1993
        %v1997 = vmul.bf16 %v1996, %v1993
        %v1998 = vadd.bf16 %v1993, %v1997
        %v1999 = vmul.bf16 %v1998, 1061961548
        %v2000 = vtanh.bf16.pop %v1999
        %v2001 = vadd.bf16 %v2000, 1065369472
        %v2002 = vmul.bf16 %v1994, %v2001
        %v2003 = vld [vmem:[#allocation4] sm:$0xff]
        %v2004 = vld [vmem:[%s608] sm:$0xf]
        %v2005 = vld [vmem:[%s608 + $0x4] sm:$0xf]
        %v2006 = vld [vmem:[%s608 + $0x8] sm:$0xf]
        %v2007 = vld [vmem:[%s608 + $0xc] sm:$0xf]
        %v2008 = vld [vmem:[%s608 + $0x10] sm:$0xf]
        %v2009 = vld [vmem:[%s608 + $0x14] sm:$0xf]
        %v2010 = vld [vmem:[%s608 + $0x18] sm:$0xf]
        %v2011 = vld [vmem:[%s608 + $0x1c] sm:$0xf]
        %v2012 = vld [vmem:[%s608 + $0x20] sm:$0xf]
        %v2013 = vld [vmem:[%s608 + $0x24] sm:$0xf]
        %v2014 = vld [vmem:[%s608 + $0x28] sm:$0xf]
        %v2015 = vld [vmem:[%s608 + $0x2c] sm:$0xf]
        %v2016 = vld [vmem:[%s608 + $0x30] sm:$0xf]
        %v2017 = vld [vmem:[%s608 + $0x34] sm:$0xf]
        %v2018 = vld [vmem:[%s608 + $0x38] sm:$0xf]
        %v2019 = vld [vmem:[%s608 + $0x3c] sm:$0xf]
        %v2036 = vunpack.c.l.b16 %v2004
        %v2037 = vunpack.c.l.b16 %v2005
        %v2038 = vunpack.c.l.b16 %v2006
        %v2039 = vunpack.c.l.b16 %v2007
        %v2040 = vunpack.c.l.b16 %v2008
        %v2041 = vunpack.c.l.b16 %v2009
        %v2042 = vunpack.c.l.b16 %v2010
        %v2043 = vunpack.c.l.b16 %v2011
        %v2044 = vunpack.c.l.b16 %v2012
        %v2045 = vunpack.c.l.b16 %v2013
        %v2046 = vunpack.c.l.b16 %v2014
        %v2047 = vunpack.c.l.b16 %v2015
        %v2048 = vunpack.c.l.b16 %v2016
        %v2049 = vunpack.c.l.b16 %v2017
        %v2050 = vunpack.c.l.b16 %v2018
        %v2051 = vunpack.c.l.b16 %v2019
        %v2052 = vpack.c.b16 %v2037, %v2036
        %v2053 = vpack.c.b16 %v2039, %v2038
        %v2054 = vpack.c.b16 %v2041, %v2040
        %v2055 = vpack.c.b16 %v2043, %v2042
        %v2056 = vpack.c.b16 %v2045, %v2044
        %v2057 = vpack.c.b16 %v2047, %v2046
        %v2058 = vpack.c.b16 %v2049, %v2048
        %v2059 = vpack.c.b16 %v2051, %v2050
        %2068 = vmatprep.subr.bf16.mxu0 0
        %2069 = vmatpush1.bf16.msra.mxu0 %v2052
        %2070 = vmatprep.subr.bf16.mxu0 0
        %2071 = vmatpush1.bf16.msra.mxu0 %v2053
        %2072 = vmatprep.subr.bf16.mxu0 0
        %2073 = vmatpush1.bf16.msra.mxu0 %v2054
        %2074 = vmatprep.subr.bf16.mxu0 0
        %2075 = vmatpush1.bf16.msra.mxu0 %v2055
        %2076 = vmatprep.subr.bf16.mxu0 0
        %2077 = vmatpush1.bf16.msra.mxu0 %v2056
        %2078 = vmatprep.subr.bf16.mxu0 0
        %2079 = vmatpush1.bf16.msra.mxu0 %v2057
        %2080 = vmatprep.subr.bf16.mxu0 0
        %2081 = vmatpush1.bf16.msra.mxu0 %v2058
        %2082 = vmatprep.subr.bf16.mxu0 0
        %2083 = vmatpush1.bf16.msra.mxu0 %v2059
        %2084 = vmatprep.subr.bf16.mxu0 0
        %2085 = vmatpush1.bf16.msra.mxu0 0
        %2086 = vmatprep.subr.bf16.mxu0 0
        %2087 = vmatpush1.bf16.msra.mxu0 0
        %2088 = vmatprep.subr.bf16.mxu0 0
        %2089 = vmatpush1.bf16.msra.mxu0 0
        %2090 = vmatprep.subr.bf16.mxu0 0
        %2091 = vmatpush1.bf16.msra.mxu0 0
        %2092 = vmatprep.subr.bf16.mxu0 0
        %2093 = vmatpush1.bf16.msra.mxu0 0
        %2094 = vmatprep.subr.bf16.mxu0 0
        %2095 = vmatpush1.bf16.msra.mxu0 0
        %2096 = vmatprep.subr.bf16.mxu0 0
        %2097 = vmatpush1.bf16.msra.mxu0 0
        %2098 = vmatprep.subr.bf16.mxu0 0
        %2099 = vmatpush1.bf16.msra.mxu0 0
        %2100 = vmatprep.mubr.bf16.mxu0 0
        %2101 = vmatmul.mubr.bf16.gmra.mrb[0].mxu0 %v2002
        %v2102 = vpop.f32.mrb[0].mxu0
        %v2103 = vadd.f32 0.0, %v2102
        %v2104 = vpop.f32.mrb[0].mxu0
        %v2105 = vpop.f32.mrb[0].mxu0
        %v2106 = vpop.f32.mrb[0].mxu0
        %2107 = vdwg.mxu0
        %v2108 = vadd.f32 %v2003, %v2103
        %2109 = vst.msk [vmem:[#allocation4] sm:$0xff] %vm1949, %v2108
        %p2110 = scmp.eq.s32.totalorder %s30, 1
        // Predicated region
        $region122: #{transformer_forward.2} parent=112 // pred_check
          %p2111 = pneg %p2110
        $region123: #{transformer_forward.2} parent=112 // pred_check_branch
          %2113 = sbr.rel (%p2111) target = $region125
        $region124: #{transformer_forward.2} parent=112 // pred_region
          %v2114 = vld [vmem:[#allocation2] sm:$0xff]
          %v2115 = vld [vmem:[#allocation4] sm:$0xff]
          %v2116 = vadd.f32 %v2114, %v2115
          %v2117 = vld [vmem:[%s13] sm:$0x1]
          %v2119 = vlaneseq
          %v2120 = vshrl.u32 %v2119, 7
          %v2121 = vsub.s32 0, %v2120
          %v2122 = vrot.slane %v2117, %v2121
          %v2124 = vadd.f32 %v2116, %v2122
          %2125 = vst.msk [vmem:[%s613] sm:$0xff] %vm1949, %v2124
        $region125: #{transformer_forward.2} parent=112 // pred_fallthru
          _
        %p2126 = scmp.lt.s32.totalorder %s29, 1
        %s2127 = scalar_select %p2126, %s29, 1
        %s2128 = smul.addr %s2127, 8
        %s2129 = scalar_lea.vmem %s14, %s2128
        // Predicated region
        $region126: #{transformer_forward.2} parent=112 // pred_check
          %p2130 = pneg %p374
        $region127: #{transformer_forward.2} parent=112 // pred_check_branch
          %2132 = sbr.rel (%p2130) target = $region129
        $region128: #{transformer_forward.2} parent=112 // pred_region
          _
        $region129: #{transformer_forward.2} parent=112 // pred_fallthru
          _
      $region113: #{transformer_forward.2} parent=5 // pred_fallthru
        _
      %p2133 = scmp.le.s32.totalorder 2, %s20
      // Predicated region
      $region130: #{transformer_forward.2} parent=5 // pred_check
        %p2134 = pneg %p2133
      $region131: #{transformer_forward.2} parent=5 // pred_check_branch
        %2136 = sbr.rel (%p2134) target = $region133
      $region132: #{transformer_forward.2} parent=5 // pred_region
        %s2137 = ssub.s32 %s20, 2
        // Predicated region
        $region134: #{transformer_forward.2} parent=132 // pred_check
          %p2138 = pneg %p380
        $region135: #{transformer_forward.2} parent=132 // pred_check_branch
          %2140 = sbr.rel (%p2138) target = $region137
        $region136: #{transformer_forward.2} parent=132 // pred_region
          %p2141 = scmp.lt.s32.totalorder %s31, 1
          %s2142 = scalar_select %p2141, %s31, 1
          %s2143 = smul.addr %s2142, 8
          %s2144 = scalar_lea.vmem %s14, %s2143
        $region137: #{transformer_forward.2} parent=132 // pred_fallthru
          _
      $region133: #{transformer_forward.2} parent=5 // pred_fallthru
        _
    $region6: #{transformer_forward.2} parent=1 // loop_footer
      %s24 = sadd.s32 1, %s20
    $region7: #{transformer_forward.2} parent=1 // loop_footer_branch
      %19 = sbr.rel target = $region3
    $region8: #{transformer_forward.2} parent=1 // loop_exit
      _

</llo_original>
